<compile_context>
chip_gen: v5e
topology: v5e:2x2
jax: 0.10.0
libtpu: 0.0.40
codegen_flags: <defaults>
</compile_context>

<pallas_src>
import functools

import jax
import jax.numpy as jnp
from jax.experimental import pallas as pl
from jax.experimental.pallas import tpu as pltpu


_VMEM_LIMIT = 48 * 1024 * 1024  # fits v7x (64 MiB physical) with headroom


def _round_up(x, m):
    return ((x + m - 1) // m) * m


# ----------------------------------------------------------------------------
# Pallas kernels
# ----------------------------------------------------------------------------
def _conv_mm_kernel(p_ref, w_ref, b_ref, o_ref, *, apply_lrelu, apply_sigmoid):
    """[LeakyReLU(0.2)] -> bf16 patches @ bf16 W (f32 acc) -> +bias -> [sigmoid]."""
    p = p_ref[...]                                   # (TM, K) bf16
    if apply_lrelu:
        # Exact: spatial-padding zeros map to zero either way.
        p = jnp.where(p >= 0, p, p * 0.2)
    acc = jnp.dot(p, w_ref[...], preferred_element_type=jnp.float32)  # MXU
    acc = acc + b_ref[...]                           # (1, Cpad) broadcast, f32
    if apply_sigmoid:
        # exp + approx reciprocal both live on the EUP slot; clip guards the
        # tiny approximation error so the output stays strictly in [0, 1].
        acc = pl.reciprocal(1.0 + jnp.exp(-acc), approx=True)
        acc = jnp.clip(acc, 0.0, 1.0)
    o_ref[...] = acc.astype(o_ref.dtype)


def _conv_mm_stats_kernel(p_ref, w_ref, b_ref, o_ref, st_ref, *,
                          apply_lrelu, tm, m_actual):
    """Conv matmul + fused per-channel sum / sum-of-squares (for BatchNorm)."""
    i = pl.program_id(0)
    p = p_ref[...]
    if apply_lrelu:
        p = jnp.where(p >= 0, p, p * 0.2)
    acc = jnp.dot(p, w_ref[...], preferred_element_type=jnp.float32)
    acc = acc + b_ref[...]
    o_ref[...] = acc.astype(o_ref.dtype)

    # Exclude padded tail rows (M padded up to a tile multiple) from the stats.
    row = i * tm + jax.lax.broadcasted_iota(jnp.int32, acc.shape, 0)
    accv = jnp.where(row < m_actual, acc, 0.0)
    part = jnp.concatenate(
        [jnp.sum(accv, axis=0, keepdims=True),
         jnp.sum(accv * accv, axis=0, keepdims=True)], axis=0)  # (2, Cpad)

    @pl.when(i == 0)
    def _():
        st_ref[...] = jnp.zeros_like(st_ref)

    st_ref[...] += part


def _bn_apply_kernel(x_ref, st_ref, g_ref, b_ref, o_ref, *, m_actual):
    """Training-mode BatchNorm2d normalization from precomputed sum / sumsq."""
    st = st_ref[...]                                 # (2, Cpad) f32
    inv_m = 1.0 / m_actual
    mean = st[0:1, :] * inv_m
    var = st[1:2, :] * inv_m - mean * mean           # biased variance (PyTorch)
    scale = jax.lax.rsqrt(var + 1e-5) * g_ref[...]
    x = x_ref[...].astype(jnp.float32)
    o_ref[...] = ((x - mean) * scale + b_ref[...]).astype(o_ref.dtype)


# ----------------------------------------------------------------------------
# Pallas call wrappers
# ----------------------------------------------------------------------------
def conv_matmul(patches, w_mat, b_mat, *, tm, lrelu, sigmoid, out_dtype,
                collect_stats=False, m_actual=None):
    mp, kdim = patches.shape
    cp = w_mat.shape[1]
    grid = (mp // tm,)
    in_specs = [
        pl.BlockSpec((tm, kdim), lambda i: (i, 0)),   # patch tile (pipelined)
        pl.BlockSpec((kdim, cp), lambda i: (0, 0)),   # weights resident
        pl.BlockSpec((1, cp), lambda i: (0, 0)),      # bias resident
    ]

    if collect_stats:
        kern = functools.partial(_conv_mm_stats_kernel, apply_lrelu=lrelu,
                                 tm=tm, m_actual=m_actual)
        return pl.pallas_call(
            kern,
            out_shape=(jax.ShapeDtypeStruct((mp, cp), out_dtype),
                       jax.ShapeDtypeStruct((2, cp), jnp.float32)),
            grid=grid,
            in_specs=in_specs,
            out_specs=(pl.BlockSpec((tm, cp), lambda i: (i, 0)),
                       pl.BlockSpec((2, cp), lambda i: (0, 0))),  # accumulator
            compiler_params=pltpu.CompilerParams(
                dimension_semantics=("arbitrary",),   # resident stats accumulator
                vmem_limit_bytes=_VMEM_LIMIT),
        )(patches, w_mat, b_mat)

    kern = functools.partial(_conv_mm_kernel, apply_lrelu=lrelu,
                             apply_sigmoid=sigmoid)
    return pl.pallas_call(
        kern,
        out_shape=jax.ShapeDtypeStruct((mp, cp), out_dtype),
        grid=grid,
        in_specs=in_specs,
        out_specs=pl.BlockSpec((tm, cp), lambda i: (i, 0)),
        compiler_params=pltpu.CompilerParams(
            dimension_semantics=("parallel",),        # megacore over M tiles
            vmem_limit_bytes=_VMEM_LIMIT),
    )(patches, w_mat, b_mat)


def batch_norm_apply(x_mc, stats, gamma, beta, *, tm, m_actual, out_dtype):
    mp, cp = x_mc.shape
    kern = functools.partial(_bn_apply_kernel, m_actual=m_actual)
    return pl.pallas_call(
        kern,
        out_shape=jax.ShapeDtypeStruct((mp, cp), out_dtype),
        grid=(mp // tm,),
        in_specs=[
            pl.BlockSpec((tm, cp), lambda i: (i, 0)),
            pl.BlockSpec((2, cp), lambda i: (0, 0)),
            pl.BlockSpec((1, cp), lambda i: (0, 0)),
            pl.BlockSpec((1, cp), lambda i: (0, 0)),
        ],
        out_specs=pl.BlockSpec((tm, cp), lambda i: (i, 0)),
        compiler_params=pltpu.CompilerParams(
            dimension_semantics=("parallel",),
            vmem_limit_bytes=_VMEM_LIMIT),
    )(x_mc, stats, gamma, beta)


# ----------------------------------------------------------------------------
# Glue: NHWC im2col and layer plumbing (plain JAX)
# ----------------------------------------------------------------------------
def im2col_nhwc(x_nhwc, kh, kw, stride, pad):
    """NHWC -> (N*OH*OW, KH*KW*Cin) patches, K ordered (KH, KW, Cin)."""
    n, h, w, c = x_nhwc.shape
    xp = jnp.pad(x_nhwc, ((0, 0), (pad, pad), (pad, pad), (0, 0)))
    oh = (h + 2 * pad - kh) // stride + 1
    ow = (w + 2 * pad - kw) // stride + 1
    cols = []
    for i in range(kh):
        for j in range(kw):
            cols.append(xp[:, i:i + stride * oh:stride,
                           j:j + stride * ow:stride, :])      # (N, OH, OW, C)
    patches = jnp.stack(cols, axis=3)                          # N,OH,OW,KHKW,C
    return patches.reshape(n * oh * ow, kh * kw * c), oh, ow


def conv_block(x_nhwc, params, *, stride, lrelu, bn, sigmoid=False,
               kernel_size=4, padding=1):
    """One ConvBlock: [lrelu] -> conv(k,s,p) -> [batchnorm] -> [sigmoid]."""
    w, b = params["w"], params["b"]                  # w: (Cout, Cin, KH, KW)
    cout = w.shape[0]
    n = x_nhwc.shape[0]

    patches, oh, ow = im2col_nhwc(x_nhwc.astype(jnp.bfloat16),
                                  kernel_size, kernel_size, stride, padding)
    m, kdim = patches.shape
    tm = min(256, _round_up(m, 16))                  # bf16 sublane multiple
    mp = _round_up(m, tm)
    if mp != m:
        patches = jnp.pad(patches, ((0, mp - m), (0, 0)))

    cp = _round_up(cout, 128)                        # lane-dense output
    w_mat = w.transpose(2, 3, 1, 0).reshape(kdim, cout).astype(jnp.bfloat16)
    w_mat = jnp.pad(w_mat, ((0, 0), (0, cp - cout)))
    b_mat = jnp.pad(b.reshape(1, cout).astype(jnp.float32),
                    ((0, 0), (0, cp - cout)))

    if bn:
        conv_out, stats = conv_matmul(
            patches, w_mat, b_mat, tm=tm, lrelu=lrelu, sigmoid=False,
            out_dtype=jnp.bfloat16, collect_stats=True, m_actual=m)
        gamma = jnp.pad(params["gamma"].reshape(1, cout),
                        ((0, 0), (0, cp - cout)))
        beta = jnp.pad(params["beta"].reshape(1, cout),
                       ((0, 0), (0, cp - cout)))
        out_mc = batch_norm_apply(conv_out, stats, gamma, beta,
                                  tm=tm, m_actual=m, out_dtype=jnp.bfloat16)
    else:
        out_dtype = jnp.float32 if sigmoid else jnp.bfloat16
        out_mc = conv_matmul(patches, w_mat, b_mat, tm=tm, lrelu=lrelu,
                             sigmoid=sigmoid, out_dtype=out_dtype)

    # Drop padded rows / channels; stay in NHWC.
    return out_mc[:m, :cout].reshape(n, oh, ow, cout)


def init_params(key, input_dim, num_filter, output_dim):
    """conv weights ~ N(0, 0.02) (normal_weight_init), bias=0, BN gamma=1/beta=0."""
    def conv_p(k, cin, cout, bn):
        p = {
            "w": 0.02 * jax.random.normal(k, (cout, cin, 4, 4), jnp.float32),
            "b": jnp.zeros((cout,), jnp.float32),
        }
        if bn:
            p["gamma"] = jnp.ones((cout,), jnp.float32)
            p["beta"] = jnp.zeros((cout,), jnp.float32)
        return p

    k1, k2, k3, k4 = jax.random.split(key, 4)
    return {
        "conv1": conv_p(k1, input_dim, num_filter, bn=False),
        "conv2": conv_p(k2, num_filter, num_filter * 2, bn=True),
        "conv3": conv_p(k3, num_filter * 2, num_filter * 4, bn=True),
        "conv4": conv_p(k4, num_filter * 4, output_dim, bn=False),
    }


def discriminator128_forward(params, x, label):
    # torch.cat([x, label], dim=1); convert NCHW -> NHWC once at the interface.
    h = jnp.concatenate([x, label], axis=1)
    h = jnp.transpose(h, (0, 2, 3, 1))
    # conv1: no activation, no BN, stride 2
    h = conv_block(h, params["conv1"], stride=2, lrelu=False, bn=False)
    # conv2: lrelu -> conv(stride 2) -> BN
    h = conv_block(h, params["conv2"], stride=2, lrelu=True, bn=True)
    # conv3: lrelu -> conv(stride 1) -> BN
    h = conv_block(h, params["conv3"], stride=1, lrelu=True, bn=True)
    # conv4: lrelu -> conv(stride 1), no BN, sigmoid fused in kernel
    h = conv_block(h, params["conv4"], stride=1, lrelu=True, bn=False,
                   sigmoid=True)
    return jnp.transpose(h, (0, 3, 1, 2))            # back to NCHW


if __name__ == "__main__":
    # Small shapes: x (2,3,32,32) + label (2,1,32,32) -> input_dim = 4.
    # 32x32 input exercises the multi-tile M grid on conv1 and the masked
    # tail-tile BN statistics on conv3.
    N, CX, CL, H, W = 2, 3, 1, 32, 32
    input_dim, num_filter, output_dim = CX + CL, 8, 1

    key = jax.random.PRNGKey(0)
    kp, kx, kl = jax.random.split(key, 3)

    params = init_params(kp, input_dim, num_filter, output_dim)
    x = jax.random.normal(kx, (N, CX, H, W), jnp.float32)
    label = jax.random.normal(kl, (N, CL, H, W), jnp.float32)

    fwd = jax.jit(discriminator128_forward)
    out = fwd(params, x, label)
    jax.block_until_ready(out)

    # Shape check: 32 -s2-> 16 -s2-> 8 -s1(k4,p1)-> 7 -s1-> 6
    assert out.shape == (N, output_dim, 6, 6), out.shape
    assert bool(jnp.all((out >= 0.0) & (out <= 1.0)))
    print("KERNEL_OK")
</pallas_src>

<mosaic_0001>
module attributes {stable_mosaic.version = 11 : i64} {
  func.func @_conv_mm_kernel(%arg0: i32, %arg1: memref<256x64xbf16, #tpu.memory_space<vmem>>, %arg2: memref<64x128xbf16, #tpu.memory_space<vmem>>, %arg3: memref<1x128xf32, #tpu.memory_space<vmem>>, %arg4: memref<256x128xbf16, #tpu.memory_space<vmem>>) attributes {dimension_semantics = [#tpu.dimension_semantics<parallel>], iteration_bounds = array<i64: 2>, scalar_prefetch = 0 : i64, scratch_operands = 0 : i64, tpu.core_type = #tpu.core_type<tc>, window_params = [{transform_indices = @transform_0, window_bounds = array<i64: 256, 64>}, {pipeline_mode = #tpu.pipeline_mode<synchronous>, transform_indices = @transform_1, window_bounds = array<i64: 64, 128>}, {pipeline_mode = #tpu.pipeline_mode<synchronous>, transform_indices = @transform_2, window_bounds = array<i64: 1, 128>}, {transform_indices = @transform_3, window_bounds = array<i64: 256, 128>}]} {
    %c0 = arith.constant 0 : index
    %c0_0 = arith.constant 0 : index
    %0 = vector.load %arg1[%c0, %c0_0] : memref<256x64xbf16, #tpu.memory_space<vmem>>, vector<256x64xbf16>
    %c0_1 = arith.constant 0 : index
    %c0_2 = arith.constant 0 : index
    %1 = vector.load %arg2[%c0_1, %c0_2] : memref<64x128xbf16, #tpu.memory_space<vmem>>, vector<64x128xbf16>
    %cst = arith.constant dense<0.000000e+00> : vector<256x128xf32>
    %2 = tpu.matmul %0, %1, %cst {dimension_numbers = #tpu.dot_dimension_numbers<[1], [0], [0], [1], [0, 0, 1, 1], [], []>} : vector<256x64xbf16>, vector<64x128xbf16>, vector<256x128xf32> -> vector<256x128xf32>
    %c0_3 = arith.constant 0 : index
    %c0_4 = arith.constant 0 : index
    %3 = vector.load %arg3[%c0_3, %c0_4] : memref<1x128xf32, #tpu.memory_space<vmem>>, vector<1x128xf32>
    %4 = vector.broadcast %3 : vector<1x128xf32> to vector<256x128xf32>
    %5 = arith.addf %2, %4 : vector<256x128xf32>
    %6 = arith.truncf %5 : vector<256x128xf32> to vector<256x128xbf16>
    %c0_5 = arith.constant 0 : index
    %c0_6 = arith.constant 0 : index
    %7 = vector.load %arg4[%c0_5, %c0_6] : memref<256x128xbf16, #tpu.memory_space<vmem>>, vector<256x128xbf16>
    tpu.vector_store %arg4[%c0_5, %c0_6], %6 {strides = array<i32>} : memref<256x128xbf16, #tpu.memory_space<vmem>>, vector<256x128xbf16>,
    return
  }
  func.func @transform_0(%arg0: i32) -> (i32, i32) {
    %c0_i32 = arith.constant 0 : i32
    %c0_i32_0 = arith.constant 0 : i32
    return %arg0, %c0_i32 : i32, i32
  }
  func.func @transform_1(%arg0: i32) -> (i32, i32) {
    %c0_i32 = arith.constant 0 : i32
    %c0_i32_0 = arith.constant 0 : i32
    %c0_i32_1 = arith.constant 0 : i32
    return %c0_i32, %c0_i32_0 : i32, i32
  }
  func.func @transform_2(%arg0: i32) -> (i32, i32) {
    %c0_i32 = arith.constant 0 : i32
    %c0_i32_0 = arith.constant 0 : i32
    %c0_i32_1 = arith.constant 0 : i32
    return %c0_i32, %c0_i32_0 : i32, i32
  }
  func.func @transform_3(%arg0: i32) -> (i32, i32) {
    %c0_i32 = arith.constant 0 : i32
    %c0_i32_0 = arith.constant 0 : i32
    return %arg0, %c0_i32 : i32, i32
  }
}

module attributes {stable_mosaic.version = 11 : i64} {
  func.func @_conv_mm_stats_kernel(%arg0: i32, %arg1: memref<128x128xbf16, #tpu.memory_space<vmem>>, %arg2: memref<128x128xbf16, #tpu.memory_space<vmem>>, %arg3: memref<1x128xf32, #tpu.memory_space<vmem>>, %arg4: memref<128x128xbf16, #tpu.memory_space<vmem>>, %arg5: memref<2x128xf32, #tpu.memory_space<vmem>>) attributes {dimension_semantics = [#tpu.dimension_semantics<arbitrary>], iteration_bounds = array<i64: 1>, scalar_prefetch = 0 : i64, scratch_operands = 0 : i64, tpu.core_type = #tpu.core_type<tc>, window_params = [{transform_indices = @transform_0, window_bounds = array<i64: 128, 128>}, {pipeline_mode = #tpu.pipeline_mode<synchronous>, transform_indices = @transform_1, window_bounds = array<i64: 128, 128>}, {pipeline_mode = #tpu.pipeline_mode<synchronous>, transform_indices = @transform_2, window_bounds = array<i64: 1, 128>}, {transform_indices = @transform_3, window_bounds = array<i64: 128, 128>}, {pipeline_mode = #tpu.pipeline_mode<synchronous>, transform_indices = @transform_4, window_bounds = array<i64: 2, 128>}]} {
    %c0 = arith.constant 0 : index
    %c0_0 = arith.constant 0 : index
    %0 = vector.load %arg1[%c0, %c0_0] : memref<128x128xbf16, #tpu.memory_space<vmem>>, vector<128x128xbf16>
    %cst = arith.constant 0.000000e+00 : bf16
    %1 = vector.broadcast %cst : bf16 to vector<128x128xbf16>
    %2 = arith.cmpf oge, %0, %1 : vector<128x128xbf16>
    %cst_1 = arith.constant 2.001950e-01 : bf16
    %3 = vector.broadcast %cst_1 : bf16 to vector<128x128xbf16>
    %4 = arith.mulf %0, %3 : vector<128x128xbf16>
    %5 = arith.select %2, %0, %4 : vector<128x128xi1>, vector<128x128xbf16>
    %c0_2 = arith.constant 0 : index
    %c0_3 = arith.constant 0 : index
    %6 = vector.load %arg2[%c0_2, %c0_3] : memref<128x128xbf16, #tpu.memory_space<vmem>>, vector<128x128xbf16>
    %cst_4 = arith.constant dense<0.000000e+00> : vector<128x128xf32>
    %7 = tpu.matmul %5, %6, %cst_4 {dimension_numbers = #tpu.dot_dimension_numbers<[1], [0], [0], [1], [0, 0, 1, 1], [], []>} : vector<128x128xbf16>, vector<128x128xbf16>, vector<128x128xf32> -> vector<128x128xf32>
    %c0_5 = arith.constant 0 : index
    %c0_6 = arith.constant 0 : index
    %8 = vector.load %arg3[%c0_5, %c0_6] : memref<1x128xf32, #tpu.memory_space<vmem>>, vector<1x128xf32>
    %9 = vector.broadcast %8 : vector<1x128xf32> to vector<128x128xf32>
    %10 = arith.addf %7, %9 : vector<128x128xf32>
    %11 = arith.truncf %10 : vector<128x128xf32> to vector<128x128xbf16>
    %c0_7 = arith.constant 0 : index
    %c0_8 = arith.constant 0 : index
    %12 = vector.load %arg4[%c0_7, %c0_8] : memref<128x128xbf16, #tpu.memory_space<vmem>>, vector<128x128xbf16>
    tpu.vector_store %arg4[%c0_7, %c0_8], %11 {strides = array<i32>} : memref<128x128xbf16, #tpu.memory_space<vmem>>, vector<128x128xbf16>,
    %c128_i32 = arith.constant 128 : i32
    %13 = arith.muli %arg0, %c128_i32 : i32
    %14 = tpu.iota {dimensions = array<i32: 0>} : vector<128x128xi32>
    %15 = vector.broadcast %13 : i32 to vector<128x128xi32>
    %16 = arith.addi %15, %14 : vector<128x128xi32>
    %c128_i32_9 = arith.constant 128 : i32
    %17 = vector.broadcast %c128_i32_9 : i32 to vector<128x128xi32>
    %18 = arith.cmpi slt, %16, %17 : vector<128x128xi32>
    %cst_10 = arith.constant 0.000000e+00 : f32
    %19 = vector.broadcast %cst_10 : f32 to vector<128x128xf32>
    %20 = arith.select %18, %10, %19 : vector<128x128xi1>, vector<128x128xf32>
    %cst_11 = arith.constant dense<0.000000e+00> : vector<128xf32>
    %21 = vector.multi_reduction <add>, %20, %cst_11 [0] : vector<128x128xf32> to vector<128xf32>
    %22 = vector.shape_cast %21 : vector<128xf32> to vector<1x128xf32>
    %23 = arith.mulf %20, %20 : vector<128x128xf32>
    %cst_12 = arith.constant dense<0.000000e+00> : vector<128xf32>
    %24 = vector.multi_reduction <add>, %23, %cst_12 [0] : vector<128x128xf32> to vector<128xf32>
    %25 = vector.shape_cast %24 : vector<128xf32> to vector<1x128xf32>
    %26 = tpu.concatenate %22, %25 in 0 : vector<1x128xf32>, vector<1x128xf32> -> vector<2x128xf32>
    %c0_i32 = arith.constant 0 : i32
    %27 = arith.cmpi eq, %arg0, %c0_i32 : i32
    %28 = arith.extui %27 : i1 to i32
    %c0_i32_13 = arith.constant 0 : i32
    %29 = arith.cmpi ne, %28, %c0_i32_13 : i32
    scf.if %29 {
      %cst_18 = arith.constant 0.000000e+00 : f32
      %33 = vector.broadcast %cst_18 : f32 to vector<2x128xf32>
      %c0_19 = arith.constant 0 : index
      %c0_20 = arith.constant 0 : index
      %34 = vector.load %arg5[%c0_19, %c0_20] : memref<2x128xf32, #tpu.memory_space<vmem>>, vector<2x128xf32>
      tpu.vector_store %arg5[%c0_19, %c0_20], %33 {strides = array<i32>} : memref<2x128xf32, #tpu.memory_space<vmem>>, vector<2x128xf32>,
    } else {
    }
    %c0_14 = arith.constant 0 : index
    %c0_15 = arith.constant 0 : index
    %30 = vector.load %arg5[%c0_14, %c0_15] : memref<2x128xf32, #tpu.memory_space<vmem>>, vector<2x128xf32>
    %31 = arith.addf %30, %26 : vector<2x128xf32>
    %c0_16 = arith.constant 0 : index
    %c0_17 = arith.constant 0 : index
    %32 = vector.load %arg5[%c0_16, %c0_17] : memref<2x128xf32, #tpu.memory_space<vmem>>, vector<2x128xf32>
    tpu.vector_store %arg5[%c0_16, %c0_17], %31 {strides = array<i32>} : memref<2x128xf32, #tpu.memory_space<vmem>>, vector<2x128xf32>,
    return
  }
  func.func @transform_0(%arg0: i32) -> (i32, i32) {
    %c0_i32 = arith.constant 0 : i32
    %c0_i32_0 = arith.constant 0 : i32
    return %arg0, %c0_i32 : i32, i32
  }
  func.func @transform_1(%arg0: i32) -> (i32, i32) {
    %c0_i32 = arith.constant 0 : i32
    %c0_i32_0 = arith.constant 0 : i32
    %c0_i32_1 = arith.constant 0 : i32
    return %c0_i32, %c0_i32_0 : i32, i32
  }
  func.func @transform_2(%arg0: i32) -> (i32, i32) {
    %c0_i32 = arith.constant 0 : i32
    %c0_i32_0 = arith.constant 0 : i32
    %c0_i32_1 = arith.constant 0 : i32
    return %c0_i32, %c0_i32_0 : i32, i32
  }
  func.func @transform_3(%arg0: i32) -> (i32, i32) {
    %c0_i32 = arith.constant 0 : i32
    %c0_i32_0 = arith.constant 0 : i32
    return %arg0, %c0_i32 : i32, i32
  }
  func.func @transform_4(%arg0: i32) -> (i32, i32) {
    %c0_i32 = arith.constant 0 : i32
    %c0_i32_0 = arith.constant 0 : i32
    %c0_i32_1 = arith.constant 0 : i32
    return %c0_i32, %c0_i32_0 : i32, i32
  }
}

module attributes {stable_mosaic.version = 11 : i64} {
  func.func @_bn_apply_kernel(%arg0: i32, %arg1: memref<128x128xbf16, #tpu.memory_space<vmem>>, %arg2: memref<2x128xf32, #tpu.memory_space<vmem>>, %arg3: memref<1x128xf32, #tpu.memory_space<vmem>>, %arg4: memref<1x128xf32, #tpu.memory_space<vmem>>, %arg5: memref<128x128xbf16, #tpu.memory_space<vmem>>) attributes {dimension_semantics = [#tpu.dimension_semantics<parallel>], iteration_bounds = array<i64: 1>, scalar_prefetch = 0 : i64, scratch_operands = 0 : i64, tpu.core_type = #tpu.core_type<tc>, window_params = [{transform_indices = @transform_0, window_bounds = array<i64: 128, 128>}, {pipeline_mode = #tpu.pipeline_mode<synchronous>, transform_indices = @transform_1, window_bounds = array<i64: 2, 128>}, {pipeline_mode = #tpu.pipeline_mode<synchronous>, transform_indices = @transform_2, window_bounds = array<i64: 1, 128>}, {pipeline_mode = #tpu.pipeline_mode<synchronous>, transform_indices = @transform_3, window_bounds = array<i64: 1, 128>}, {transform_indices = @transform_4, window_bounds = array<i64: 128, 128>}]} {
    %c0 = arith.constant 0 : index
    %c0_0 = arith.constant 0 : index
    %0 = vector.load %arg2[%c0, %c0_0] : memref<2x128xf32, #tpu.memory_space<vmem>>, vector<2x128xf32>
    %1 = vector.extract_strided_slice %0 {offsets = [0, 0], sizes = [1, 128], strides = [1, 1]} : vector<2x128xf32> to vector<1x128xf32>
    %cst = arith.constant 7.812500e-03 : f32
    %2 = vector.broadcast %cst : f32 to vector<1x128xf32>
    %3 = arith.mulf %1, %2 : vector<1x128xf32>
    %4 = vector.extract_strided_slice %0 {offsets = [1, 0], sizes = [1, 128], strides = [1, 1]} : vector<2x128xf32> to vector<1x128xf32>
    %cst_1 = arith.constant 7.812500e-03 : f32
    %5 = vector.broadcast %cst_1 : f32 to vector<1x128xf32>
    %6 = arith.mulf %4, %5 : vector<1x128xf32>
    %7 = arith.mulf %3, %3 : vector<1x128xf32>
    %8 = arith.subf %6, %7 : vector<1x128xf32>
    %cst_2 = arith.constant 9.99999974E-6 : f32
    %9 = vector.broadcast %cst_2 : f32 to vector<1x128xf32>
    %10 = arith.addf %8, %9 : vector<1x128xf32>
    %11 = math.rsqrt %10 : vector<1x128xf32>
    %c0_3 = arith.constant 0 : index
    %c0_4 = arith.constant 0 : index
    %12 = vector.load %arg3[%c0_3, %c0_4] : memref<1x128xf32, #tpu.memory_space<vmem>>, vector<1x128xf32>
    %13 = arith.mulf %11, %12 : vector<1x128xf32>
    %c0_5 = arith.constant 0 : index
    %c0_6 = arith.constant 0 : index
    %14 = vector.load %arg1[%c0_5, %c0_6] : memref<128x128xbf16, #tpu.memory_space<vmem>>, vector<128x128xbf16>
    %15 = arith.extf %14 : vector<128x128xbf16> to vector<128x128xf32>
    %16 = vector.broadcast %3 : vector<1x128xf32> to vector<128x128xf32>
    %17 = arith.subf %15, %16 : vector<128x128xf32>
    %18 = vector.broadcast %13 : vector<1x128xf32> to vector<128x128xf32>
    %19 = arith.mulf %17, %18 : vector<128x128xf32>
    %c0_7 = arith.constant 0 : index
    %c0_8 = arith.constant 0 : index
    %20 = vector.load %arg4[%c0_7, %c0_8] : memref<1x128xf32, #tpu.memory_space<vmem>>, vector<1x128xf32>
    %21 = vector.broadcast %20 : vector<1x128xf32> to vector<128x128xf32>
    %22 = arith.addf %19, %21 : vector<128x128xf32>
    %23 = arith.truncf %22 : vector<128x128xf32> to vector<128x128xbf16>
    %c0_9 = arith.constant 0 : index
    %c0_10 = arith.constant 0 : index
    %24 = vector.load %arg5[%c0_9, %c0_10] : memref<128x128xbf16, #tpu.memory_space<vmem>>, vector<128x128xbf16>
    tpu.vector_store %arg5[%c0_9, %c0_10], %23 {strides = array<i32>} : memref<128x128xbf16, #tpu.memory_space<vmem>>, vector<128x128xbf16>,
    return
  }
  func.func @transform_0(%arg0: i32) -> (i32, i32) {
    %c0_i32 = arith.constant 0 : i32
    %c0_i32_0 = arith.constant 0 : i32
    return %arg0, %c0_i32 : i32, i32
  }
  func.func @transform_1(%arg0: i32) -> (i32, i32) {
    %c0_i32 = arith.constant 0 : i32
    %c0_i32_0 = arith.constant 0 : i32
    %c0_i32_1 = arith.constant 0 : i32
    return %c0_i32, %c0_i32_0 : i32, i32
  }
  func.func @transform_2(%arg0: i32) -> (i32, i32) {
    %c0_i32 = arith.constant 0 : i32
    %c0_i32_0 = arith.constant 0 : i32
    %c0_i32_1 = arith.constant 0 : i32
    return %c0_i32, %c0_i32_0 : i32, i32
  }
  func.func @transform_3(%arg0: i32) -> (i32, i32) {
    %c0_i32 = arith.constant 0 : i32
    %c0_i32_0 = arith.constant 0 : i32
    %c0_i32_1 = arith.constant 0 : i32
    return %c0_i32, %c0_i32_0 : i32, i32
  }
  func.func @transform_4(%arg0: i32) -> (i32, i32) {
    %c0_i32 = arith.constant 0 : i32
    %c0_i32_0 = arith.constant 0 : i32
    return %arg0, %c0_i32 : i32, i32
  }
}

module attributes {stable_mosaic.version = 11 : i64} {
  func.func @_conv_mm_stats_kernel(%arg0: i32, %arg1: memref<112x256xbf16, #tpu.memory_space<vmem>>, %arg2: memref<256x128xbf16, #tpu.memory_space<vmem>>, %arg3: memref<1x128xf32, #tpu.memory_space<vmem>>, %arg4: memref<112x128xbf16, #tpu.memory_space<vmem>>, %arg5: memref<2x128xf32, #tpu.memory_space<vmem>>) attributes {dimension_semantics = [#tpu.dimension_semantics<arbitrary>], iteration_bounds = array<i64: 1>, scalar_prefetch = 0 : i64, scratch_operands = 0 : i64, tpu.core_type = #tpu.core_type<tc>, window_params = [{transform_indices = @transform_0, window_bounds = array<i64: 112, 256>}, {pipeline_mode = #tpu.pipeline_mode<synchronous>, transform_indices = @transform_1, window_bounds = array<i64: 256, 128>}, {pipeline_mode = #tpu.pipeline_mode<synchronous>, transform_indices = @transform_2, window_bounds = array<i64: 1, 128>}, {transform_indices = @transform_3, window_bounds = array<i64: 112, 128>}, {pipeline_mode = #tpu.pipeline_mode<synchronous>, transform_indices = @transform_4, window_bounds = array<i64: 2, 128>}]} {
    %c0 = arith.constant 0 : index
    %c0_0 = arith.constant 0 : index
    %0 = vector.load %arg1[%c0, %c0_0] : memref<112x256xbf16, #tpu.memory_space<vmem>>, vector<112x256xbf16>
    %cst = arith.constant 0.000000e+00 : bf16
    %1 = vector.broadcast %cst : bf16 to vector<112x256xbf16>
    %2 = arith.cmpf oge, %0, %1 : vector<112x256xbf16>
    %cst_1 = arith.constant 2.001950e-01 : bf16
    %3 = vector.broadcast %cst_1 : bf16 to vector<112x256xbf16>
    %4 = arith.mulf %0, %3 : vector<112x256xbf16>
    %5 = arith.select %2, %0, %4 : vector<112x256xi1>, vector<112x256xbf16>
    %c0_2 = arith.constant 0 : index
    %c0_3 = arith.constant 0 : index
    %6 = vector.load %arg2[%c0_2, %c0_3] : memref<256x128xbf16, #tpu.memory_space<vmem>>, vector<256x128xbf16>
    %cst_4 = arith.constant dense<0.000000e+00> : vector<112x128xf32>
    %7 = tpu.matmul %5, %6, %cst_4 {dimension_numbers = #tpu.dot_dimension_numbers<[1], [0], [0], [1], [0, 0, 1, 1], [], []>} : vector<112x256xbf16>, vector<256x128xbf16>, vector<112x128xf32> -> vector<112x128xf32>
    %c0_5 = arith.constant 0 : index
    %c0_6 = arith.constant 0 : index
    %8 = vector.load %arg3[%c0_5, %c0_6] : memref<1x128xf32, #tpu.memory_space<vmem>>, vector<1x128xf32>
    %9 = vector.broadcast %8 : vector<1x128xf32> to vector<112x128xf32>
    %10 = arith.addf %7, %9 : vector<112x128xf32>
    %11 = arith.truncf %10 : vector<112x128xf32> to vector<112x128xbf16>
    %c0_7 = arith.constant 0 : index
    %c0_8 = arith.constant 0 : index
    %12 = vector.load %arg4[%c0_7, %c0_8] : memref<112x128xbf16, #tpu.memory_space<vmem>>, vector<112x128xbf16>
    tpu.vector_store %arg4[%c0_7, %c0_8], %11 {strides = array<i32>} : memref<112x128xbf16, #tpu.memory_space<vmem>>, vector<112x128xbf16>,
    %c112_i32 = arith.constant 112 : i32
    %13 = arith.muli %arg0, %c112_i32 : i32
    %14 = tpu.iota {dimensions = array<i32: 0>} : vector<112x128xi32>
    %15 = vector.broadcast %13 : i32 to vector<112x128xi32>
    %16 = arith.addi %15, %14 : vector<112x128xi32>
    %c98_i32 = arith.constant 98 : i32
    %17 = vector.broadcast %c98_i32 : i32 to vector<112x128xi32>
    %18 = arith.cmpi slt, %16, %17 : vector<112x128xi32>
    %cst_9 = arith.constant 0.000000e+00 : f32
    %19 = vector.broadcast %cst_9 : f32 to vector<112x128xf32>
    %20 = arith.select %18, %10, %19 : vector<112x128xi1>, vector<112x128xf32>
    %cst_10 = arith.constant dense<0.000000e+00> : vector<128xf32>
    %21 = vector.multi_reduction <add>, %20, %cst_10 [0] : vector<112x128xf32> to vector<128xf32>
    %22 = vector.shape_cast %21 : vector<128xf32> to vector<1x128xf32>
    %23 = arith.mulf %20, %20 : vector<112x128xf32>
    %cst_11 = arith.constant dense<0.000000e+00> : vector<128xf32>
    %24 = vector.multi_reduction <add>, %23, %cst_11 [0] : vector<112x128xf32> to vector<128xf32>
    %25 = vector.shape_cast %24 : vector<128xf32> to vector<1x128xf32>
    %26 = tpu.concatenate %22, %25 in 0 : vector<1x128xf32>, vector<1x128xf32> -> vector<2x128xf32>
    %c0_i32 = arith.constant 0 : i32
    %27 = arith.cmpi eq, %arg0, %c0_i32 : i32
    %28 = arith.extui %27 : i1 to i32
    %c0_i32_12 = arith.constant 0 : i32
    %29 = arith.cmpi ne, %28, %c0_i32_12 : i32
    scf.if %29 {
      %cst_17 = arith.constant 0.000000e+00 : f32
      %33 = vector.broadcast %cst_17 : f32 to vector<2x128xf32>
      %c0_18 = arith.constant 0 : index
      %c0_19 = arith.constant 0 : index
      %34 = vector.load %arg5[%c0_18, %c0_19] : memref<2x128xf32, #tpu.memory_space<vmem>>, vector<2x128xf32>
      tpu.vector_store %arg5[%c0_18, %c0_19], %33 {strides = array<i32>} : memref<2x128xf32, #tpu.memory_space<vmem>>, vector<2x128xf32>,
    } else {
    }
    %c0_13 = arith.constant 0 : index
    %c0_14 = arith.constant 0 : index
    %30 = vector.load %arg5[%c0_13, %c0_14] : memref<2x128xf32, #tpu.memory_space<vmem>>, vector<2x128xf32>
    %31 = arith.addf %30, %26 : vector<2x128xf32>
    %c0_15 = arith.constant 0 : index
    %c0_16 = arith.constant 0 : index
    %32 = vector.load %arg5[%c0_15, %c0_16] : memref<2x128xf32, #tpu.memory_space<vmem>>, vector<2x128xf32>
    tpu.vector_store %arg5[%c0_15, %c0_16], %31 {strides = array<i32>} : memref<2x128xf32, #tpu.memory_space<vmem>>, vector<2x128xf32>,
    return
  }
  func.func @transform_0(%arg0: i32) -> (i32, i32) {
    %c0_i32 = arith.constant 0 : i32
    %c0_i32_0 = arith.constant 0 : i32
    return %arg0, %c0_i32 : i32, i32
  }
  func.func @transform_1(%arg0: i32) -> (i32, i32) {
    %c0_i32 = arith.constant 0 : i32
    %c0_i32_0 = arith.constant 0 : i32
    %c0_i32_1 = arith.constant 0 : i32
    return %c0_i32, %c0_i32_0 : i32, i32
  }
  func.func @transform_2(%arg0: i32) -> (i32, i32) {
    %c0_i32 = arith.constant 0 : i32
    %c0_i32_0 = arith.constant 0 : i32
    %c0_i32_1 = arith.constant 0 : i32
    return %c0_i32, %c0_i32_0 : i32, i32
  }
  func.func @transform_3(%arg0: i32) -> (i32, i32) {
    %c0_i32 = arith.constant 0 : i32
    %c0_i32_0 = arith.constant 0 : i32
    return %arg0, %c0_i32 : i32, i32
  }
  func.func @transform_4(%arg0: i32) -> (i32, i32) {
    %c0_i32 = arith.constant 0 : i32
    %c0_i32_0 = arith.constant 0 : i32
    %c0_i32_1 = arith.constant 0 : i32
    return %c0_i32, %c0_i32_0 : i32, i32
  }
}

module attributes {stable_mosaic.version = 11 : i64} {
  func.func @_bn_apply_kernel(%arg0: i32, %arg1: memref<112x128xbf16, #tpu.memory_space<vmem>>, %arg2: memref<2x128xf32, #tpu.memory_space<vmem>>, %arg3: memref<1x128xf32, #tpu.memory_space<vmem>>, %arg4: memref<1x128xf32, #tpu.memory_space<vmem>>, %arg5: memref<112x128xbf16, #tpu.memory_space<vmem>>) attributes {dimension_semantics = [#tpu.dimension_semantics<parallel>], iteration_bounds = array<i64: 1>, scalar_prefetch = 0 : i64, scratch_operands = 0 : i64, tpu.core_type = #tpu.core_type<tc>, window_params = [{transform_indices = @transform_0, window_bounds = array<i64: 112, 128>}, {pipeline_mode = #tpu.pipeline_mode<synchronous>, transform_indices = @transform_1, window_bounds = array<i64: 2, 128>}, {pipeline_mode = #tpu.pipeline_mode<synchronous>, transform_indices = @transform_2, window_bounds = array<i64: 1, 128>}, {pipeline_mode = #tpu.pipeline_mode<synchronous>, transform_indices = @transform_3, window_bounds = array<i64: 1, 128>}, {transform_indices = @transform_4, window_bounds = array<i64: 112, 128>}]} {
    %c0 = arith.constant 0 : index
    %c0_0 = arith.constant 0 : index
    %0 = vector.load %arg2[%c0, %c0_0] : memref<2x128xf32, #tpu.memory_space<vmem>>, vector<2x128xf32>
    %1 = vector.extract_strided_slice %0 {offsets = [0, 0], sizes = [1, 128], strides = [1, 1]} : vector<2x128xf32> to vector<1x128xf32>
    %cst = arith.constant 0.0102040814 : f32
    %2 = vector.broadcast %cst : f32 to vector<1x128xf32>
    %3 = arith.mulf %1, %2 : vector<1x128xf32>
    %4 = vector.extract_strided_slice %0 {offsets = [1, 0], sizes = [1, 128], strides = [1, 1]} : vector<2x128xf32> to vector<1x128xf32>
    %cst_1 = arith.constant 0.0102040814 : f32
    %5 = vector.broadcast %cst_1 : f32 to vector<1x128xf32>
    %6 = arith.mulf %4, %5 : vector<1x128xf32>
    %7 = arith.mulf %3, %3 : vector<1x128xf32>
    %8 = arith.subf %6, %7 : vector<1x128xf32>
    %cst_2 = arith.constant 9.99999974E-6 : f32
    %9 = vector.broadcast %cst_2 : f32 to vector<1x128xf32>
    %10 = arith.addf %8, %9 : vector<1x128xf32>
    %11 = math.rsqrt %10 : vector<1x128xf32>
    %c0_3 = arith.constant 0 : index
    %c0_4 = arith.constant 0 : index
    %12 = vector.load %arg3[%c0_3, %c0_4] : memref<1x128xf32, #tpu.memory_space<vmem>>, vector<1x128xf32>
    %13 = arith.mulf %11, %12 : vector<1x128xf32>
    %c0_5 = arith.constant 0 : index
    %c0_6 = arith.constant 0 : index
    %14 = vector.load %arg1[%c0_5, %c0_6] : memref<112x128xbf16, #tpu.memory_space<vmem>>, vector<112x128xbf16>
    %15 = arith.extf %14 : vector<112x128xbf16> to vector<112x128xf32>
    %16 = vector.broadcast %3 : vector<1x128xf32> to vector<112x128xf32>
    %17 = arith.subf %15, %16 : vector<112x128xf32>
    %18 = vector.broadcast %13 : vector<1x128xf32> to vector<112x128xf32>
    %19 = arith.mulf %17, %18 : vector<112x128xf32>
    %c0_7 = arith.constant 0 : index
    %c0_8 = arith.constant 0 : index
    %20 = vector.load %arg4[%c0_7, %c0_8] : memref<1x128xf32, #tpu.memory_space<vmem>>, vector<1x128xf32>
    %21 = vector.broadcast %20 : vector<1x128xf32> to vector<112x128xf32>
    %22 = arith.addf %19, %21 : vector<112x128xf32>
    %23 = arith.truncf %22 : vector<112x128xf32> to vector<112x128xbf16>
    %c0_9 = arith.constant 0 : index
    %c0_10 = arith.constant 0 : index
    %24 = vector.load %arg5[%c0_9, %c0_10] : memref<112x128xbf16, #tpu.memory_space<vmem>>, vector<112x128xbf16>
    tpu.vector_store %arg5[%c0_9, %c0_10], %23 {strides = array<i32>} : memref<112x128xbf16, #tpu.memory_space<vmem>>, vector<112x128xbf16>,
    return
  }
  func.func @transform_0(%arg0: i32) -> (i32, i32) {
    %c0_i32 = arith.constant 0 : i32
    %c0_i32_0 = arith.constant 0 : i32
    return %arg0, %c0_i32 : i32, i32
  }
  func.func @transform_1(%arg0: i32) -> (i32, i32) {
    %c0_i32 = arith.constant 0 : i32
    %c0_i32_0 = arith.constant 0 : i32
    %c0_i32_1 = arith.constant 0 : i32
    return %c0_i32, %c0_i32_0 : i32, i32
  }
  func.func @transform_2(%arg0: i32) -> (i32, i32) {
    %c0_i32 = arith.constant 0 : i32
    %c0_i32_0 = arith.constant 0 : i32
    %c0_i32_1 = arith.constant 0 : i32
    return %c0_i32, %c0_i32_0 : i32, i32
  }
  func.func @transform_3(%arg0: i32) -> (i32, i32) {
    %c0_i32 = arith.constant 0 : i32
    %c0_i32_0 = arith.constant 0 : i32
    %c0_i32_1 = arith.constant 0 : i32
    return %c0_i32, %c0_i32_0 : i32, i32
  }
  func.func @transform_4(%arg0: i32) -> (i32, i32) {
    %c0_i32 = arith.constant 0 : i32
    %c0_i32_0 = arith.constant 0 : i32
    return %arg0, %c0_i32 : i32, i32
  }
}

module attributes {stable_mosaic.version = 11 : i64} {
  func.func @_conv_mm_kernel(%arg0: i32, %arg1: memref<80x512xbf16, #tpu.memory_space<vmem>>, %arg2: memref<512x128xbf16, #tpu.memory_space<vmem>>, %arg3: memref<1x128xf32, #tpu.memory_space<vmem>>, %arg4: memref<80x128xf32, #tpu.memory_space<vmem>>) attributes {dimension_semantics = [#tpu.dimension_semantics<parallel>], iteration_bounds = array<i64: 1>, scalar_prefetch = 0 : i64, scratch_operands = 0 : i64, tpu.core_type = #tpu.core_type<tc>, window_params = [{transform_indices = @transform_0, window_bounds = array<i64: 80, 512>}, {pipeline_mode = #tpu.pipeline_mode<synchronous>, transform_indices = @transform_1, window_bounds = array<i64: 512, 128>}, {pipeline_mode = #tpu.pipeline_mode<synchronous>, transform_indices = @transform_2, window_bounds = array<i64: 1, 128>}, {transform_indices = @transform_3, window_bounds = array<i64: 80, 128>}]} {
    %c0 = arith.constant 0 : index
    %c0_0 = arith.constant 0 : index
    %0 = vector.load %arg1[%c0, %c0_0] : memref<80x512xbf16, #tpu.memory_space<vmem>>, vector<80x512xbf16>
    %cst = arith.constant 0.000000e+00 : bf16
    %1 = vector.broadcast %cst : bf16 to vector<80x512xbf16>
    %2 = arith.cmpf oge, %0, %1 : vector<80x512xbf16>
    %cst_1 = arith.constant 2.001950e-01 : bf16
    %3 = vector.broadcast %cst_1 : bf16 to vector<80x512xbf16>
    %4 = arith.mulf %0, %3 : vector<80x512xbf16>
    %5 = arith.select %2, %0, %4 : vector<80x512xi1>, vector<80x512xbf16>
    %c0_2 = arith.constant 0 : index
    %c0_3 = arith.constant 0 : index
    %6 = vector.load %arg2[%c0_2, %c0_3] : memref<512x128xbf16, #tpu.memory_space<vmem>>, vector<512x128xbf16>
    %cst_4 = arith.constant dense<0.000000e+00> : vector<80x128xf32>
    %7 = tpu.matmul %5, %6, %cst_4 {dimension_numbers = #tpu.dot_dimension_numbers<[1], [0], [0], [1], [0, 0, 1, 1], [], []>} : vector<80x512xbf16>, vector<512x128xbf16>, vector<80x128xf32> -> vector<80x128xf32>
    %c0_5 = arith.constant 0 : index
    %c0_6 = arith.constant 0 : index
    %8 = vector.load %arg3[%c0_5, %c0_6] : memref<1x128xf32, #tpu.memory_space<vmem>>, vector<1x128xf32>
    %9 = vector.broadcast %8 : vector<1x128xf32> to vector<80x128xf32>
    %10 = arith.addf %7, %9 : vector<80x128xf32>
    %cst_7 = arith.constant 0.000000e+00 : f32
    %11 = vector.broadcast %cst_7 : f32 to vector<80x128xf32>
    %12 = arith.subf %11, %10 : vector<80x128xf32>
    %13 = math.exp %12 : vector<80x128xf32>
    %cst_8 = arith.constant 1.000000e+00 : f32
    %14 = vector.broadcast %cst_8 : f32 to vector<80x128xf32>
    %15 = arith.addf %14, %13 : vector<80x128xf32>
    %16 = tpu.reciprocal %15 {approx = true} : vector<80x128xf32> -> vector<80x128xf32>
    %cst_9 = arith.constant 0.000000e+00 : f32
    %cst_10 = arith.constant 1.000000e+00 : f32
    %17 = vector.broadcast %cst_9 : f32 to vector<80x128xf32>
    %18 = arith.maximumf %17, %16 : vector<80x128xf32>
    %19 = vector.broadcast %cst_10 : f32 to vector<80x128xf32>
    %20 = arith.minimumf %19, %18 : vector<80x128xf32>
    %c0_11 = arith.constant 0 : index
    %c0_12 = arith.constant 0 : index
    %21 = vector.load %arg4[%c0_11, %c0_12] : memref<80x128xf32, #tpu.memory_space<vmem>>, vector<80x128xf32>
    tpu.vector_store %arg4[%c0_11, %c0_12], %20 {strides = array<i32>} : memref<80x128xf32, #tpu.memory_space<vmem>>, vector<80x128xf32>,
    return
  }
  func.func @transform_0(%arg0: i32) -> (i32, i32) {
    %c0_i32 = arith.constant 0 : i32
    %c0_i32_0 = arith.constant 0 : i32
    return %arg0, %c0_i32 : i32, i32
  }
  func.func @transform_1(%arg0: i32) -> (i32, i32) {
    %c0_i32 = arith.constant 0 : i32
    %c0_i32_0 = arith.constant 0 : i32
    %c0_i32_1 = arith.constant 0 : i32
    return %c0_i32, %c0_i32_0 : i32, i32
  }
  func.func @transform_2(%arg0: i32) -> (i32, i32) {
    %c0_i32 = arith.constant 0 : i32
    %c0_i32_0 = arith.constant 0 : i32
    %c0_i32_1 = arith.constant 0 : i32
    return %c0_i32, %c0_i32_0 : i32, i32
  }
  func.func @transform_3(%arg0: i32) -> (i32, i32) {
    %c0_i32 = arith.constant 0 : i32
    %c0_i32_0 = arith.constant 0 : i32
    return %arg0, %c0_i32 : i32, i32
  }
}

</mosaic_0001>

<llo_original>
// kernel: discriminator128_forward.6
$region0: #{discriminator128_forward.6}
  #allocation0 [shape = 'u32[]', space=smem, size = 0x4, offset = 0x4, fixed_abs, tag = 'smem constant byte address 0x4 - core index']
  #allocation1 [shape = 'u32[72,128]{1,0:T(1,128)}', space=vmem, size = 0x9000, scoped, tag = 'internal scratch']
  %s0 = inlined_call_operand.vmem [shape: bf16[512,64], index: 0, kind: input, shape index: {}]
  %s1 = inlined_call_operand.vmem [shape: bf16[64,128], index: 1, kind: input, shape index: {}]
  %s2 = inlined_call_operand.vmem [shape: f32[1,128], index: 2, kind: input, shape index: {}]
  %s3 = inlined_call_operand.vmem [shape: bf16[512,128], index: 3, kind: output, shape index: {}]
  %s4 = sld [smem:[#allocation0]]
  $region45: #{discriminator128_forward.6} parent=0
    _
  %s6 = ssub.s32 1, %s4
  %s7 = scalar_select 0, %s6, %s4
  loop: start=0, step=1, limit=4
  $region2: #{discriminator128_forward.6} parent=0 // loop_pre_header
    _
  $region3: #{discriminator128_forward.6} parent=0 // loop_header
    %s9 = sphi 0, %s13
    %p10 = scmp.ge.s32.totalorder %s9, 4
    %s19 = sphi 0, %s21
    %s22 = sphi 0, %s19
    %s23 = sphi 0, %s22
    %s39 = sphi 0, %s23
    %s43 = sphi 0, %s43
    %s45 = sphi 0, %s43
    %s46 = sphi 0, %s45
    %s60 = sphi 0, %s46
    %s64 = sphi 0, %s64
    %s66 = sphi 0, %s64
    %s67 = sphi 0, %s66
    %s81 = sphi 0, %s67
    %s87 = sphi 0, %s89
    %s90 = sphi 0, %s87
    %s91 = sphi 0, %s90
    %s107 = sphi 0, %s91
  $region4: #{discriminator128_forward.6} parent=0 // loop_header_branch
    %12 = sbr.rel (%p10) target = $region8
  $region5: #{discriminator128_forward.6} parent=0 // loop_body
    %s14 = ssub.s32 %s9, 1
    %s15 = ssub.s32 %s9, 2
    %s16 = sadd.s32 %s9, 1
    %s17 = ssub.s32 %s9, %s16
    %p18 = scmp.eq.s32.totalorder %s17, 0
    %s20 = sadd.s32 %s19, 1
    %s21 = scalar_select %p18, %s19, %s20
    %p24 = pneg %p18
    %p25 = scmp.eq.s32.totalorder %s9, 1
    %p26 = por %p24, %p25
    %p27 = scmp.ne.s32.totalorder %s19, %s22
    %p28 = scmp.eq.s32.totalorder %s9, 0
    %p29 = por %p27, %p28
    %p30 = scmp.ne.s32.totalorder %s19, %s22
    %p31 = scmp.eq.s32.totalorder %s14, 1
    %p32 = por %p30, %p31
    %p33 = scmp.ne.s32.totalorder %s22, %s23
    %p34 = scmp.eq.s32.totalorder %s14, 0
    %p35 = por %p33, %p34
    %p36 = scmp.ne.s32.totalorder %s22, %s23
    %p37 = scmp.eq.s32.totalorder %s15, 1
    %p38 = por %p36, %p37
    %p40 = scmp.ne.s32.totalorder %s23, %s39
    %p41 = scmp.eq.s32.totalorder %s15, 0
    %p42 = por %p40, %p41
    %s44 = sadd.s32 %s43, 1
    %p47 = scmp.eq.s32.totalorder %s9, 1
    %p48 = scmp.ne.s32.totalorder %s43, %s45
    %p49 = scmp.eq.s32.totalorder %s9, 0
    %p50 = por %p48, %p49
    %p51 = scmp.ne.s32.totalorder %s43, %s45
    %p52 = scmp.eq.s32.totalorder %s14, 1
    %p53 = por %p51, %p52
    %p54 = scmp.ne.s32.totalorder %s45, %s46
    %p55 = scmp.eq.s32.totalorder %s14, 0
    %p56 = por %p54, %p55
    %p57 = scmp.ne.s32.totalorder %s45, %s46
    %p58 = scmp.eq.s32.totalorder %s15, 1
    %p59 = por %p57, %p58
    %p61 = scmp.ne.s32.totalorder %s46, %s60
    %p62 = scmp.eq.s32.totalorder %s15, 0
    %p63 = por %p61, %p62
    %s65 = sadd.s32 %s64, 1
    %p68 = scmp.eq.s32.totalorder %s9, 1
    %p69 = scmp.ne.s32.totalorder %s64, %s66
    %p70 = scmp.eq.s32.totalorder %s9, 0
    %p71 = por %p69, %p70
    %p72 = scmp.ne.s32.totalorder %s64, %s66
    %p73 = scmp.eq.s32.totalorder %s14, 1
    %p74 = por %p72, %p73
    %p75 = scmp.ne.s32.totalorder %s66, %s67
    %p76 = scmp.eq.s32.totalorder %s14, 0
    %p77 = por %p75, %p76
    %p78 = scmp.ne.s32.totalorder %s66, %s67
    %p79 = scmp.eq.s32.totalorder %s15, 1
    %p80 = por %p78, %p79
    %p82 = scmp.ne.s32.totalorder %s67, %s81
    %p83 = scmp.eq.s32.totalorder %s15, 0
    %p84 = por %p82, %p83
    %s85 = ssub.s32 %s9, %s16
    %p86 = scmp.eq.s32.totalorder %s85, 0
    %s88 = sadd.s32 %s87, 1
    %s89 = scalar_select %p86, %s87, %s88
    %p92 = pneg %p86
    %p93 = scmp.eq.s32.totalorder %s9, 1
    %p94 = por %p92, %p93
    %p95 = scmp.ne.s32.totalorder %s87, %s90
    %p96 = scmp.eq.s32.totalorder %s9, 0
    %p97 = por %p95, %p96
    %p98 = scmp.ne.s32.totalorder %s87, %s90
    %p99 = scmp.eq.s32.totalorder %s14, 1
    %p100 = por %p98, %p99
    %p101 = scmp.ne.s32.totalorder %s90, %s91
    %p102 = scmp.eq.s32.totalorder %s14, 0
    %p103 = por %p101, %p102
    %p104 = scmp.ne.s32.totalorder %s90, %s91
    %p105 = scmp.eq.s32.totalorder %s15, 1
    %p106 = por %p104, %p105
    %p108 = scmp.ne.s32.totalorder %s91, %s107
    %p109 = scmp.eq.s32.totalorder %s15, 0
    %p110 = por %p108, %p109
    %p111 = scmp.le.s32.totalorder 1, %s9
    %p112 = scmp.lt.s32.totalorder %s9, 3
    %p113 = pnand %p111, %p112
    %p114 = pneg %p113
    // Predicated region
    $region9: #{discriminator128_forward.6} parent=5 // pred_check
      _
    $region10: #{discriminator128_forward.6} parent=5 // pred_check_branch
      %116 = sbr.rel (%p113) target = $region12
    $region11: #{discriminator128_forward.6} parent=5 // pred_region
      %s117 = ssub.s32 %s9, 1
      // Predicated region
      $region13: #{discriminator128_forward.6} parent=11 // pred_check
        %p118 = pneg %p56
      $region14: #{discriminator128_forward.6} parent=11 // pred_check_branch
        %120 = sbr.rel (%p118) target = $region16
      $region15: #{discriminator128_forward.6} parent=11 // pred_region
        _
      $region16: #{discriminator128_forward.6} parent=11 // pred_fallthru
        _
      // Predicated region
      $region17: #{discriminator128_forward.6} parent=11 // pred_check
        %p121 = pneg %p77
      $region18: #{discriminator128_forward.6} parent=11 // pred_check_branch
        %123 = sbr.rel (%p121) target = $region20
      $region19: #{discriminator128_forward.6} parent=11 // pred_region
        _
      $region20: #{discriminator128_forward.6} parent=11 // pred_fallthru
        _
    $region12: #{discriminator128_forward.6} parent=5 // pred_fallthru
      _
    %p124 = scmp.lt.s32.totalorder %s9, 2
    // Predicated region
    $region21: #{discriminator128_forward.6} parent=5 // pred_check
      %p125 = pneg %p124
    $region22: #{discriminator128_forward.6} parent=5 // pred_check_branch
      %127 = sbr.rel (%p125) target = $region24
    $region23: #{discriminator128_forward.6} parent=5 // pred_region
      // Predicated region
      $region25: #{discriminator128_forward.6} parent=23 // pred_check
        %p128 = pneg %p29
      $region26: #{discriminator128_forward.6} parent=23 // pred_check_branch
        %130 = sbr.rel (%p128) target = $region28
      $region27: #{discriminator128_forward.6} parent=23 // pred_region
        %s131 = smul.u32 32, %s9
        %p132 = scmp.lt.s32.totalorder %s131, 63
        %s133 = scalar_select %p132, %s131, 63
        %s134 = smul.addr %s133, 4
        %s135 = scalar_lea.vmem %s0, %s134
        %s136 = smul.u32 32, %s9
      $region28: #{discriminator128_forward.6} parent=23 // pred_fallthru
        _
    $region24: #{discriminator128_forward.6} parent=5 // pred_fallthru
      _
    %p137 = scmp.le.s32.totalorder 1, %s9
    %p138 = scmp.lt.s32.totalorder %s9, 3
    %p139 = pnand %p137, %p138
    %p140 = pneg %p139
    // Predicated region
    $region29: #{discriminator128_forward.6} parent=5 // pred_check
      _
    $region30: #{discriminator128_forward.6} parent=5 // pred_check_branch
      %142 = sbr.rel (%p139) target = $region32
    $region31: #{discriminator128_forward.6} parent=5 // pred_region
      %s143 = ssub.s32 %s9, 1
      %s144 = smul.u32 32, %s14
      %p145 = scmp.lt.s32.totalorder %s144, 63
      %s146 = scalar_select %p145, %s144, 63
      %s147 = smul.addr %s146, 4
      %s148 = scalar_lea.vmem %s0, %s147
      %p149 = pneg %p35
      %p150 = pneg %p32
      %p151 = pneg %p56
      %p152 = pneg %p53
      %p153 = pneg %p77
      %p154 = pneg %p74
      %p155 = pneg %p103
      %p156 = pneg %p100
      %s157 = smul.u32 32, %s14
      %p158 = scmp.lt.s32.totalorder %s157, 63
      %s159 = scalar_select %p158, %s157, 63
      %s160 = smul.addr %s159, 4
      %s161 = scalar_lea.vmem %s3, %s160
      %s162 = smul.u32 32, %s14
      %p163 = scmp.lt.s32.totalorder %s162, 63
      %s164 = scalar_select %p163, %s162, 63
      %s165 = smul.addr %s164, 4
      %s166 = scalar_lea.vmem %s0, %s165
      %s167 = smul.u32 32, %s14
      %s168 = smul.u32 32, %s14
      %p169 = scmp.lt.s32.totalorder %s168, 63
      %s170 = scalar_select %p169, %s168, 63
      %s171 = smul.addr %s170, 4
      %s172 = scalar_lea.vmem %s3, %s171
      %s173 = smul.u32 32, %s14
      %v175 = vld [vmem:[%s166] sm:$0xf]
      %v176 = vld [vmem:[%s166 + $0x4] sm:$0xf]
      %v177 = vld [vmem:[%s166 + $0x8] sm:$0xf]
      %v178 = vld [vmem:[%s166 + $0xc] sm:$0xf]
      %v179 = vld [vmem:[%s166 + $0x10] sm:$0xf]
      %v180 = vld [vmem:[%s166 + $0x14] sm:$0xf]
      %v181 = vld [vmem:[%s166 + $0x18] sm:$0xf]
      %v182 = vld [vmem:[%s166 + $0x1c] sm:$0xf]
      %v183 = vld [vmem:[%s166 + $0x20] sm:$0xf]
      %v184 = vld [vmem:[%s166 + $0x24] sm:$0xf]
      %v185 = vld [vmem:[%s166 + $0x28] sm:$0xf]
      %v186 = vld [vmem:[%s166 + $0x2c] sm:$0xf]
      %v187 = vld [vmem:[%s166 + $0x30] sm:$0xf]
      %v188 = vld [vmem:[%s166 + $0x34] sm:$0xf]
      %v189 = vld [vmem:[%s166 + $0x38] sm:$0xf]
      %v190 = vld [vmem:[%s166 + $0x3c] sm:$0xf]
      %v191 = vld [vmem:[%s166 + $0x40] sm:$0xf]
      %v192 = vld [vmem:[%s166 + $0x44] sm:$0xf]
      %v193 = vld [vmem:[%s166 + $0x48] sm:$0xf]
      %v194 = vld [vmem:[%s166 + $0x4c] sm:$0xf]
      %v195 = vld [vmem:[%s166 + $0x50] sm:$0xf]
      %v196 = vld [vmem:[%s166 + $0x54] sm:$0xf]
      %v197 = vld [vmem:[%s166 + $0x58] sm:$0xf]
      %v198 = vld [vmem:[%s166 + $0x5c] sm:$0xf]
      %v199 = vld [vmem:[%s166 + $0x60] sm:$0xf]
      %v200 = vld [vmem:[%s166 + $0x64] sm:$0xf]
      %v201 = vld [vmem:[%s166 + $0x68] sm:$0xf]
      %v202 = vld [vmem:[%s166 + $0x6c] sm:$0xf]
      %v203 = vld [vmem:[%s166 + $0x70] sm:$0xf]
      %v204 = vld [vmem:[%s166 + $0x74] sm:$0xf]
      %v205 = vld [vmem:[%s166 + $0x78] sm:$0xf]
      %v206 = vld [vmem:[%s166 + $0x7c] sm:$0xf]
      %v207 = vld [vmem:[%s1] sm:$0xf]
      %v208 = vld [vmem:[%s1 + $0x4] sm:$0xf]
      %v209 = vld [vmem:[%s1 + $0x8] sm:$0xf]
      %v210 = vld [vmem:[%s1 + $0xc] sm:$0xf]
      %v211 = vld [vmem:[%s1 + $0x10] sm:$0xf]
      %v212 = vld [vmem:[%s1 + $0x14] sm:$0xf]
      %v213 = vld [vmem:[%s1 + $0x18] sm:$0xf]
      %v214 = vld [vmem:[%s1 + $0x1c] sm:$0xf]
      %v215 = vld [vmem:[%s2] sm:$0x1]
      %v217 = vperm.slane %v215, 0
      %v251 = vunpack.c.l.b16 %v175
      %v252 = vunpack.c.l.b16 %v176
      %v253 = vunpack.c.l.b16 %v177
      %v254 = vunpack.c.l.b16 %v178
      %v255 = vunpack.c.l.b16 %v179
      %v256 = vunpack.c.l.b16 %v180
      %v257 = vunpack.c.l.b16 %v181
      %v258 = vunpack.c.l.b16 %v182
      %v259 = vunpack.c.l.b16 %v183
      %v260 = vunpack.c.l.b16 %v184
      %v261 = vunpack.c.l.b16 %v185
      %v262 = vunpack.c.l.b16 %v186
      %v263 = vunpack.c.l.b16 %v187
      %v264 = vunpack.c.l.b16 %v188
      %v265 = vunpack.c.l.b16 %v189
      %v266 = vunpack.c.l.b16 %v190
      %v267 = vunpack.c.l.b16 %v191
      %v268 = vunpack.c.l.b16 %v192
      %v269 = vunpack.c.l.b16 %v193
      %v270 = vunpack.c.l.b16 %v194
      %v271 = vunpack.c.l.b16 %v195
      %v272 = vunpack.c.l.b16 %v196
      %v273 = vunpack.c.l.b16 %v197
      %v274 = vunpack.c.l.b16 %v198
      %v275 = vunpack.c.l.b16 %v199
      %v276 = vunpack.c.l.b16 %v200
      %v277 = vunpack.c.l.b16 %v201
      %v278 = vunpack.c.l.b16 %v202
      %v279 = vunpack.c.l.b16 %v203
      %v280 = vunpack.c.l.b16 %v204
      %v281 = vunpack.c.l.b16 %v205
      %v282 = vunpack.c.l.b16 %v206
      %v283 = vpack.c.b16 %v252, %v251
      %v284 = vpack.c.b16 %v254, %v253
      %v285 = vpack.c.b16 %v256, %v255
      %v286 = vpack.c.b16 %v258, %v257
      %v287 = vpack.c.b16 %v260, %v259
      %v288 = vpack.c.b16 %v262, %v261
      %v289 = vpack.c.b16 %v264, %v263
      %v290 = vpack.c.b16 %v266, %v265
      %v291 = vpack.c.b16 %v268, %v267
      %v292 = vpack.c.b16 %v270, %v269
      %v293 = vpack.c.b16 %v272, %v271
      %v294 = vpack.c.b16 %v274, %v273
      %v295 = vpack.c.b16 %v276, %v275
      %v296 = vpack.c.b16 %v278, %v277
      %v297 = vpack.c.b16 %v280, %v279
      %v298 = vpack.c.b16 %v282, %v281
      %v307 = vunpack.c.l.b16 %v207
      %v308 = vunpack.c.l.b16 %v208
      %v309 = vunpack.c.l.b16 %v209
      %v310 = vunpack.c.l.b16 %v210
      %v311 = vunpack.c.l.b16 %v211
      %v312 = vunpack.c.l.b16 %v212
      %v313 = vunpack.c.l.b16 %v213
      %v314 = vunpack.c.l.b16 %v214
      %v315 = vpack.c.b16 %v308, %v307
      %v316 = vpack.c.b16 %v310, %v309
      %v317 = vpack.c.b16 %v312, %v311
      %v318 = vpack.c.b16 %v314, %v313
      %vm323 = vcmask 523264
      %v325 = vsel %vm323, %v283, 0
      %v328 = vsel %vm323, %v284, 0
      %v331 = vsel %vm323, %v285, 0
      %v334 = vsel %vm323, %v286, 0
      %v337 = vsel %vm323, %v287, 0
      %v340 = vsel %vm323, %v288, 0
      %v343 = vsel %vm323, %v289, 0
      %v346 = vsel %vm323, %v290, 0
      %v349 = vsel %vm323, %v291, 0
      %v352 = vsel %vm323, %v292, 0
      %v355 = vsel %vm323, %v293, 0
      %v358 = vsel %vm323, %v294, 0
      %v361 = vsel %vm323, %v295, 0
      %v364 = vsel %vm323, %v296, 0
      %v367 = vsel %vm323, %v297, 0
      %v370 = vsel %vm323, %v298, 0
      %372 = vmatpush.bf16.msra.mxu0 0
      %373 = vmatpush.bf16.msra.mxu0 0
      %374 = vmatpush.bf16.msra.mxu0 0
      %375 = vmatpush.bf16.msra.mxu0 0
      %376 = vmatpush.bf16.msra.mxu0 %v318
      %377 = vmatpush.bf16.msra.mxu0 %v317
      %378 = vmatpush.bf16.msra.mxu0 %v316
      %379 = vmatpush.bf16.msra.mxu0 %v315
      %380 = vmatmul.bf16.gmra.mxu0 %v325
      %v381 = vpop.f32.mrf.mxu0
      %v382 = vadd.f32 %v217, %v381
      %v383 = vpop.f32.mrf.mxu0
      %v384 = vadd.f32 %v217, %v383
      %385 = vmatmul.bf16.gmra.mxu0 %v328
      %v386 = vpop.f32.mrf.mxu0
      %v387 = vadd.f32 %v217, %v386
      %v388 = vpop.f32.mrf.mxu0
      %v389 = vadd.f32 %v217, %v388
      %390 = vmatmul.bf16.gmra.mxu0 %v331
      %v391 = vpop.f32.mrf.mxu0
      %v392 = vadd.f32 %v217, %v391
      %v393 = vpop.f32.mrf.mxu0
      %v394 = vadd.f32 %v217, %v393
      %395 = vmatmul.bf16.gmra.mxu0 %v334
      %v396 = vpop.f32.mrf.mxu0
      %v397 = vadd.f32 %v217, %v396
      %v398 = vpop.f32.mrf.mxu0
      %v399 = vadd.f32 %v217, %v398
      %400 = vmatmul.bf16.gmra.mxu0 %v337
      %v401 = vpop.f32.mrf.mxu0
      %v402 = vadd.f32 %v217, %v401
      %v403 = vpop.f32.mrf.mxu0
      %v404 = vadd.f32 %v217, %v403
      %405 = vmatmul.bf16.gmra.mxu0 %v340
      %v406 = vpop.f32.mrf.mxu0
      %v407 = vadd.f32 %v217, %v406
      %v408 = vpop.f32.mrf.mxu0
      %v409 = vadd.f32 %v217, %v408
      %410 = vmatmul.bf16.gmra.mxu0 %v343
      %v411 = vpop.f32.mrf.mxu0
      %v412 = vadd.f32 %v217, %v411
      %v413 = vpop.f32.mrf.mxu0
      %v414 = vadd.f32 %v217, %v413
      %415 = vmatmul.bf16.gmra.mxu0 %v346
      %v416 = vpop.f32.mrf.mxu0
      %v417 = vadd.f32 %v217, %v416
      %v418 = vpop.f32.mrf.mxu0
      %v419 = vadd.f32 %v217, %v418
      %420 = vmatmul.bf16.gmra.mxu0 %v349
      %v421 = vpop.f32.mrf.mxu0
      %v422 = vadd.f32 %v217, %v421
      %v423 = vpop.f32.mrf.mxu0
      %v424 = vadd.f32 %v217, %v423
      %425 = vmatmul.bf16.gmra.mxu0 %v352
      %v426 = vpop.f32.mrf.mxu0
      %v427 = vadd.f32 %v217, %v426
      %v428 = vpop.f32.mrf.mxu0
      %v429 = vadd.f32 %v217, %v428
      %430 = vmatmul.bf16.gmra.mxu0 %v355
      %v431 = vpop.f32.mrf.mxu0
      %v432 = vadd.f32 %v217, %v431
      %v433 = vpop.f32.mrf.mxu0
      %v434 = vadd.f32 %v217, %v433
      %435 = vmatmul.bf16.gmra.mxu0 %v358
      %v436 = vpop.f32.mrf.mxu0
      %v437 = vadd.f32 %v217, %v436
      %v438 = vpop.f32.mrf.mxu0
      %v439 = vadd.f32 %v217, %v438
      %440 = vmatmul.bf16.gmra.mxu0 %v361
      %v441 = vpop.f32.mrf.mxu0
      %v442 = vadd.f32 %v217, %v441
      %v443 = vpop.f32.mrf.mxu0
      %v444 = vadd.f32 %v217, %v443
      %445 = vmatmul.bf16.gmra.mxu0 %v364
      %v446 = vpop.f32.mrf.mxu0
      %v447 = vadd.f32 %v217, %v446
      %v448 = vpop.f32.mrf.mxu0
      %v449 = vadd.f32 %v217, %v448
      %450 = vmatmul.bf16.gmra.mxu0 %v367
      %v451 = vpop.f32.mrf.mxu0
      %v452 = vadd.f32 %v217, %v451
      %v453 = vpop.f32.mrf.mxu0
      %v454 = vadd.f32 %v217, %v453
      %455 = vmatmul.bf16.gmra.mxu0 %v370
      %v456 = vpop.f32.mrf.mxu0
      %v457 = vadd.f32 %v217, %v456
      %v458 = vpop.f32.mrf.mxu0
      %v459 = vadd.f32 %v217, %v458
      %460 = vdwg.mxu0
      %v461 = vpack.c.bf16 %v382, %v382
      %v462 = vpack.c.bf16 %v384, %v384
      %v463 = vpack.c.bf16 %v387, %v387
      %v464 = vpack.c.bf16 %v389, %v389
      %v465 = vpack.c.bf16 %v392, %v392
      %v466 = vpack.c.bf16 %v394, %v394
      %v467 = vpack.c.bf16 %v397, %v397
      %v468 = vpack.c.bf16 %v399, %v399
      %v469 = vpack.c.bf16 %v402, %v402
      %v470 = vpack.c.bf16 %v404, %v404
      %v471 = vpack.c.bf16 %v407, %v407
      %v472 = vpack.c.bf16 %v409, %v409
      %v473 = vpack.c.bf16 %v412, %v412
      %v474 = vpack.c.bf16 %v414, %v414
      %v475 = vpack.c.bf16 %v417, %v417
      %v476 = vpack.c.bf16 %v419, %v419
      %v477 = vpack.c.bf16 %v422, %v422
      %v478 = vpack.c.bf16 %v424, %v424
      %v479 = vpack.c.bf16 %v427, %v427
      %v480 = vpack.c.bf16 %v429, %v429
      %v481 = vpack.c.bf16 %v432, %v432
      %v482 = vpack.c.bf16 %v434, %v434
      %v483 = vpack.c.bf16 %v437, %v437
      %v484 = vpack.c.bf16 %v439, %v439
      %v485 = vpack.c.bf16 %v442, %v442
      %v486 = vpack.c.bf16 %v444, %v444
      %v487 = vpack.c.bf16 %v447, %v447
      %v488 = vpack.c.bf16 %v449, %v449
      %v489 = vpack.c.bf16 %v452, %v452
      %v490 = vpack.c.bf16 %v454, %v454
      %v491 = vpack.c.bf16 %v457, %v457
      %v492 = vpack.c.bf16 %v459, %v459
      %493 = vst [vmem:[%s172] sm:$0xf] %v461
      %494 = vst [vmem:[%s172 + $0x4] sm:$0xf] %v462
      %495 = vst [vmem:[%s172 + $0x8] sm:$0xf] %v463
      %496 = vst [vmem:[%s172 + $0xc] sm:$0xf] %v464
      %497 = vst [vmem:[%s172 + $0x10] sm:$0xf] %v465
      %498 = vst [vmem:[%s172 + $0x14] sm:$0xf] %v466
      %499 = vst [vmem:[%s172 + $0x18] sm:$0xf] %v467
      %500 = vst [vmem:[%s172 + $0x1c] sm:$0xf] %v468
      %501 = vst [vmem:[%s172 + $0x20] sm:$0xf] %v469
      %502 = vst [vmem:[%s172 + $0x24] sm:$0xf] %v470
      %503 = vst [vmem:[%s172 + $0x28] sm:$0xf] %v471
      %504 = vst [vmem:[%s172 + $0x2c] sm:$0xf] %v472
      %505 = vst [vmem:[%s172 + $0x30] sm:$0xf] %v473
      %506 = vst [vmem:[%s172 + $0x34] sm:$0xf] %v474
      %507 = vst [vmem:[%s172 + $0x38] sm:$0xf] %v475
      %508 = vst [vmem:[%s172 + $0x3c] sm:$0xf] %v476
      %509 = vst [vmem:[%s172 + $0x40] sm:$0xf] %v477
      %510 = vst [vmem:[%s172 + $0x44] sm:$0xf] %v478
      %511 = vst [vmem:[%s172 + $0x48] sm:$0xf] %v479
      %512 = vst [vmem:[%s172 + $0x4c] sm:$0xf] %v480
      %513 = vst [vmem:[%s172 + $0x50] sm:$0xf] %v481
      %514 = vst [vmem:[%s172 + $0x54] sm:$0xf] %v482
      %515 = vst [vmem:[%s172 + $0x58] sm:$0xf] %v483
      %516 = vst [vmem:[%s172 + $0x5c] sm:$0xf] %v484
      %517 = vst [vmem:[%s172 + $0x60] sm:$0xf] %v485
      %518 = vst [vmem:[%s172 + $0x64] sm:$0xf] %v486
      %519 = vst [vmem:[%s172 + $0x68] sm:$0xf] %v487
      %520 = vst [vmem:[%s172 + $0x6c] sm:$0xf] %v488
      %521 = vst [vmem:[%s172 + $0x70] sm:$0xf] %v489
      %522 = vst [vmem:[%s172 + $0x74] sm:$0xf] %v490
      %523 = vst [vmem:[%s172 + $0x78] sm:$0xf] %v491
      %524 = vst [vmem:[%s172 + $0x7c] sm:$0xf] %v492
      %s525 = smul.u32 32, %s14
      %p526 = scmp.lt.s32.totalorder %s525, 63
      %s527 = scalar_select %p526, %s525, 63
      %s528 = smul.addr %s527, 4
      %s529 = scalar_lea.vmem %s3, %s528
      // Predicated region
      $region33: #{discriminator128_forward.6} parent=31 // pred_check
        %p530 = pneg %p100
      $region34: #{discriminator128_forward.6} parent=31 // pred_check_branch
        %532 = sbr.rel (%p530) target = $region36
      $region35: #{discriminator128_forward.6} parent=31 // pred_region
        %s533 = smul.u32 32, %s14
      $region36: #{discriminator128_forward.6} parent=31 // pred_fallthru
        _
    $region32: #{discriminator128_forward.6} parent=5 // pred_fallthru
      _
    %p534 = scmp.le.s32.totalorder 2, %s9
    // Predicated region
    $region37: #{discriminator128_forward.6} parent=5 // pred_check
      %p535 = pneg %p534
    $region38: #{discriminator128_forward.6} parent=5 // pred_check_branch
      %537 = sbr.rel (%p535) target = $region40
    $region39: #{discriminator128_forward.6} parent=5 // pred_region
      %s538 = ssub.s32 %s9, 2
      // Predicated region
      $region41: #{discriminator128_forward.6} parent=39 // pred_check
        %p539 = pneg %p106
      $region42: #{discriminator128_forward.6} parent=39 // pred_check_branch
        %541 = sbr.rel (%p539) target = $region44
      $region43: #{discriminator128_forward.6} parent=39 // pred_region
        %s542 = smul.u32 32, %s15
        %p543 = scmp.lt.s32.totalorder %s542, 63
        %s544 = scalar_select %p543, %s542, 63
        %s545 = smul.addr %s544, 4
        %s546 = scalar_lea.vmem %s3, %s545
      $region44: #{discriminator128_forward.6} parent=39 // pred_fallthru
        _
    $region40: #{discriminator128_forward.6} parent=5 // pred_fallthru
      _
  $region6: #{discriminator128_forward.6} parent=0 // loop_footer
    %s13 = sadd.s32 1, %s9
  $region7: #{discriminator128_forward.6} parent=0 // loop_footer_branch
    %8 = sbr.rel target = $region3
  $region8: #{discriminator128_forward.6} parent=0 // loop_exit
    _

// kernel: discriminator128_forward.7
$region0: #{discriminator128_forward.7}
  #allocation0 [shape = 'u32[]', space=smem, size = 0x4, offset = 0x4, fixed_abs, tag = 'smem constant byte address 0x4 - core index']
  #allocation1 [shape = 'u32[72,128]{1,0:T(1,128)}', space=vmem, size = 0x9000, scoped, tag = 'internal scratch']
  %s0 = inlined_call_operand.vmem [shape: bf16[128,128], index: 0, kind: input, shape index: {}]
  %s1 = inlined_call_operand.vmem [shape: bf16[128,128], index: 1, kind: input, shape index: {}]
  %s2 = inlined_call_operand.vmem [shape: f32[1,128], index: 2, kind: input, shape index: {}]
  %s3 = inlined_call_operand.vmem [shape: bf16[128,128], index: 3, kind: output, shape index: {0}]
  %s4 = inlined_call_operand.vmem [shape: f32[2,128], index: 4, kind: output, shape index: {1}]
  %5 = xla_tuple %s3, %s4
  %s6 = sld [smem:[#allocation0]]
  $region34: #{discriminator128_forward.7} parent=0
    _
  %s8 = ssub.s32 1, %s6
  %s9 = scalar_select 0, %s8, %s6
  // Predicated region
  $region2: #{discriminator128_forward.7} parent=0 // pred_check
    _
  $region3: #{discriminator128_forward.7} parent=0 // pred_check_branch
    %11 = sbr.rel (0) target = $region5
  $region4: #{discriminator128_forward.7} parent=0 // pred_region
    _
  $region5: #{discriminator128_forward.7} parent=0 // pred_fallthru
    _
  // Predicated region
  $region6: #{discriminator128_forward.7} parent=0 // pred_check
    _
  $region7: #{discriminator128_forward.7} parent=0 // pred_check_branch
    %13 = sbr.rel (0) target = $region9
  $region8: #{discriminator128_forward.7} parent=0 // pred_region
    _
  $region9: #{discriminator128_forward.7} parent=0 // pred_fallthru
    _
  // Predicated region
  $region10: #{discriminator128_forward.7} parent=0 // pred_check
    _
  $region11: #{discriminator128_forward.7} parent=0 // pred_check_branch
    %15 = sbr.rel (0) target = $region13
  $region12: #{discriminator128_forward.7} parent=0 // pred_region
    _
  $region13: #{discriminator128_forward.7} parent=0 // pred_fallthru
    _
  %v16 = vld [vmem:[%s0] sm:$0xf]
  %v17 = vld [vmem:[%s0 + $0x4] sm:$0xf]
  %v18 = vld [vmem:[%s0 + $0x8] sm:$0xf]
  %v19 = vld [vmem:[%s0 + $0xc] sm:$0xf]
  %v20 = vld [vmem:[%s0 + $0x10] sm:$0xf]
  %v21 = vld [vmem:[%s0 + $0x14] sm:$0xf]
  %v22 = vld [vmem:[%s0 + $0x18] sm:$0xf]
  %v23 = vld [vmem:[%s0 + $0x1c] sm:$0xf]
  %v24 = vld [vmem:[%s0 + $0x20] sm:$0xf]
  %v25 = vld [vmem:[%s0 + $0x24] sm:$0xf]
  %v26 = vld [vmem:[%s0 + $0x28] sm:$0xf]
  %v27 = vld [vmem:[%s0 + $0x2c] sm:$0xf]
  %v28 = vld [vmem:[%s0 + $0x30] sm:$0xf]
  %v29 = vld [vmem:[%s0 + $0x34] sm:$0xf]
  %v30 = vld [vmem:[%s0 + $0x38] sm:$0xf]
  %v31 = vld [vmem:[%s0 + $0x3c] sm:$0xf]
  %v32 = vunpack.c.l.bf16 %v16
  %v33 = vunpack.c.l.bf16 %v17
  %v34 = vunpack.c.l.bf16 %v18
  %v35 = vunpack.c.l.bf16 %v19
  %v36 = vunpack.c.l.bf16 %v20
  %v37 = vunpack.c.l.bf16 %v21
  %v38 = vunpack.c.l.bf16 %v22
  %v39 = vunpack.c.l.bf16 %v23
  %v40 = vunpack.c.l.bf16 %v24
  %v41 = vunpack.c.l.bf16 %v25
  %v42 = vunpack.c.l.bf16 %v26
  %v43 = vunpack.c.l.bf16 %v27
  %v44 = vunpack.c.l.bf16 %v28
  %v45 = vunpack.c.l.bf16 %v29
  %v46 = vunpack.c.l.bf16 %v30
  %v47 = vunpack.c.l.bf16 %v31
  %vm48 = vcmp.ge.f32.partialorder %v32, 0.0
  %vm49 = vcmp.ge.f32.partialorder %v33, 0.0
  %vm50 = vcmp.ge.f32.partialorder %v34, 0.0
  %vm51 = vcmp.ge.f32.partialorder %v35, 0.0
  %vm52 = vcmp.ge.f32.partialorder %v36, 0.0
  %vm53 = vcmp.ge.f32.partialorder %v37, 0.0
  %vm54 = vcmp.ge.f32.partialorder %v38, 0.0
  %vm55 = vcmp.ge.f32.partialorder %v39, 0.0
  %vm56 = vcmp.ge.f32.partialorder %v40, 0.0
  %vm57 = vcmp.ge.f32.partialorder %v41, 0.0
  %vm58 = vcmp.ge.f32.partialorder %v42, 0.0
  %vm59 = vcmp.ge.f32.partialorder %v43, 0.0
  %vm60 = vcmp.ge.f32.partialorder %v44, 0.0
  %vm61 = vcmp.ge.f32.partialorder %v45, 0.0
  %vm62 = vcmp.ge.f32.partialorder %v46, 0.0
  %vm63 = vcmp.ge.f32.partialorder %v47, 0.0
  %v64 = vmul.f32 %v32, 0.20019531
  %v65 = vmul.f32 %v33, 0.20019531
  %v66 = vmul.f32 %v34, 0.20019531
  %v67 = vmul.f32 %v35, 0.20019531
  %v68 = vmul.f32 %v36, 0.20019531
  %v69 = vmul.f32 %v37, 0.20019531
  %v70 = vmul.f32 %v38, 0.20019531
  %v71 = vmul.f32 %v39, 0.20019531
  %v72 = vmul.f32 %v40, 0.20019531
  %v73 = vmul.f32 %v41, 0.20019531
  %v74 = vmul.f32 %v42, 0.20019531
  %v75 = vmul.f32 %v43, 0.20019531
  %v76 = vmul.f32 %v44, 0.20019531
  %v77 = vmul.f32 %v45, 0.20019531
  %v78 = vmul.f32 %v46, 0.20019531
  %v79 = vmul.f32 %v47, 0.20019531
  %v80 = vpack.c.bf16 %v64, %v64
  %v81 = vpack.c.bf16 %v65, %v65
  %v82 = vpack.c.bf16 %v66, %v66
  %v83 = vpack.c.bf16 %v67, %v67
  %v84 = vpack.c.bf16 %v68, %v68
  %v85 = vpack.c.bf16 %v69, %v69
  %v86 = vpack.c.bf16 %v70, %v70
  %v87 = vpack.c.bf16 %v71, %v71
  %v88 = vpack.c.bf16 %v72, %v72
  %v89 = vpack.c.bf16 %v73, %v73
  %v90 = vpack.c.bf16 %v74, %v74
  %v91 = vpack.c.bf16 %v75, %v75
  %v92 = vpack.c.bf16 %v76, %v76
  %v93 = vpack.c.bf16 %v77, %v77
  %v94 = vpack.c.bf16 %v78, %v78
  %v95 = vpack.c.bf16 %v79, %v79
  %vm96 = vmpackc.low %vm48, %vm48
  %vm97 = vmpackc.low %vm49, %vm49
  %vm98 = vmpackc.low %vm50, %vm50
  %vm99 = vmpackc.low %vm51, %vm51
  %vm100 = vmpackc.low %vm52, %vm52
  %vm101 = vmpackc.low %vm53, %vm53
  %vm102 = vmpackc.low %vm54, %vm54
  %vm103 = vmpackc.low %vm55, %vm55
  %vm104 = vmpackc.low %vm56, %vm56
  %vm105 = vmpackc.low %vm57, %vm57
  %vm106 = vmpackc.low %vm58, %vm58
  %vm107 = vmpackc.low %vm59, %vm59
  %vm108 = vmpackc.low %vm60, %vm60
  %vm109 = vmpackc.low %vm61, %vm61
  %vm110 = vmpackc.low %vm62, %vm62
  %vm111 = vmpackc.low %vm63, %vm63
  %v112 = vsel %vm96, %v16, %v80
  %v113 = vsel %vm97, %v17, %v81
  %v114 = vsel %vm98, %v18, %v82
  %v115 = vsel %vm99, %v19, %v83
  %v116 = vsel %vm100, %v20, %v84
  %v117 = vsel %vm101, %v21, %v85
  %v118 = vsel %vm102, %v22, %v86
  %v119 = vsel %vm103, %v23, %v87
  %v120 = vsel %vm104, %v24, %v88
  %v121 = vsel %vm105, %v25, %v89
  %v122 = vsel %vm106, %v26, %v90
  %v123 = vsel %vm107, %v27, %v91
  %v124 = vsel %vm108, %v28, %v92
  %v125 = vsel %vm109, %v29, %v93
  %v126 = vsel %vm110, %v30, %v94
  %v127 = vsel %vm111, %v31, %v95
  %v128 = vld [vmem:[%s1] sm:$0xf]
  %v129 = vld [vmem:[%s1 + $0x4] sm:$0xf]
  %v130 = vld [vmem:[%s1 + $0x8] sm:$0xf]
  %v131 = vld [vmem:[%s1 + $0xc] sm:$0xf]
  %v132 = vld [vmem:[%s1 + $0x10] sm:$0xf]
  %v133 = vld [vmem:[%s1 + $0x14] sm:$0xf]
  %v134 = vld [vmem:[%s1 + $0x18] sm:$0xf]
  %v135 = vld [vmem:[%s1 + $0x1c] sm:$0xf]
  %v136 = vld [vmem:[%s1 + $0x20] sm:$0xf]
  %v137 = vld [vmem:[%s1 + $0x24] sm:$0xf]
  %v138 = vld [vmem:[%s1 + $0x28] sm:$0xf]
  %v139 = vld [vmem:[%s1 + $0x2c] sm:$0xf]
  %v140 = vld [vmem:[%s1 + $0x30] sm:$0xf]
  %v141 = vld [vmem:[%s1 + $0x34] sm:$0xf]
  %v142 = vld [vmem:[%s1 + $0x38] sm:$0xf]
  %v143 = vld [vmem:[%s1 + $0x3c] sm:$0xf]
  %v144 = vld [vmem:[%s2] sm:$0x1]
  %v146 = vperm.slane %v144, 0
  %v164 = vunpack.c.l.b16 %v112
  %v165 = vunpack.c.l.b16 %v113
  %v166 = vunpack.c.l.b16 %v114
  %v167 = vunpack.c.l.b16 %v115
  %v168 = vunpack.c.l.b16 %v116
  %v169 = vunpack.c.l.b16 %v117
  %v170 = vunpack.c.l.b16 %v118
  %v171 = vunpack.c.l.b16 %v119
  %v172 = vunpack.c.l.b16 %v120
  %v173 = vunpack.c.l.b16 %v121
  %v174 = vunpack.c.l.b16 %v122
  %v175 = vunpack.c.l.b16 %v123
  %v176 = vunpack.c.l.b16 %v124
  %v177 = vunpack.c.l.b16 %v125
  %v178 = vunpack.c.l.b16 %v126
  %v179 = vunpack.c.l.b16 %v127
  %v180 = vpack.c.b16 %v165, %v164
  %v181 = vpack.c.b16 %v167, %v166
  %v182 = vpack.c.b16 %v169, %v168
  %v183 = vpack.c.b16 %v171, %v170
  %v184 = vpack.c.b16 %v173, %v172
  %v185 = vpack.c.b16 %v175, %v174
  %v186 = vpack.c.b16 %v177, %v176
  %v187 = vpack.c.b16 %v179, %v178
  %v212 = vunpack.c.l.b16 %v128
  %v213 = vunpack.c.l.b16 %v129
  %v214 = vunpack.c.l.b16 %v130
  %v215 = vunpack.c.l.b16 %v131
  %v216 = vunpack.c.l.b16 %v132
  %v217 = vunpack.c.l.b16 %v133
  %v218 = vunpack.c.l.b16 %v134
  %v219 = vunpack.c.l.b16 %v135
  %v220 = vunpack.c.l.b16 %v136
  %v221 = vunpack.c.l.b16 %v137
  %v222 = vunpack.c.l.b16 %v138
  %v223 = vunpack.c.l.b16 %v139
  %v224 = vunpack.c.l.b16 %v140
  %v225 = vunpack.c.l.b16 %v141
  %v226 = vunpack.c.l.b16 %v142
  %v227 = vunpack.c.l.b16 %v143
  %v228 = vpack.c.b16 %v213, %v212
  %v229 = vpack.c.b16 %v215, %v214
  %v230 = vpack.c.b16 %v217, %v216
  %v231 = vpack.c.b16 %v219, %v218
  %v232 = vpack.c.b16 %v221, %v220
  %v233 = vpack.c.b16 %v223, %v222
  %v234 = vpack.c.b16 %v225, %v224
  %v235 = vpack.c.b16 %v227, %v226
  %244 = vmatpush.bf16.msra.mxu0 %v235
  %245 = vmatpush.bf16.msra.mxu0 %v234
  %246 = vmatpush.bf16.msra.mxu0 %v233
  %247 = vmatpush.bf16.msra.mxu0 %v232
  %248 = vmatpush.bf16.msra.mxu0 %v231
  %249 = vmatpush.bf16.msra.mxu0 %v230
  %250 = vmatpush.bf16.msra.mxu0 %v229
  %251 = vmatpush.bf16.msra.mxu0 %v228
  %252 = vmatmul.bf16.gmra.mxu0 %v180
  %v253 = vpop.f32.mrf.mxu0
  %v254 = vadd.f32 %v146, %v253
  %v255 = vpop.f32.mrf.mxu0
  %v256 = vadd.f32 %v146, %v255
  %257 = vmatmul.bf16.gmra.mxu0 %v181
  %v258 = vpop.f32.mrf.mxu0
  %v259 = vadd.f32 %v146, %v258
  %v260 = vpop.f32.mrf.mxu0
  %v261 = vadd.f32 %v146, %v260
  %262 = vmatmul.bf16.gmra.mxu0 %v182
  %v263 = vpop.f32.mrf.mxu0
  %v264 = vadd.f32 %v146, %v263
  %v265 = vpop.f32.mrf.mxu0
  %v266 = vadd.f32 %v146, %v265
  %267 = vmatmul.bf16.gmra.mxu0 %v183
  %v268 = vpop.f32.mrf.mxu0
  %v269 = vadd.f32 %v146, %v268
  %v270 = vpop.f32.mrf.mxu0
  %v271 = vadd.f32 %v146, %v270
  %272 = vmatmul.bf16.gmra.mxu0 %v184
  %v273 = vpop.f32.mrf.mxu0
  %v274 = vadd.f32 %v146, %v273
  %v275 = vpop.f32.mrf.mxu0
  %v276 = vadd.f32 %v146, %v275
  %277 = vmatmul.bf16.gmra.mxu0 %v185
  %v278 = vpop.f32.mrf.mxu0
  %v279 = vadd.f32 %v146, %v278
  %v280 = vpop.f32.mrf.mxu0
  %v281 = vadd.f32 %v146, %v280
  %282 = vmatmul.bf16.gmra.mxu0 %v186
  %v283 = vpop.f32.mrf.mxu0
  %v284 = vadd.f32 %v146, %v283
  %v285 = vpop.f32.mrf.mxu0
  %v286 = vadd.f32 %v146, %v285
  %287 = vmatmul.bf16.gmra.mxu0 %v187
  %v288 = vpop.f32.mrf.mxu0
  %v289 = vadd.f32 %v146, %v288
  %v290 = vpop.f32.mrf.mxu0
  %v291 = vadd.f32 %v146, %v290
  %292 = vdwg.mxu0
  %v293 = vpack.c.bf16 %v254, %v254
  %v294 = vpack.c.bf16 %v256, %v256
  %v295 = vpack.c.bf16 %v259, %v259
  %v296 = vpack.c.bf16 %v261, %v261
  %v297 = vpack.c.bf16 %v264, %v264
  %v298 = vpack.c.bf16 %v266, %v266
  %v299 = vpack.c.bf16 %v269, %v269
  %v300 = vpack.c.bf16 %v271, %v271
  %v301 = vpack.c.bf16 %v274, %v274
  %v302 = vpack.c.bf16 %v276, %v276
  %v303 = vpack.c.bf16 %v279, %v279
  %v304 = vpack.c.bf16 %v281, %v281
  %v305 = vpack.c.bf16 %v284, %v284
  %v306 = vpack.c.bf16 %v286, %v286
  %v307 = vpack.c.bf16 %v289, %v289
  %v308 = vpack.c.bf16 %v291, %v291
  %309 = vst [vmem:[%s3] sm:$0xf] %v293
  %310 = vst [vmem:[%s3 + $0x4] sm:$0xf] %v294
  %311 = vst [vmem:[%s3 + $0x8] sm:$0xf] %v295
  %312 = vst [vmem:[%s3 + $0xc] sm:$0xf] %v296
  %313 = vst [vmem:[%s3 + $0x10] sm:$0xf] %v297
  %314 = vst [vmem:[%s3 + $0x14] sm:$0xf] %v298
  %315 = vst [vmem:[%s3 + $0x18] sm:$0xf] %v299
  %316 = vst [vmem:[%s3 + $0x1c] sm:$0xf] %v300
  %317 = vst [vmem:[%s3 + $0x20] sm:$0xf] %v301
  %318 = vst [vmem:[%s3 + $0x24] sm:$0xf] %v302
  %319 = vst [vmem:[%s3 + $0x28] sm:$0xf] %v303
  %320 = vst [vmem:[%s3 + $0x2c] sm:$0xf] %v304
  %321 = vst [vmem:[%s3 + $0x30] sm:$0xf] %v305
  %322 = vst [vmem:[%s3 + $0x34] sm:$0xf] %v306
  %323 = vst [vmem:[%s3 + $0x38] sm:$0xf] %v307
  %324 = vst [vmem:[%s3 + $0x3c] sm:$0xf] %v308
  %s325 = smul.u32 0, 128
  %v326 = vlaneseq
  %v327 = vshrl.u32 %v326, 7
  %v328 = vadd.s32 %v327, 8
  %v329 = vadd.s32 %v327, 16
  %v330 = vadd.s32 %v327, 24
  %v331 = vadd.s32 %v327, 32
  %v332 = vadd.s32 %v327, 40
  %v333 = vadd.s32 %v327, 48
  %v334 = vadd.s32 %v327, 56
  %v335 = vadd.s32 %v327, 64
  %v336 = vadd.s32 %v327, 72
  %v337 = vadd.s32 %v327, 80
  %v338 = vadd.s32 %v327, 88
  %v339 = vadd.s32 %v327, 96
  %v340 = vadd.s32 %v327, 104
  %v341 = vadd.s32 %v327, 112
  %v342 = vadd.s32 %v327, 120
  %v343 = vstv %s325
  %v344 = vadd.s32 %v343, %v327
  %v345 = vadd.s32 %v343, %v328
  %v346 = vadd.s32 %v343, %v329
  %v347 = vadd.s32 %v343, %v330
  %v348 = vadd.s32 %v343, %v331
  %v349 = vadd.s32 %v343, %v332
  %v350 = vadd.s32 %v343, %v333
  %v351 = vadd.s32 %v343, %v334
  %v352 = vadd.s32 %v343, %v335
  %v353 = vadd.s32 %v343, %v336
  %v354 = vadd.s32 %v343, %v337
  %v355 = vadd.s32 %v343, %v338
  %v356 = vadd.s32 %v343, %v339
  %v357 = vadd.s32 %v343, %v340
  %v358 = vadd.s32 %v343, %v341
  %v359 = vadd.s32 %v343, %v342
  %vm360 = vcmp.lt.s32.totalorder %v344, 128
  %vm361 = vcmp.lt.s32.totalorder %v345, 128
  %vm362 = vcmp.lt.s32.totalorder %v346, 128
  %vm363 = vcmp.lt.s32.totalorder %v347, 128
  %vm364 = vcmp.lt.s32.totalorder %v348, 128
  %vm365 = vcmp.lt.s32.totalorder %v349, 128
  %vm366 = vcmp.lt.s32.totalorder %v350, 128
  %vm367 = vcmp.lt.s32.totalorder %v351, 128
  %vm368 = vcmp.lt.s32.totalorder %v352, 128
  %vm369 = vcmp.lt.s32.totalorder %v353, 128
  %vm370 = vcmp.lt.s32.totalorder %v354, 128
  %vm371 = vcmp.lt.s32.totalorder %v355, 128
  %vm372 = vcmp.lt.s32.totalorder %v356, 128
  %vm373 = vcmp.lt.s32.totalorder %v357, 128
  %vm374 = vcmp.lt.s32.totalorder %v358, 128
  %vm375 = vcmp.lt.s32.totalorder %v359, 128
  %v376 = vsel %vm360, %v254, 0.0
  %v377 = vsel %vm361, %v256, 0.0
  %v378 = vsel %vm362, %v259, 0.0
  %v379 = vsel %vm363, %v261, 0.0
  %v380 = vsel %vm364, %v264, 0.0
  %v381 = vsel %vm365, %v266, 0.0
  %v382 = vsel %vm366, %v269, 0.0
  %v383 = vsel %vm367, %v271, 0.0
  %v384 = vsel %vm368, %v274, 0.0
  %v385 = vsel %vm369, %v276, 0.0
  %v386 = vsel %vm370, %v279, 0.0
  %v387 = vsel %vm371, %v281, 0.0
  %v388 = vsel %vm372, %v284, 0.0
  %v389 = vsel %vm373, %v286, 0.0
  %v390 = vsel %vm374, %v289, 0.0
  %v391 = vsel %vm375, %v291, 0.0
  %v392 = vadd.f32 %v376, %v377
  %v393 = vadd.f32 %v392, %v378
  %v394 = vadd.f32 %v393, %v379
  %v395 = vadd.f32 %v394, %v380
  %v396 = vadd.f32 %v395, %v381
  %v397 = vadd.f32 %v396, %v382
  %v398 = vadd.f32 %v397, %v383
  %v399 = vadd.f32 %v398, %v384
  %v400 = vadd.f32 %v399, %v385
  %v401 = vadd.f32 %v400, %v386
  %v402 = vadd.f32 %v401, %v387
  %v403 = vadd.f32 %v402, %v388
  %v404 = vadd.f32 %v403, %v389
  %v405 = vadd.f32 %v404, %v390
  %v406 = vadd.f32 %v405, %v391
  %v407 = vrot.slane %v406, 4
  %v408 = vadd.f32 %v406, %v407
  %v409 = vrot.slane %v408, 2
  %v410 = vadd.f32 %v408, %v409
  %v411 = vrot.slane %v410, 1
  %v412 = vadd.f32 %v410, %v411
  %v413 = vmul.f32 %v376, %v376
  %v414 = vmul.f32 %v377, %v377
  %v415 = vmul.f32 %v378, %v378
  %v416 = vmul.f32 %v379, %v379
  %v417 = vmul.f32 %v380, %v380
  %v418 = vmul.f32 %v381, %v381
  %v419 = vmul.f32 %v382, %v382
  %v420 = vmul.f32 %v383, %v383
  %v421 = vmul.f32 %v384, %v384
  %v422 = vmul.f32 %v385, %v385
  %v423 = vmul.f32 %v386, %v386
  %v424 = vmul.f32 %v387, %v387
  %v425 = vmul.f32 %v388, %v388
  %v426 = vmul.f32 %v389, %v389
  %v427 = vmul.f32 %v390, %v390
  %v428 = vmul.f32 %v391, %v391
  %v429 = vadd.f32 %v413, %v414
  %v430 = vadd.f32 %v429, %v415
  %v431 = vadd.f32 %v430, %v416
  %v432 = vadd.f32 %v431, %v417
  %v433 = vadd.f32 %v432, %v418
  %v434 = vadd.f32 %v433, %v419
  %v435 = vadd.f32 %v434, %v420
  %v436 = vadd.f32 %v435, %v421
  %v437 = vadd.f32 %v436, %v422
  %v438 = vadd.f32 %v437, %v423
  %v439 = vadd.f32 %v438, %v424
  %v440 = vadd.f32 %v439, %v425
  %v441 = vadd.f32 %v440, %v426
  %v442 = vadd.f32 %v441, %v427
  %v443 = vadd.f32 %v442, %v428
  %v444 = vrot.slane %v443, 4
  %v445 = vadd.f32 %v443, %v444
  %v446 = vrot.slane %v445, 2
  %v447 = vadd.f32 %v445, %v446
  %v448 = vrot.slane %v447, 1
  %v449 = vadd.f32 %v447, %v448
  %vm450 = vcmask 1040384
  %v451 = vsel %vm450, %v412, %v449
  %p452 = scmp.eq.s32.totalorder 0, 0
  // Predicated region
  $region14: #{discriminator128_forward.7} parent=0 // pred_check
    %p453 = pneg %p452
  $region15: #{discriminator128_forward.7} parent=0 // pred_check_branch
    %455 = sbr.rel (%p453) target = $region17
  $region16: #{discriminator128_forward.7} parent=0 // pred_region
    %456 = vst [vmem:[%s4] sm:$0x3] 0.0
  $region17: #{discriminator128_forward.7} parent=0 // pred_fallthru
    _
  %v457 = vld [vmem:[%s4] sm:$0x3]
  %v458 = vadd.f32 %v457, %v451
  %459 = vst [vmem:[%s4] sm:$0x3] %v458
  // Predicated region
  $region18: #{discriminator128_forward.7} parent=0 // pred_check
    _
  $region19: #{discriminator128_forward.7} parent=0 // pred_check_branch
    %461 = sbr.rel (0) target = $region21
  $region20: #{discriminator128_forward.7} parent=0 // pred_region
    _
  $region21: #{discriminator128_forward.7} parent=0 // pred_fallthru
    _
  // Predicated region
  $region22: #{discriminator128_forward.7} parent=0 // pred_check
    _
  $region23: #{discriminator128_forward.7} parent=0 // pred_check_branch
    %463 = sbr.rel (0) target = $region25
  $region24: #{discriminator128_forward.7} parent=0 // pred_region
    _
  $region25: #{discriminator128_forward.7} parent=0 // pred_fallthru
    _
  // Predicated region
  $region26: #{discriminator128_forward.7} parent=0 // pred_check
    _
  $region27: #{discriminator128_forward.7} parent=0 // pred_check_branch
    %465 = sbr.rel (0) target = $region29
  $region28: #{discriminator128_forward.7} parent=0 // pred_region
    _
  $region29: #{discriminator128_forward.7} parent=0 // pred_fallthru
    _
  // Predicated region
  $region30: #{discriminator128_forward.7} parent=0 // pred_check
    _
  $region31: #{discriminator128_forward.7} parent=0 // pred_check_branch
    %467 = sbr.rel (0) target = $region33
  $region32: #{discriminator128_forward.7} parent=0 // pred_region
    _
  $region33: #{discriminator128_forward.7} parent=0 // pred_fallthru
    _

// kernel: discriminator128_forward.8
$region0: #{discriminator128_forward.8}
  #allocation0 [shape = 'u32[]', space=smem, size = 0x4, offset = 0x4, fixed_abs, tag = 'smem constant byte address 0x4 - core index']
  #allocation1 [shape = 'u32[72,128]{1,0:T(1,128)}', space=vmem, size = 0x9000, scoped, tag = 'internal scratch']
  %s0 = inlined_call_operand.vmem [shape: bf16[128,128], index: 0, kind: input, shape index: {}]
  %s1 = inlined_call_operand.vmem [shape: f32[2,128], index: 1, kind: input, shape index: {}]
  %s2 = inlined_call_operand.vmem [shape: f32[1,128], index: 2, kind: input, shape index: {}]
  %s3 = inlined_call_operand.vmem [shape: f32[1,128], index: 3, kind: input, shape index: {}]
  %s4 = inlined_call_operand.vmem [shape: bf16[128,128], index: 4, kind: output, shape index: {}]
  %s5 = sld [smem:[#allocation0]]
  $region26: #{discriminator128_forward.8} parent=0
    _
  %s7 = ssub.s32 1, %s5
  %s8 = scalar_select 0, %s7, %s5
  // Predicated region
  $region2: #{discriminator128_forward.8} parent=0 // pred_check
    _
  $region3: #{discriminator128_forward.8} parent=0 // pred_check_branch
    %10 = sbr.rel (0) target = $region5
  $region4: #{discriminator128_forward.8} parent=0 // pred_region
    _
  $region5: #{discriminator128_forward.8} parent=0 // pred_fallthru
    _
  // Predicated region
  $region6: #{discriminator128_forward.8} parent=0 // pred_check
    _
  $region7: #{discriminator128_forward.8} parent=0 // pred_check_branch
    %12 = sbr.rel (0) target = $region9
  $region8: #{discriminator128_forward.8} parent=0 // pred_region
    _
  $region9: #{discriminator128_forward.8} parent=0 // pred_fallthru
    _
  // Predicated region
  $region10: #{discriminator128_forward.8} parent=0 // pred_check
    _
  $region11: #{discriminator128_forward.8} parent=0 // pred_check_branch
    %14 = sbr.rel (0) target = $region13
  $region12: #{discriminator128_forward.8} parent=0 // pred_region
    _
  $region13: #{discriminator128_forward.8} parent=0 // pred_fallthru
    _
  // Predicated region
  $region14: #{discriminator128_forward.8} parent=0 // pred_check
    _
  $region15: #{discriminator128_forward.8} parent=0 // pred_check_branch
    %16 = sbr.rel (0) target = $region17
  $region16: #{discriminator128_forward.8} parent=0 // pred_region
    _
  $region17: #{discriminator128_forward.8} parent=0 // pred_fallthru
    _
  %v17 = vld [vmem:[%s1] sm:$0x3]
  %v18 = vmul.f32 %v17, 0.0078125
  %v19 = vmul.f32 %v18, %v18
  %v21 = vrot.slane %v19, 7
  %v23 = vsub.f32 %v18, %v21
  %v24 = vadd.f32 %v23, 1e-05
  %v25 = vrsqrt.pop %v24
  %v26 = vmul.f32 %v25, %v24
  %v27 = vmul.f32 %v26, %v25
  %v28 = vmul.f32 0.5, %v27
  %v29 = vsub.f32 1.5, %v28
  %v30 = vmul.f32 %v25, %v29
  %vm31 = vweird.f32 %v24
  %vm32 = vweird.f32 %v25
  %vm33 = vmor %vm31, %vm32
  %v34 = vsel %vm33, %v25, %v30
  %v35 = vld [vmem:[%s2] sm:$0x1]
  %v37 = vperm.slane %v35, 0
  %v39 = vmul.f32 %v34, %v37
  %v40 = vld [vmem:[%s0] sm:$0xf]
  %v41 = vld [vmem:[%s0 + $0x4] sm:$0xf]
  %v42 = vld [vmem:[%s0 + $0x8] sm:$0xf]
  %v43 = vld [vmem:[%s0 + $0xc] sm:$0xf]
  %v44 = vld [vmem:[%s0 + $0x10] sm:$0xf]
  %v45 = vld [vmem:[%s0 + $0x14] sm:$0xf]
  %v46 = vld [vmem:[%s0 + $0x18] sm:$0xf]
  %v47 = vld [vmem:[%s0 + $0x1c] sm:$0xf]
  %v48 = vld [vmem:[%s0 + $0x20] sm:$0xf]
  %v49 = vld [vmem:[%s0 + $0x24] sm:$0xf]
  %v50 = vld [vmem:[%s0 + $0x28] sm:$0xf]
  %v51 = vld [vmem:[%s0 + $0x2c] sm:$0xf]
  %v52 = vld [vmem:[%s0 + $0x30] sm:$0xf]
  %v53 = vld [vmem:[%s0 + $0x34] sm:$0xf]
  %v54 = vld [vmem:[%s0 + $0x38] sm:$0xf]
  %v55 = vld [vmem:[%s0 + $0x3c] sm:$0xf]
  %v56 = vunpack.c.l.bf16 %v40
  %v57 = vunpack.c.l.bf16 %v41
  %v58 = vunpack.c.l.bf16 %v42
  %v59 = vunpack.c.l.bf16 %v43
  %v60 = vunpack.c.l.bf16 %v44
  %v61 = vunpack.c.l.bf16 %v45
  %v62 = vunpack.c.l.bf16 %v46
  %v63 = vunpack.c.l.bf16 %v47
  %v64 = vunpack.c.l.bf16 %v48
  %v65 = vunpack.c.l.bf16 %v49
  %v66 = vunpack.c.l.bf16 %v50
  %v67 = vunpack.c.l.bf16 %v51
  %v68 = vunpack.c.l.bf16 %v52
  %v69 = vunpack.c.l.bf16 %v53
  %v70 = vunpack.c.l.bf16 %v54
  %v71 = vunpack.c.l.bf16 %v55
  %v72 = vperm.slane %v18, 0
  %v73 = vsub.f32 %v56, %v72
  %v74 = vsub.f32 %v57, %v72
  %v75 = vsub.f32 %v58, %v72
  %v76 = vsub.f32 %v59, %v72
  %v77 = vsub.f32 %v60, %v72
  %v78 = vsub.f32 %v61, %v72
  %v79 = vsub.f32 %v62, %v72
  %v80 = vsub.f32 %v63, %v72
  %v81 = vsub.f32 %v64, %v72
  %v82 = vsub.f32 %v65, %v72
  %v83 = vsub.f32 %v66, %v72
  %v84 = vsub.f32 %v67, %v72
  %v85 = vsub.f32 %v68, %v72
  %v86 = vsub.f32 %v69, %v72
  %v87 = vsub.f32 %v70, %v72
  %v88 = vsub.f32 %v71, %v72
  %v89 = vperm.slane %v39, 1
  %v90 = vmul.f32 %v73, %v89
  %v91 = vmul.f32 %v74, %v89
  %v92 = vmul.f32 %v75, %v89
  %v93 = vmul.f32 %v76, %v89
  %v94 = vmul.f32 %v77, %v89
  %v95 = vmul.f32 %v78, %v89
  %v96 = vmul.f32 %v79, %v89
  %v97 = vmul.f32 %v80, %v89
  %v98 = vmul.f32 %v81, %v89
  %v99 = vmul.f32 %v82, %v89
  %v100 = vmul.f32 %v83, %v89
  %v101 = vmul.f32 %v84, %v89
  %v102 = vmul.f32 %v85, %v89
  %v103 = vmul.f32 %v86, %v89
  %v104 = vmul.f32 %v87, %v89
  %v105 = vmul.f32 %v88, %v89
  %v106 = vld [vmem:[%s3] sm:$0x1]
  %v108 = vperm.slane %v106, 0
  %v110 = vadd.f32 %v90, %v108
  %v111 = vadd.f32 %v91, %v108
  %v112 = vadd.f32 %v92, %v108
  %v113 = vadd.f32 %v93, %v108
  %v114 = vadd.f32 %v94, %v108
  %v115 = vadd.f32 %v95, %v108
  %v116 = vadd.f32 %v96, %v108
  %v117 = vadd.f32 %v97, %v108
  %v118 = vadd.f32 %v98, %v108
  %v119 = vadd.f32 %v99, %v108
  %v120 = vadd.f32 %v100, %v108
  %v121 = vadd.f32 %v101, %v108
  %v122 = vadd.f32 %v102, %v108
  %v123 = vadd.f32 %v103, %v108
  %v124 = vadd.f32 %v104, %v108
  %v125 = vadd.f32 %v105, %v108
  %v126 = vpack.c.bf16 %v110, %v110
  %v127 = vpack.c.bf16 %v111, %v111
  %v128 = vpack.c.bf16 %v112, %v112
  %v129 = vpack.c.bf16 %v113, %v113
  %v130 = vpack.c.bf16 %v114, %v114
  %v131 = vpack.c.bf16 %v115, %v115
  %v132 = vpack.c.bf16 %v116, %v116
  %v133 = vpack.c.bf16 %v117, %v117
  %v134 = vpack.c.bf16 %v118, %v118
  %v135 = vpack.c.bf16 %v119, %v119
  %v136 = vpack.c.bf16 %v120, %v120
  %v137 = vpack.c.bf16 %v121, %v121
  %v138 = vpack.c.bf16 %v122, %v122
  %v139 = vpack.c.bf16 %v123, %v123
  %v140 = vpack.c.bf16 %v124, %v124
  %v141 = vpack.c.bf16 %v125, %v125
  %142 = vst [vmem:[%s4] sm:$0xf] %v126
  %143 = vst [vmem:[%s4 + $0x4] sm:$0xf] %v127
  %144 = vst [vmem:[%s4 + $0x8] sm:$0xf] %v128
  %145 = vst [vmem:[%s4 + $0xc] sm:$0xf] %v129
  %146 = vst [vmem:[%s4 + $0x10] sm:$0xf] %v130
  %147 = vst [vmem:[%s4 + $0x14] sm:$0xf] %v131
  %148 = vst [vmem:[%s4 + $0x18] sm:$0xf] %v132
  %149 = vst [vmem:[%s4 + $0x1c] sm:$0xf] %v133
  %150 = vst [vmem:[%s4 + $0x20] sm:$0xf] %v134
  %151 = vst [vmem:[%s4 + $0x24] sm:$0xf] %v135
  %152 = vst [vmem:[%s4 + $0x28] sm:$0xf] %v136
  %153 = vst [vmem:[%s4 + $0x2c] sm:$0xf] %v137
  %154 = vst [vmem:[%s4 + $0x30] sm:$0xf] %v138
  %155 = vst [vmem:[%s4 + $0x34] sm:$0xf] %v139
  %156 = vst [vmem:[%s4 + $0x38] sm:$0xf] %v140
  %157 = vst [vmem:[%s4 + $0x3c] sm:$0xf] %v141
  // Predicated region
  $region18: #{discriminator128_forward.8} parent=0 // pred_check
    _
  $region19: #{discriminator128_forward.8} parent=0 // pred_check_branch
    %159 = sbr.rel (0) target = $region21
  $region20: #{discriminator128_forward.8} parent=0 // pred_region
    _
  $region21: #{discriminator128_forward.8} parent=0 // pred_fallthru
    _
  // Predicated region
  $region22: #{discriminator128_forward.8} parent=0 // pred_check
    _
  $region23: #{discriminator128_forward.8} parent=0 // pred_check_branch
    %161 = sbr.rel (0) target = $region25
  $region24: #{discriminator128_forward.8} parent=0 // pred_region
    _
  $region25: #{discriminator128_forward.8} parent=0 // pred_fallthru
    _

// kernel: discriminator128_forward.10
$region0: #{discriminator128_forward.10}
  #allocation0 [shape = 'u32[]', space=smem, size = 0x4, offset = 0x4, fixed_abs, tag = 'smem constant byte address 0x4 - core index']
  #allocation1 [shape = 'u32[72,128]{1,0:T(1,128)}', space=vmem, size = 0x9000, scoped, tag = 'internal scratch']
  %s0 = inlined_call_operand.vmem [shape: bf16[112,128], index: 0, kind: input, shape index: {}]
  %s1 = inlined_call_operand.vmem [shape: f32[2,128], index: 1, kind: input, shape index: {}]
  %s2 = inlined_call_operand.vmem [shape: f32[1,128], index: 2, kind: input, shape index: {}]
  %s3 = inlined_call_operand.vmem [shape: f32[1,128], index: 3, kind: input, shape index: {}]
  %s4 = inlined_call_operand.vmem [shape: bf16[112,128], index: 4, kind: output, shape index: {}]
  %s5 = sld [smem:[#allocation0]]
  $region26: #{discriminator128_forward.10} parent=0
    _
  %s7 = ssub.s32 1, %s5
  %s8 = scalar_select 0, %s7, %s5
  // Predicated region
  $region2: #{discriminator128_forward.10} parent=0 // pred_check
    _
  $region3: #{discriminator128_forward.10} parent=0 // pred_check_branch
    %10 = sbr.rel (0) target = $region5
  $region4: #{discriminator128_forward.10} parent=0 // pred_region
    _
  $region5: #{discriminator128_forward.10} parent=0 // pred_fallthru
    _
  // Predicated region
  $region6: #{discriminator128_forward.10} parent=0 // pred_check
    _
  $region7: #{discriminator128_forward.10} parent=0 // pred_check_branch
    %12 = sbr.rel (0) target = $region9
  $region8: #{discriminator128_forward.10} parent=0 // pred_region
    _
  $region9: #{discriminator128_forward.10} parent=0 // pred_fallthru
    _
  // Predicated region
  $region10: #{discriminator128_forward.10} parent=0 // pred_check
    _
  $region11: #{discriminator128_forward.10} parent=0 // pred_check_branch
    %14 = sbr.rel (0) target = $region13
  $region12: #{discriminator128_forward.10} parent=0 // pred_region
    _
  $region13: #{discriminator128_forward.10} parent=0 // pred_fallthru
    _
  // Predicated region
  $region14: #{discriminator128_forward.10} parent=0 // pred_check
    _
  $region15: #{discriminator128_forward.10} parent=0 // pred_check_branch
    %16 = sbr.rel (0) target = $region17
  $region16: #{discriminator128_forward.10} parent=0 // pred_region
    _
  $region17: #{discriminator128_forward.10} parent=0 // pred_fallthru
    _
  %v17 = vld [vmem:[%s1] sm:$0x3]
  %v18 = vmul.f32 %v17, 0.010204081
  %v19 = vmul.f32 %v18, %v18
  %v21 = vrot.slane %v19, 7
  %v23 = vsub.f32 %v18, %v21
  %v24 = vadd.f32 %v23, 1e-05
  %v25 = vrsqrt.pop %v24
  %v26 = vmul.f32 %v25, %v24
  %v27 = vmul.f32 %v26, %v25
  %v28 = vmul.f32 0.5, %v27
  %v29 = vsub.f32 1.5, %v28
  %v30 = vmul.f32 %v25, %v29
  %vm31 = vweird.f32 %v24
  %vm32 = vweird.f32 %v25
  %vm33 = vmor %vm31, %vm32
  %v34 = vsel %vm33, %v25, %v30
  %v35 = vld [vmem:[%s2] sm:$0x1]
  %v37 = vperm.slane %v35, 0
  %v39 = vmul.f32 %v34, %v37
  %v40 = vld [vmem:[%s0] sm:$0xf]
  %v41 = vld [vmem:[%s0 + $0x4] sm:$0xf]
  %v42 = vld [vmem:[%s0 + $0x8] sm:$0xf]
  %v43 = vld [vmem:[%s0 + $0xc] sm:$0xf]
  %v44 = vld [vmem:[%s0 + $0x10] sm:$0xf]
  %v45 = vld [vmem:[%s0 + $0x14] sm:$0xf]
  %v46 = vld [vmem:[%s0 + $0x18] sm:$0xf]
  %v47 = vld [vmem:[%s0 + $0x1c] sm:$0xf]
  %v48 = vld [vmem:[%s0 + $0x20] sm:$0xf]
  %v49 = vld [vmem:[%s0 + $0x24] sm:$0xf]
  %v50 = vld [vmem:[%s0 + $0x28] sm:$0xf]
  %v51 = vld [vmem:[%s0 + $0x2c] sm:$0xf]
  %v52 = vld [vmem:[%s0 + $0x30] sm:$0xf]
  %v53 = vld [vmem:[%s0 + $0x34] sm:$0xf]
  %v54 = vunpack.c.l.bf16 %v40
  %v55 = vunpack.c.l.bf16 %v41
  %v56 = vunpack.c.l.bf16 %v42
  %v57 = vunpack.c.l.bf16 %v43
  %v58 = vunpack.c.l.bf16 %v44
  %v59 = vunpack.c.l.bf16 %v45
  %v60 = vunpack.c.l.bf16 %v46
  %v61 = vunpack.c.l.bf16 %v47
  %v62 = vunpack.c.l.bf16 %v48
  %v63 = vunpack.c.l.bf16 %v49
  %v64 = vunpack.c.l.bf16 %v50
  %v65 = vunpack.c.l.bf16 %v51
  %v66 = vunpack.c.l.bf16 %v52
  %v67 = vunpack.c.l.bf16 %v53
  %v68 = vperm.slane %v18, 0
  %v69 = vsub.f32 %v54, %v68
  %v70 = vsub.f32 %v55, %v68
  %v71 = vsub.f32 %v56, %v68
  %v72 = vsub.f32 %v57, %v68
  %v73 = vsub.f32 %v58, %v68
  %v74 = vsub.f32 %v59, %v68
  %v75 = vsub.f32 %v60, %v68
  %v76 = vsub.f32 %v61, %v68
  %v77 = vsub.f32 %v62, %v68
  %v78 = vsub.f32 %v63, %v68
  %v79 = vsub.f32 %v64, %v68
  %v80 = vsub.f32 %v65, %v68
  %v81 = vsub.f32 %v66, %v68
  %v82 = vsub.f32 %v67, %v68
  %v83 = vperm.slane %v39, 1
  %v84 = vmul.f32 %v69, %v83
  %v85 = vmul.f32 %v70, %v83
  %v86 = vmul.f32 %v71, %v83
  %v87 = vmul.f32 %v72, %v83
  %v88 = vmul.f32 %v73, %v83
  %v89 = vmul.f32 %v74, %v83
  %v90 = vmul.f32 %v75, %v83
  %v91 = vmul.f32 %v76, %v83
  %v92 = vmul.f32 %v77, %v83
  %v93 = vmul.f32 %v78, %v83
  %v94 = vmul.f32 %v79, %v83
  %v95 = vmul.f32 %v80, %v83
  %v96 = vmul.f32 %v81, %v83
  %v97 = vmul.f32 %v82, %v83
  %v98 = vld [vmem:[%s3] sm:$0x1]
  %v100 = vperm.slane %v98, 0
  %v102 = vadd.f32 %v84, %v100
  %v103 = vadd.f32 %v85, %v100
  %v104 = vadd.f32 %v86, %v100
  %v105 = vadd.f32 %v87, %v100
  %v106 = vadd.f32 %v88, %v100
  %v107 = vadd.f32 %v89, %v100
  %v108 = vadd.f32 %v90, %v100
  %v109 = vadd.f32 %v91, %v100
  %v110 = vadd.f32 %v92, %v100
  %v111 = vadd.f32 %v93, %v100
  %v112 = vadd.f32 %v94, %v100
  %v113 = vadd.f32 %v95, %v100
  %v114 = vadd.f32 %v96, %v100
  %v115 = vadd.f32 %v97, %v100
  %v116 = vpack.c.bf16 %v102, %v102
  %v117 = vpack.c.bf16 %v103, %v103
  %v118 = vpack.c.bf16 %v104, %v104
  %v119 = vpack.c.bf16 %v105, %v105
  %v120 = vpack.c.bf16 %v106, %v106
  %v121 = vpack.c.bf16 %v107, %v107
  %v122 = vpack.c.bf16 %v108, %v108
  %v123 = vpack.c.bf16 %v109, %v109
  %v124 = vpack.c.bf16 %v110, %v110
  %v125 = vpack.c.bf16 %v111, %v111
  %v126 = vpack.c.bf16 %v112, %v112
  %v127 = vpack.c.bf16 %v113, %v113
  %v128 = vpack.c.bf16 %v114, %v114
  %v129 = vpack.c.bf16 %v115, %v115
  %130 = vst [vmem:[%s4] sm:$0xf] %v116
  %131 = vst [vmem:[%s4 + $0x4] sm:$0xf] %v117
  %132 = vst [vmem:[%s4 + $0x8] sm:$0xf] %v118
  %133 = vst [vmem:[%s4 + $0xc] sm:$0xf] %v119
  %134 = vst [vmem:[%s4 + $0x10] sm:$0xf] %v120
  %135 = vst [vmem:[%s4 + $0x14] sm:$0xf] %v121
  %136 = vst [vmem:[%s4 + $0x18] sm:$0xf] %v122
  %137 = vst [vmem:[%s4 + $0x1c] sm:$0xf] %v123
  %138 = vst [vmem:[%s4 + $0x20] sm:$0xf] %v124
  %139 = vst [vmem:[%s4 + $0x24] sm:$0xf] %v125
  %140 = vst [vmem:[%s4 + $0x28] sm:$0xf] %v126
  %141 = vst [vmem:[%s4 + $0x2c] sm:$0xf] %v127
  %142 = vst [vmem:[%s4 + $0x30] sm:$0xf] %v128
  %143 = vst [vmem:[%s4 + $0x34] sm:$0xf] %v129
  // Predicated region
  $region18: #{discriminator128_forward.10} parent=0 // pred_check
    _
  $region19: #{discriminator128_forward.10} parent=0 // pred_check_branch
    %145 = sbr.rel (0) target = $region21
  $region20: #{discriminator128_forward.10} parent=0 // pred_region
    _
  $region21: #{discriminator128_forward.10} parent=0 // pred_fallthru
    _
  // Predicated region
  $region22: #{discriminator128_forward.10} parent=0 // pred_check
    _
  $region23: #{discriminator128_forward.10} parent=0 // pred_check_branch
    %147 = sbr.rel (0) target = $region25
  $region24: #{discriminator128_forward.10} parent=0 // pred_region
    _
  $region25: #{discriminator128_forward.10} parent=0 // pred_fallthru
    _

// kernel: discriminator128_forward.9
$region0: #{discriminator128_forward.9}
  #allocation0 [shape = 'u32[]', space=smem, size = 0x4, offset = 0x4, fixed_abs, tag = 'smem constant byte address 0x4 - core index']
  #allocation1 [shape = 'u32[72,128]{1,0:T(1,128)}', space=vmem, size = 0x9000, scoped, tag = 'internal scratch']
  %s0 = inlined_call_operand.vmem [shape: bf16[112,256], index: 0, kind: input, shape index: {}]
  %s1 = inlined_call_operand.vmem [shape: bf16[256,128], index: 1, kind: input, shape index: {}]
  %s2 = inlined_call_operand.vmem [shape: f32[1,128], index: 2, kind: input, shape index: {}]
  %s3 = inlined_call_operand.vmem [shape: bf16[112,128], index: 3, kind: output, shape index: {0}]
  %s4 = inlined_call_operand.vmem [shape: f32[2,128], index: 4, kind: output, shape index: {1}]
  %5 = xla_tuple %s3, %s4
  %s6 = sld [smem:[#allocation0]]
  $region34: #{discriminator128_forward.9} parent=0
    _
  %s8 = ssub.s32 1, %s6
  %s9 = scalar_select 0, %s8, %s6
  // Predicated region
  $region2: #{discriminator128_forward.9} parent=0 // pred_check
    _
  $region3: #{discriminator128_forward.9} parent=0 // pred_check_branch
    %11 = sbr.rel (0) target = $region5
  $region4: #{discriminator128_forward.9} parent=0 // pred_region
    _
  $region5: #{discriminator128_forward.9} parent=0 // pred_fallthru
    _
  // Predicated region
  $region6: #{discriminator128_forward.9} parent=0 // pred_check
    _
  $region7: #{discriminator128_forward.9} parent=0 // pred_check_branch
    %13 = sbr.rel (0) target = $region9
  $region8: #{discriminator128_forward.9} parent=0 // pred_region
    _
  $region9: #{discriminator128_forward.9} parent=0 // pred_fallthru
    _
  // Predicated region
  $region10: #{discriminator128_forward.9} parent=0 // pred_check
    _
  $region11: #{discriminator128_forward.9} parent=0 // pred_check_branch
    %15 = sbr.rel (0) target = $region13
  $region12: #{discriminator128_forward.9} parent=0 // pred_region
    _
  $region13: #{discriminator128_forward.9} parent=0 // pred_fallthru
    _
  %v16 = vld [vmem:[%s0] sm:$0xff]
  %v17 = vld [vmem:[%s0 + $0x8] sm:$0xff]
  %v18 = vld [vmem:[%s0 + $0x10] sm:$0xff]
  %v19 = vld [vmem:[%s0 + $0x18] sm:$0xff]
  %v20 = vld [vmem:[%s0 + $0x20] sm:$0xff]
  %v21 = vld [vmem:[%s0 + $0x28] sm:$0xff]
  %v22 = vld [vmem:[%s0 + $0x30] sm:$0xff]
  %v23 = vld [vmem:[%s0 + $0x38] sm:$0xff]
  %v24 = vld [vmem:[%s0 + $0x40] sm:$0xff]
  %v25 = vld [vmem:[%s0 + $0x48] sm:$0xff]
  %v26 = vld [vmem:[%s0 + $0x50] sm:$0xff]
  %v27 = vld [vmem:[%s0 + $0x58] sm:$0xff]
  %v28 = vld [vmem:[%s0 + $0x60] sm:$0xff]
  %v29 = vld [vmem:[%s0 + $0x68] sm:$0xff]
  %v30 = vunpack.c.l.bf16 %v16
  %v31 = vunpack.c.h.bf16 %v16
  %v32 = vunpack.c.l.bf16 %v17
  %v33 = vunpack.c.h.bf16 %v17
  %v34 = vunpack.c.l.bf16 %v18
  %v35 = vunpack.c.h.bf16 %v18
  %v36 = vunpack.c.l.bf16 %v19
  %v37 = vunpack.c.h.bf16 %v19
  %v38 = vunpack.c.l.bf16 %v20
  %v39 = vunpack.c.h.bf16 %v20
  %v40 = vunpack.c.l.bf16 %v21
  %v41 = vunpack.c.h.bf16 %v21
  %v42 = vunpack.c.l.bf16 %v22
  %v43 = vunpack.c.h.bf16 %v22
  %v44 = vunpack.c.l.bf16 %v23
  %v45 = vunpack.c.h.bf16 %v23
  %v46 = vunpack.c.l.bf16 %v24
  %v47 = vunpack.c.h.bf16 %v24
  %v48 = vunpack.c.l.bf16 %v25
  %v49 = vunpack.c.h.bf16 %v25
  %v50 = vunpack.c.l.bf16 %v26
  %v51 = vunpack.c.h.bf16 %v26
  %v52 = vunpack.c.l.bf16 %v27
  %v53 = vunpack.c.h.bf16 %v27
  %v54 = vunpack.c.l.bf16 %v28
  %v55 = vunpack.c.h.bf16 %v28
  %v56 = vunpack.c.l.bf16 %v29
  %v57 = vunpack.c.h.bf16 %v29
  %vm58 = vcmp.ge.f32.partialorder %v30, 0.0
  %vm59 = vcmp.ge.f32.partialorder %v31, 0.0
  %vm60 = vcmp.ge.f32.partialorder %v32, 0.0
  %vm61 = vcmp.ge.f32.partialorder %v33, 0.0
  %vm62 = vcmp.ge.f32.partialorder %v34, 0.0
  %vm63 = vcmp.ge.f32.partialorder %v35, 0.0
  %vm64 = vcmp.ge.f32.partialorder %v36, 0.0
  %vm65 = vcmp.ge.f32.partialorder %v37, 0.0
  %vm66 = vcmp.ge.f32.partialorder %v38, 0.0
  %vm67 = vcmp.ge.f32.partialorder %v39, 0.0
  %vm68 = vcmp.ge.f32.partialorder %v40, 0.0
  %vm69 = vcmp.ge.f32.partialorder %v41, 0.0
  %vm70 = vcmp.ge.f32.partialorder %v42, 0.0
  %vm71 = vcmp.ge.f32.partialorder %v43, 0.0
  %vm72 = vcmp.ge.f32.partialorder %v44, 0.0
  %vm73 = vcmp.ge.f32.partialorder %v45, 0.0
  %vm74 = vcmp.ge.f32.partialorder %v46, 0.0
  %vm75 = vcmp.ge.f32.partialorder %v47, 0.0
  %vm76 = vcmp.ge.f32.partialorder %v48, 0.0
  %vm77 = vcmp.ge.f32.partialorder %v49, 0.0
  %vm78 = vcmp.ge.f32.partialorder %v50, 0.0
  %vm79 = vcmp.ge.f32.partialorder %v51, 0.0
  %vm80 = vcmp.ge.f32.partialorder %v52, 0.0
  %vm81 = vcmp.ge.f32.partialorder %v53, 0.0
  %vm82 = vcmp.ge.f32.partialorder %v54, 0.0
  %vm83 = vcmp.ge.f32.partialorder %v55, 0.0
  %vm84 = vcmp.ge.f32.partialorder %v56, 0.0
  %vm85 = vcmp.ge.f32.partialorder %v57, 0.0
  %v86 = vmul.f32 %v30, 0.20019531
  %v87 = vmul.f32 %v31, 0.20019531
  %v88 = vmul.f32 %v32, 0.20019531
  %v89 = vmul.f32 %v33, 0.20019531
  %v90 = vmul.f32 %v34, 0.20019531
  %v91 = vmul.f32 %v35, 0.20019531
  %v92 = vmul.f32 %v36, 0.20019531
  %v93 = vmul.f32 %v37, 0.20019531
  %v94 = vmul.f32 %v38, 0.20019531
  %v95 = vmul.f32 %v39, 0.20019531
  %v96 = vmul.f32 %v40, 0.20019531
  %v97 = vmul.f32 %v41, 0.20019531
  %v98 = vmul.f32 %v42, 0.20019531
  %v99 = vmul.f32 %v43, 0.20019531
  %v100 = vmul.f32 %v44, 0.20019531
  %v101 = vmul.f32 %v45, 0.20019531
  %v102 = vmul.f32 %v46, 0.20019531
  %v103 = vmul.f32 %v47, 0.20019531
  %v104 = vmul.f32 %v48, 0.20019531
  %v105 = vmul.f32 %v49, 0.20019531
  %v106 = vmul.f32 %v50, 0.20019531
  %v107 = vmul.f32 %v51, 0.20019531
  %v108 = vmul.f32 %v52, 0.20019531
  %v109 = vmul.f32 %v53, 0.20019531
  %v110 = vmul.f32 %v54, 0.20019531
  %v111 = vmul.f32 %v55, 0.20019531
  %v112 = vmul.f32 %v56, 0.20019531
  %v113 = vmul.f32 %v57, 0.20019531
  %v114 = vpack.c.bf16 %v87, %v86
  %v115 = vpack.c.bf16 %v89, %v88
  %v116 = vpack.c.bf16 %v91, %v90
  %v117 = vpack.c.bf16 %v93, %v92
  %v118 = vpack.c.bf16 %v95, %v94
  %v119 = vpack.c.bf16 %v97, %v96
  %v120 = vpack.c.bf16 %v99, %v98
  %v121 = vpack.c.bf16 %v101, %v100
  %v122 = vpack.c.bf16 %v103, %v102
  %v123 = vpack.c.bf16 %v105, %v104
  %v124 = vpack.c.bf16 %v107, %v106
  %v125 = vpack.c.bf16 %v109, %v108
  %v126 = vpack.c.bf16 %v111, %v110
  %v127 = vpack.c.bf16 %v113, %v112
  %vm128 = vmpackc.low %vm59, %vm58
  %vm129 = vmpackc.low %vm61, %vm60
  %vm130 = vmpackc.low %vm63, %vm62
  %vm131 = vmpackc.low %vm65, %vm64
  %vm132 = vmpackc.low %vm67, %vm66
  %vm133 = vmpackc.low %vm69, %vm68
  %vm134 = vmpackc.low %vm71, %vm70
  %vm135 = vmpackc.low %vm73, %vm72
  %vm136 = vmpackc.low %vm75, %vm74
  %vm137 = vmpackc.low %vm77, %vm76
  %vm138 = vmpackc.low %vm79, %vm78
  %vm139 = vmpackc.low %vm81, %vm80
  %vm140 = vmpackc.low %vm83, %vm82
  %vm141 = vmpackc.low %vm85, %vm84
  %v142 = vsel %vm128, %v16, %v114
  %v143 = vsel %vm129, %v17, %v115
  %v144 = vsel %vm130, %v18, %v116
  %v145 = vsel %vm131, %v19, %v117
  %v146 = vsel %vm132, %v20, %v118
  %v147 = vsel %vm133, %v21, %v119
  %v148 = vsel %vm134, %v22, %v120
  %v149 = vsel %vm135, %v23, %v121
  %v150 = vsel %vm136, %v24, %v122
  %v151 = vsel %vm137, %v25, %v123
  %v152 = vsel %vm138, %v26, %v124
  %v153 = vsel %vm139, %v27, %v125
  %v154 = vsel %vm140, %v28, %v126
  %v155 = vsel %vm141, %v29, %v127
  %v156 = vld [vmem:[%s1] sm:$0xf]
  %v157 = vld [vmem:[%s1 + $0x4] sm:$0xf]
  %v158 = vld [vmem:[%s1 + $0x8] sm:$0xf]
  %v159 = vld [vmem:[%s1 + $0xc] sm:$0xf]
  %v160 = vld [vmem:[%s1 + $0x10] sm:$0xf]
  %v161 = vld [vmem:[%s1 + $0x14] sm:$0xf]
  %v162 = vld [vmem:[%s1 + $0x18] sm:$0xf]
  %v163 = vld [vmem:[%s1 + $0x1c] sm:$0xf]
  %v164 = vld [vmem:[%s1 + $0x20] sm:$0xf]
  %v165 = vld [vmem:[%s1 + $0x24] sm:$0xf]
  %v166 = vld [vmem:[%s1 + $0x28] sm:$0xf]
  %v167 = vld [vmem:[%s1 + $0x2c] sm:$0xf]
  %v168 = vld [vmem:[%s1 + $0x30] sm:$0xf]
  %v169 = vld [vmem:[%s1 + $0x34] sm:$0xf]
  %v170 = vld [vmem:[%s1 + $0x38] sm:$0xf]
  %v171 = vld [vmem:[%s1 + $0x3c] sm:$0xf]
  %v172 = vld [vmem:[%s1 + $0x40] sm:$0xf]
  %v173 = vld [vmem:[%s1 + $0x44] sm:$0xf]
  %v174 = vld [vmem:[%s1 + $0x48] sm:$0xf]
  %v175 = vld [vmem:[%s1 + $0x4c] sm:$0xf]
  %v176 = vld [vmem:[%s1 + $0x50] sm:$0xf]
  %v177 = vld [vmem:[%s1 + $0x54] sm:$0xf]
  %v178 = vld [vmem:[%s1 + $0x58] sm:$0xf]
  %v179 = vld [vmem:[%s1 + $0x5c] sm:$0xf]
  %v180 = vld [vmem:[%s1 + $0x60] sm:$0xf]
  %v181 = vld [vmem:[%s1 + $0x64] sm:$0xf]
  %v182 = vld [vmem:[%s1 + $0x68] sm:$0xf]
  %v183 = vld [vmem:[%s1 + $0x6c] sm:$0xf]
  %v184 = vld [vmem:[%s1 + $0x70] sm:$0xf]
  %v185 = vld [vmem:[%s1 + $0x74] sm:$0xf]
  %v186 = vld [vmem:[%s1 + $0x78] sm:$0xf]
  %v187 = vld [vmem:[%s1 + $0x7c] sm:$0xf]
  %v188 = vld [vmem:[%s2] sm:$0x1]
  %v190 = vperm.slane %v188, 0
  %v206 = vunpack.c.l.b16 %v142
  %v207 = vunpack.c.h.b16 %v142
  %v208 = vunpack.c.l.b16 %v143
  %v209 = vunpack.c.h.b16 %v143
  %v210 = vunpack.c.l.b16 %v144
  %v211 = vunpack.c.h.b16 %v144
  %v212 = vunpack.c.l.b16 %v145
  %v213 = vunpack.c.h.b16 %v145
  %v214 = vunpack.c.l.b16 %v146
  %v215 = vunpack.c.h.b16 %v146
  %v216 = vunpack.c.l.b16 %v147
  %v217 = vunpack.c.h.b16 %v147
  %v218 = vunpack.c.l.b16 %v148
  %v219 = vunpack.c.h.b16 %v148
  %v220 = vunpack.c.l.b16 %v149
  %v221 = vunpack.c.h.b16 %v149
  %v222 = vunpack.c.l.b16 %v150
  %v223 = vunpack.c.h.b16 %v150
  %v224 = vunpack.c.l.b16 %v151
  %v225 = vunpack.c.h.b16 %v151
  %v226 = vunpack.c.l.b16 %v152
  %v227 = vunpack.c.h.b16 %v152
  %v228 = vunpack.c.l.b16 %v153
  %v229 = vunpack.c.h.b16 %v153
  %v230 = vunpack.c.l.b16 %v154
  %v231 = vunpack.c.h.b16 %v154
  %v232 = vunpack.c.l.b16 %v155
  %v233 = vunpack.c.h.b16 %v155
  %v234 = vpack.c.b16 %v208, %v206
  %v235 = vpack.c.b16 %v209, %v207
  %v236 = vpack.c.b16 %v212, %v210
  %v237 = vpack.c.b16 %v213, %v211
  %v238 = vpack.c.b16 %v216, %v214
  %v239 = vpack.c.b16 %v217, %v215
  %v240 = vpack.c.b16 %v220, %v218
  %v241 = vpack.c.b16 %v221, %v219
  %v242 = vpack.c.b16 %v224, %v222
  %v243 = vpack.c.b16 %v225, %v223
  %v244 = vpack.c.b16 %v228, %v226
  %v245 = vpack.c.b16 %v229, %v227
  %v246 = vpack.c.b16 %v232, %v230
  %v247 = vpack.c.b16 %v233, %v231
  %v294 = vunpack.c.l.b16 %v156
  %v295 = vunpack.c.l.b16 %v157
  %v296 = vunpack.c.l.b16 %v158
  %v297 = vunpack.c.l.b16 %v159
  %v298 = vunpack.c.l.b16 %v160
  %v299 = vunpack.c.l.b16 %v161
  %v300 = vunpack.c.l.b16 %v162
  %v301 = vunpack.c.l.b16 %v163
  %v302 = vunpack.c.l.b16 %v164
  %v303 = vunpack.c.l.b16 %v165
  %v304 = vunpack.c.l.b16 %v166
  %v305 = vunpack.c.l.b16 %v167
  %v306 = vunpack.c.l.b16 %v168
  %v307 = vunpack.c.l.b16 %v169
  %v308 = vunpack.c.l.b16 %v170
  %v309 = vunpack.c.l.b16 %v171
  %v310 = vunpack.c.l.b16 %v172
  %v311 = vunpack.c.l.b16 %v173
  %v312 = vunpack.c.l.b16 %v174
  %v313 = vunpack.c.l.b16 %v175
  %v314 = vunpack.c.l.b16 %v176
  %v315 = vunpack.c.l.b16 %v177
  %v316 = vunpack.c.l.b16 %v178
  %v317 = vunpack.c.l.b16 %v179
  %v318 = vunpack.c.l.b16 %v180
  %v319 = vunpack.c.l.b16 %v181
  %v320 = vunpack.c.l.b16 %v182
  %v321 = vunpack.c.l.b16 %v183
  %v322 = vunpack.c.l.b16 %v184
  %v323 = vunpack.c.l.b16 %v185
  %v324 = vunpack.c.l.b16 %v186
  %v325 = vunpack.c.l.b16 %v187
  %v326 = vpack.c.b16 %v295, %v294
  %v327 = vpack.c.b16 %v297, %v296
  %v328 = vpack.c.b16 %v299, %v298
  %v329 = vpack.c.b16 %v301, %v300
  %v330 = vpack.c.b16 %v303, %v302
  %v331 = vpack.c.b16 %v305, %v304
  %v332 = vpack.c.b16 %v307, %v306
  %v333 = vpack.c.b16 %v309, %v308
  %v334 = vpack.c.b16 %v311, %v310
  %v335 = vpack.c.b16 %v313, %v312
  %v336 = vpack.c.b16 %v315, %v314
  %v337 = vpack.c.b16 %v317, %v316
  %v338 = vpack.c.b16 %v319, %v318
  %v339 = vpack.c.b16 %v321, %v320
  %v340 = vpack.c.b16 %v323, %v322
  %v341 = vpack.c.b16 %v325, %v324
  %358 = vmatpush.bf16.msra.mxu0 %v333
  %359 = vmatpush.bf16.msra.mxu0 %v332
  %360 = vmatpush.bf16.msra.mxu0 %v331
  %361 = vmatpush.bf16.msra.mxu0 %v330
  %362 = vmatpush.bf16.msra.mxu0 %v329
  %363 = vmatpush.bf16.msra.mxu0 %v328
  %364 = vmatpush.bf16.msra.mxu0 %v327
  %365 = vmatpush.bf16.msra.mxu0 %v326
  %366 = vmatmul.bf16.gmra.mxu0 %v234
  %v367 = vpop.f32.mrf.mxu0
  %v368 = vadd.f32 %v190, %v367
  %v369 = vpop.f32.mrf.mxu0
  %v370 = vadd.f32 %v190, %v369
  %371 = vmatmul.bf16.gmra.mxu0 %v236
  %v372 = vpop.f32.mrf.mxu0
  %v373 = vadd.f32 %v190, %v372
  %v374 = vpop.f32.mrf.mxu0
  %v375 = vadd.f32 %v190, %v374
  %376 = vmatmul.bf16.gmra.mxu0 %v238
  %v377 = vpop.f32.mrf.mxu0
  %v378 = vadd.f32 %v190, %v377
  %v379 = vpop.f32.mrf.mxu0
  %v380 = vadd.f32 %v190, %v379
  %381 = vmatmul.bf16.gmra.mxu0 %v240
  %v382 = vpop.f32.mrf.mxu0
  %v383 = vadd.f32 %v190, %v382
  %v384 = vpop.f32.mrf.mxu0
  %v385 = vadd.f32 %v190, %v384
  %386 = vmatmul.bf16.gmra.mxu0 %v242
  %v387 = vpop.f32.mrf.mxu0
  %v388 = vadd.f32 %v190, %v387
  %v389 = vpop.f32.mrf.mxu0
  %v390 = vadd.f32 %v190, %v389
  %391 = vmatmul.bf16.gmra.mxu0 %v244
  %v392 = vpop.f32.mrf.mxu0
  %v393 = vadd.f32 %v190, %v392
  %v394 = vpop.f32.mrf.mxu0
  %v395 = vadd.f32 %v190, %v394
  %396 = vmatmul.bf16.gmra.mxu0 %v246
  %v397 = vpop.f32.mrf.mxu0
  %v398 = vadd.f32 %v190, %v397
  %v399 = vpop.f32.mrf.mxu0
  %v400 = vadd.f32 %v190, %v399
  %401 = vdwg.mxu0
  %402 = vmatpush.bf16.msra.mxu0 %v341
  %403 = vmatpush.bf16.msra.mxu0 %v340
  %404 = vmatpush.bf16.msra.mxu0 %v339
  %405 = vmatpush.bf16.msra.mxu0 %v338
  %406 = vmatpush.bf16.msra.mxu0 %v337
  %407 = vmatpush.bf16.msra.mxu0 %v336
  %408 = vmatpush.bf16.msra.mxu0 %v335
  %409 = vmatpush.bf16.msra.mxu0 %v334
  %410 = vmatmul.bf16.gmra.mxu0 %v235
  %v411 = vpop.f32.mrf.mxu0
  %v412 = vadd.f32 %v368, %v411
  %v413 = vpop.f32.mrf.mxu0
  %v414 = vadd.f32 %v370, %v413
  %415 = vmatmul.bf16.gmra.mxu0 %v237
  %v416 = vpop.f32.mrf.mxu0
  %v417 = vadd.f32 %v373, %v416
  %v418 = vpop.f32.mrf.mxu0
  %v419 = vadd.f32 %v375, %v418
  %420 = vmatmul.bf16.gmra.mxu0 %v239
  %v421 = vpop.f32.mrf.mxu0
  %v422 = vadd.f32 %v378, %v421
  %v423 = vpop.f32.mrf.mxu0
  %v424 = vadd.f32 %v380, %v423
  %425 = vmatmul.bf16.gmra.mxu0 %v241
  %v426 = vpop.f32.mrf.mxu0
  %v427 = vadd.f32 %v383, %v426
  %v428 = vpop.f32.mrf.mxu0
  %v429 = vadd.f32 %v385, %v428
  %430 = vmatmul.bf16.gmra.mxu0 %v243
  %v431 = vpop.f32.mrf.mxu0
  %v432 = vadd.f32 %v388, %v431
  %v433 = vpop.f32.mrf.mxu0
  %v434 = vadd.f32 %v390, %v433
  %435 = vmatmul.bf16.gmra.mxu0 %v245
  %v436 = vpop.f32.mrf.mxu0
  %v437 = vadd.f32 %v393, %v436
  %v438 = vpop.f32.mrf.mxu0
  %v439 = vadd.f32 %v395, %v438
  %440 = vmatmul.bf16.gmra.mxu0 %v247
  %v441 = vpop.f32.mrf.mxu0
  %v442 = vadd.f32 %v398, %v441
  %v443 = vpop.f32.mrf.mxu0
  %v444 = vadd.f32 %v400, %v443
  %445 = vdwg.mxu0
  %v446 = vpack.c.bf16 %v412, %v412
  %v447 = vpack.c.bf16 %v414, %v414
  %v448 = vpack.c.bf16 %v417, %v417
  %v449 = vpack.c.bf16 %v419, %v419
  %v450 = vpack.c.bf16 %v422, %v422
  %v451 = vpack.c.bf16 %v424, %v424
  %v452 = vpack.c.bf16 %v427, %v427
  %v453 = vpack.c.bf16 %v429, %v429
  %v454 = vpack.c.bf16 %v432, %v432
  %v455 = vpack.c.bf16 %v434, %v434
  %v456 = vpack.c.bf16 %v437, %v437
  %v457 = vpack.c.bf16 %v439, %v439
  %v458 = vpack.c.bf16 %v442, %v442
  %v459 = vpack.c.bf16 %v444, %v444
  %460 = vst [vmem:[%s3] sm:$0xf] %v446
  %461 = vst [vmem:[%s3 + $0x4] sm:$0xf] %v447
  %462 = vst [vmem:[%s3 + $0x8] sm:$0xf] %v448
  %463 = vst [vmem:[%s3 + $0xc] sm:$0xf] %v449
  %464 = vst [vmem:[%s3 + $0x10] sm:$0xf] %v450
  %465 = vst [vmem:[%s3 + $0x14] sm:$0xf] %v451
  %466 = vst [vmem:[%s3 + $0x18] sm:$0xf] %v452
  %467 = vst [vmem:[%s3 + $0x1c] sm:$0xf] %v453
  %468 = vst [vmem:[%s3 + $0x20] sm:$0xf] %v454
  %469 = vst [vmem:[%s3 + $0x24] sm:$0xf] %v455
  %470 = vst [vmem:[%s3 + $0x28] sm:$0xf] %v456
  %471 = vst [vmem:[%s3 + $0x2c] sm:$0xf] %v457
  %472 = vst [vmem:[%s3 + $0x30] sm:$0xf] %v458
  %473 = vst [vmem:[%s3 + $0x34] sm:$0xf] %v459
  %s474 = smul.u32 0, 112
  %v475 = vlaneseq
  %v476 = vshrl.u32 %v475, 7
  %v477 = vadd.s32 %v476, 8
  %v478 = vadd.s32 %v476, 16
  %v479 = vadd.s32 %v476, 24
  %v480 = vadd.s32 %v476, 32
  %v481 = vadd.s32 %v476, 40
  %v482 = vadd.s32 %v476, 48
  %v483 = vadd.s32 %v476, 56
  %v484 = vadd.s32 %v476, 64
  %v485 = vadd.s32 %v476, 72
  %v486 = vadd.s32 %v476, 80
  %v487 = vadd.s32 %v476, 88
  %v488 = vadd.s32 %v476, 96
  %v489 = vadd.s32 %v476, 104
  %v490 = vstv %s474
  %v491 = vadd.s32 %v490, %v476
  %v492 = vadd.s32 %v490, %v477
  %v493 = vadd.s32 %v490, %v478
  %v494 = vadd.s32 %v490, %v479
  %v495 = vadd.s32 %v490, %v480
  %v496 = vadd.s32 %v490, %v481
  %v497 = vadd.s32 %v490, %v482
  %v498 = vadd.s32 %v490, %v483
  %v499 = vadd.s32 %v490, %v484
  %v500 = vadd.s32 %v490, %v485
  %v501 = vadd.s32 %v490, %v486
  %v502 = vadd.s32 %v490, %v487
  %v503 = vadd.s32 %v490, %v488
  %v504 = vadd.s32 %v490, %v489
  %vm505 = vcmp.lt.s32.totalorder %v491, 98
  %vm506 = vcmp.lt.s32.totalorder %v492, 98
  %vm507 = vcmp.lt.s32.totalorder %v493, 98
  %vm508 = vcmp.lt.s32.totalorder %v494, 98
  %vm509 = vcmp.lt.s32.totalorder %v495, 98
  %vm510 = vcmp.lt.s32.totalorder %v496, 98
  %vm511 = vcmp.lt.s32.totalorder %v497, 98
  %vm512 = vcmp.lt.s32.totalorder %v498, 98
  %vm513 = vcmp.lt.s32.totalorder %v499, 98
  %vm514 = vcmp.lt.s32.totalorder %v500, 98
  %vm515 = vcmp.lt.s32.totalorder %v501, 98
  %vm516 = vcmp.lt.s32.totalorder %v502, 98
  %vm517 = vcmp.lt.s32.totalorder %v503, 98
  %vm518 = vcmp.lt.s32.totalorder %v504, 98
  %v519 = vsel %vm505, %v412, 0.0
  %v520 = vsel %vm506, %v414, 0.0
  %v521 = vsel %vm507, %v417, 0.0
  %v522 = vsel %vm508, %v419, 0.0
  %v523 = vsel %vm509, %v422, 0.0
  %v524 = vsel %vm510, %v424, 0.0
  %v525 = vsel %vm511, %v427, 0.0
  %v526 = vsel %vm512, %v429, 0.0
  %v527 = vsel %vm513, %v432, 0.0
  %v528 = vsel %vm514, %v434, 0.0
  %v529 = vsel %vm515, %v437, 0.0
  %v530 = vsel %vm516, %v439, 0.0
  %v531 = vsel %vm517, %v442, 0.0
  %v532 = vsel %vm518, %v444, 0.0
  %v533 = vadd.f32 %v519, %v520
  %v534 = vadd.f32 %v533, %v521
  %v535 = vadd.f32 %v534, %v522
  %v536 = vadd.f32 %v535, %v523
  %v537 = vadd.f32 %v536, %v524
  %v538 = vadd.f32 %v537, %v525
  %v539 = vadd.f32 %v538, %v526
  %v540 = vadd.f32 %v539, %v527
  %v541 = vadd.f32 %v540, %v528
  %v542 = vadd.f32 %v541, %v529
  %v543 = vadd.f32 %v542, %v530
  %v544 = vadd.f32 %v543, %v531
  %v545 = vadd.f32 %v544, %v532
  %v546 = vrot.slane %v545, 4
  %v547 = vadd.f32 %v545, %v546
  %v548 = vrot.slane %v547, 2
  %v549 = vadd.f32 %v547, %v548
  %v550 = vrot.slane %v549, 1
  %v551 = vadd.f32 %v549, %v550
  %v552 = vmul.f32 %v519, %v519
  %v553 = vmul.f32 %v520, %v520
  %v554 = vmul.f32 %v521, %v521
  %v555 = vmul.f32 %v522, %v522
  %v556 = vmul.f32 %v523, %v523
  %v557 = vmul.f32 %v524, %v524
  %v558 = vmul.f32 %v525, %v525
  %v559 = vmul.f32 %v526, %v526
  %v560 = vmul.f32 %v527, %v527
  %v561 = vmul.f32 %v528, %v528
  %v562 = vmul.f32 %v529, %v529
  %v563 = vmul.f32 %v530, %v530
  %v564 = vmul.f32 %v531, %v531
  %v565 = vmul.f32 %v532, %v532
  %v566 = vadd.f32 %v552, %v553
  %v567 = vadd.f32 %v566, %v554
  %v568 = vadd.f32 %v567, %v555
  %v569 = vadd.f32 %v568, %v556
  %v570 = vadd.f32 %v569, %v557
  %v571 = vadd.f32 %v570, %v558
  %v572 = vadd.f32 %v571, %v559
  %v573 = vadd.f32 %v572, %v560
  %v574 = vadd.f32 %v573, %v561
  %v575 = vadd.f32 %v574, %v562
  %v576 = vadd.f32 %v575, %v563
  %v577 = vadd.f32 %v576, %v564
  %v578 = vadd.f32 %v577, %v565
  %v579 = vrot.slane %v578, 4
  %v580 = vadd.f32 %v578, %v579
  %v581 = vrot.slane %v580, 2
  %v582 = vadd.f32 %v580, %v581
  %v583 = vrot.slane %v582, 1
  %v584 = vadd.f32 %v582, %v583
  %vm585 = vcmask 1040384
  %v586 = vsel %vm585, %v551, %v584
  %p587 = scmp.eq.s32.totalorder 0, 0
  // Predicated region
  $region14: #{discriminator128_forward.9} parent=0 // pred_check
    %p588 = pneg %p587
  $region15: #{discriminator128_forward.9} parent=0 // pred_check_branch
    %590 = sbr.rel (%p588) target = $region17
  $region16: #{discriminator128_forward.9} parent=0 // pred_region
    %591 = vst [vmem:[%s4] sm:$0x3] 0.0
  $region17: #{discriminator128_forward.9} parent=0 // pred_fallthru
    _
  %v592 = vld [vmem:[%s4] sm:$0x3]
  %v593 = vadd.f32 %v592, %v586
  %594 = vst [vmem:[%s4] sm:$0x3] %v593
  // Predicated region
  $region18: #{discriminator128_forward.9} parent=0 // pred_check
    _
  $region19: #{discriminator128_forward.9} parent=0 // pred_check_branch
    %596 = sbr.rel (0) target = $region21
  $region20: #{discriminator128_forward.9} parent=0 // pred_region
    _
  $region21: #{discriminator128_forward.9} parent=0 // pred_fallthru
    _
  // Predicated region
  $region22: #{discriminator128_forward.9} parent=0 // pred_check
    _
  $region23: #{discriminator128_forward.9} parent=0 // pred_check_branch
    %598 = sbr.rel (0) target = $region25
  $region24: #{discriminator128_forward.9} parent=0 // pred_region
    _
  $region25: #{discriminator128_forward.9} parent=0 // pred_fallthru
    _
  // Predicated region
  $region26: #{discriminator128_forward.9} parent=0 // pred_check
    _
  $region27: #{discriminator128_forward.9} parent=0 // pred_check_branch
    %600 = sbr.rel (0) target = $region29
  $region28: #{discriminator128_forward.9} parent=0 // pred_region
    _
  $region29: #{discriminator128_forward.9} parent=0 // pred_fallthru
    _
  // Predicated region
  $region30: #{discriminator128_forward.9} parent=0 // pred_check
    _
  $region31: #{discriminator128_forward.9} parent=0 // pred_check_branch
    %602 = sbr.rel (0) target = $region33
  $region32: #{discriminator128_forward.9} parent=0 // pred_region
    _
  $region33: #{discriminator128_forward.9} parent=0 // pred_fallthru
    _

// kernel: discriminator128_forward.11
$region0: #{discriminator128_forward.11}
  #allocation0 [shape = 'u32[]', space=smem, size = 0x4, offset = 0x4, fixed_abs, tag = 'smem constant byte address 0x4 - core index']
  #allocation1 [shape = 'u32[72,128]{1,0:T(1,128)}', space=vmem, size = 0x9000, scoped, tag = 'internal scratch']
  %s0 = inlined_call_operand.vmem [shape: bf16[80,512], index: 0, kind: input, shape index: {}]
  %s1 = inlined_call_operand.vmem [shape: bf16[512,128], index: 1, kind: input, shape index: {}]
  %s2 = inlined_call_operand.vmem [shape: f32[1,128], index: 2, kind: input, shape index: {}]
  %s3 = inlined_call_operand.vmem [shape: f32[80,128], index: 3, kind: output, shape index: {}]
  %s4 = sld [smem:[#allocation0]]
  $region22: #{discriminator128_forward.11} parent=0
    _
  %s6 = ssub.s32 1, %s4
  %s7 = scalar_select 0, %s6, %s4
  // Predicated region
  $region2: #{discriminator128_forward.11} parent=0 // pred_check
    _
  $region3: #{discriminator128_forward.11} parent=0 // pred_check_branch
    %9 = sbr.rel (0) target = $region5
  $region4: #{discriminator128_forward.11} parent=0 // pred_region
    _
  $region5: #{discriminator128_forward.11} parent=0 // pred_fallthru
    _
  // Predicated region
  $region6: #{discriminator128_forward.11} parent=0 // pred_check
    _
  $region7: #{discriminator128_forward.11} parent=0 // pred_check_branch
    %11 = sbr.rel (0) target = $region9
  $region8: #{discriminator128_forward.11} parent=0 // pred_region
    _
  $region9: #{discriminator128_forward.11} parent=0 // pred_fallthru
    _
  // Predicated region
  $region10: #{discriminator128_forward.11} parent=0 // pred_check
    _
  $region11: #{discriminator128_forward.11} parent=0 // pred_check_branch
    %13 = sbr.rel (0) target = $region13
  $region12: #{discriminator128_forward.11} parent=0 // pred_region
    _
  $region13: #{discriminator128_forward.11} parent=0 // pred_fallthru
    _
  %v14 = vld [vmem:[%s0] sm:$0xff]
  %v15 = vld [vmem:[%s0 + $0x8] sm:$0xff]
  %v16 = vld [vmem:[%s0 + $0x10] sm:$0xff]
  %v17 = vld [vmem:[%s0 + $0x18] sm:$0xff]
  %v18 = vld [vmem:[%s0 + $0x20] sm:$0xff]
  %v19 = vld [vmem:[%s0 + $0x28] sm:$0xff]
  %v20 = vld [vmem:[%s0 + $0x30] sm:$0xff]
  %v21 = vld [vmem:[%s0 + $0x38] sm:$0xff]
  %v22 = vld [vmem:[%s0 + $0x40] sm:$0xff]
  %v23 = vld [vmem:[%s0 + $0x48] sm:$0xff]
  %v24 = vld [vmem:[%s0 + $0x50] sm:$0xff]
  %v25 = vld [vmem:[%s0 + $0x58] sm:$0xff]
  %v26 = vld [vmem:[%s0 + $0x60] sm:$0xff]
  %v27 = vld [vmem:[%s0 + $0x68] sm:$0xff]
  %v28 = vld [vmem:[%s0 + $0x70] sm:$0xff]
  %v29 = vld [vmem:[%s0 + $0x78] sm:$0xff]
  %v30 = vld [vmem:[%s0 + $0x80] sm:$0xff]
  %v31 = vld [vmem:[%s0 + $0x88] sm:$0xff]
  %v32 = vld [vmem:[%s0 + $0x90] sm:$0xff]
  %v33 = vld [vmem:[%s0 + $0x98] sm:$0xff]
  %v34 = vunpack.c.l.bf16 %v14
  %v35 = vunpack.c.h.bf16 %v14
  %v36 = vunpack.c.l.bf16 %v15
  %v37 = vunpack.c.h.bf16 %v15
  %v38 = vunpack.c.l.bf16 %v16
  %v39 = vunpack.c.h.bf16 %v16
  %v40 = vunpack.c.l.bf16 %v17
  %v41 = vunpack.c.h.bf16 %v17
  %v42 = vunpack.c.l.bf16 %v18
  %v43 = vunpack.c.h.bf16 %v18
  %v44 = vunpack.c.l.bf16 %v19
  %v45 = vunpack.c.h.bf16 %v19
  %v46 = vunpack.c.l.bf16 %v20
  %v47 = vunpack.c.h.bf16 %v20
  %v48 = vunpack.c.l.bf16 %v21
  %v49 = vunpack.c.h.bf16 %v21
  %v50 = vunpack.c.l.bf16 %v22
  %v51 = vunpack.c.h.bf16 %v22
  %v52 = vunpack.c.l.bf16 %v23
  %v53 = vunpack.c.h.bf16 %v23
  %v54 = vunpack.c.l.bf16 %v24
  %v55 = vunpack.c.h.bf16 %v24
  %v56 = vunpack.c.l.bf16 %v25
  %v57 = vunpack.c.h.bf16 %v25
  %v58 = vunpack.c.l.bf16 %v26
  %v59 = vunpack.c.h.bf16 %v26
  %v60 = vunpack.c.l.bf16 %v27
  %v61 = vunpack.c.h.bf16 %v27
  %v62 = vunpack.c.l.bf16 %v28
  %v63 = vunpack.c.h.bf16 %v28
  %v64 = vunpack.c.l.bf16 %v29
  %v65 = vunpack.c.h.bf16 %v29
  %v66 = vunpack.c.l.bf16 %v30
  %v67 = vunpack.c.h.bf16 %v30
  %v68 = vunpack.c.l.bf16 %v31
  %v69 = vunpack.c.h.bf16 %v31
  %v70 = vunpack.c.l.bf16 %v32
  %v71 = vunpack.c.h.bf16 %v32
  %v72 = vunpack.c.l.bf16 %v33
  %v73 = vunpack.c.h.bf16 %v33
  %vm74 = vcmp.ge.f32.partialorder %v34, 0.0
  %vm75 = vcmp.ge.f32.partialorder %v35, 0.0
  %vm76 = vcmp.ge.f32.partialorder %v36, 0.0
  %vm77 = vcmp.ge.f32.partialorder %v37, 0.0
  %vm78 = vcmp.ge.f32.partialorder %v38, 0.0
  %vm79 = vcmp.ge.f32.partialorder %v39, 0.0
  %vm80 = vcmp.ge.f32.partialorder %v40, 0.0
  %vm81 = vcmp.ge.f32.partialorder %v41, 0.0
  %vm82 = vcmp.ge.f32.partialorder %v42, 0.0
  %vm83 = vcmp.ge.f32.partialorder %v43, 0.0
  %vm84 = vcmp.ge.f32.partialorder %v44, 0.0
  %vm85 = vcmp.ge.f32.partialorder %v45, 0.0
  %vm86 = vcmp.ge.f32.partialorder %v46, 0.0
  %vm87 = vcmp.ge.f32.partialorder %v47, 0.0
  %vm88 = vcmp.ge.f32.partialorder %v48, 0.0
  %vm89 = vcmp.ge.f32.partialorder %v49, 0.0
  %vm90 = vcmp.ge.f32.partialorder %v50, 0.0
  %vm91 = vcmp.ge.f32.partialorder %v51, 0.0
  %vm92 = vcmp.ge.f32.partialorder %v52, 0.0
  %vm93 = vcmp.ge.f32.partialorder %v53, 0.0
  %vm94 = vcmp.ge.f32.partialorder %v54, 0.0
  %vm95 = vcmp.ge.f32.partialorder %v55, 0.0
  %vm96 = vcmp.ge.f32.partialorder %v56, 0.0
  %vm97 = vcmp.ge.f32.partialorder %v57, 0.0
  %vm98 = vcmp.ge.f32.partialorder %v58, 0.0
  %vm99 = vcmp.ge.f32.partialorder %v59, 0.0
  %vm100 = vcmp.ge.f32.partialorder %v60, 0.0
  %vm101 = vcmp.ge.f32.partialorder %v61, 0.0
  %vm102 = vcmp.ge.f32.partialorder %v62, 0.0
  %vm103 = vcmp.ge.f32.partialorder %v63, 0.0
  %vm104 = vcmp.ge.f32.partialorder %v64, 0.0
  %vm105 = vcmp.ge.f32.partialorder %v65, 0.0
  %vm106 = vcmp.ge.f32.partialorder %v66, 0.0
  %vm107 = vcmp.ge.f32.partialorder %v67, 0.0
  %vm108 = vcmp.ge.f32.partialorder %v68, 0.0
  %vm109 = vcmp.ge.f32.partialorder %v69, 0.0
  %vm110 = vcmp.ge.f32.partialorder %v70, 0.0
  %vm111 = vcmp.ge.f32.partialorder %v71, 0.0
  %vm112 = vcmp.ge.f32.partialorder %v72, 0.0
  %vm113 = vcmp.ge.f32.partialorder %v73, 0.0
  %v114 = vmul.f32 %v34, 0.20019531
  %v115 = vmul.f32 %v35, 0.20019531
  %v116 = vmul.f32 %v36, 0.20019531
  %v117 = vmul.f32 %v37, 0.20019531
  %v118 = vmul.f32 %v38, 0.20019531
  %v119 = vmul.f32 %v39, 0.20019531
  %v120 = vmul.f32 %v40, 0.20019531
  %v121 = vmul.f32 %v41, 0.20019531
  %v122 = vmul.f32 %v42, 0.20019531
  %v123 = vmul.f32 %v43, 0.20019531
  %v124 = vmul.f32 %v44, 0.20019531
  %v125 = vmul.f32 %v45, 0.20019531
  %v126 = vmul.f32 %v46, 0.20019531
  %v127 = vmul.f32 %v47, 0.20019531
  %v128 = vmul.f32 %v48, 0.20019531
  %v129 = vmul.f32 %v49, 0.20019531
  %v130 = vmul.f32 %v50, 0.20019531
  %v131 = vmul.f32 %v51, 0.20019531
  %v132 = vmul.f32 %v52, 0.20019531
  %v133 = vmul.f32 %v53, 0.20019531
  %v134 = vmul.f32 %v54, 0.20019531
  %v135 = vmul.f32 %v55, 0.20019531
  %v136 = vmul.f32 %v56, 0.20019531
  %v137 = vmul.f32 %v57, 0.20019531
  %v138 = vmul.f32 %v58, 0.20019531
  %v139 = vmul.f32 %v59, 0.20019531
  %v140 = vmul.f32 %v60, 0.20019531
  %v141 = vmul.f32 %v61, 0.20019531
  %v142 = vmul.f32 %v62, 0.20019531
  %v143 = vmul.f32 %v63, 0.20019531
  %v144 = vmul.f32 %v64, 0.20019531
  %v145 = vmul.f32 %v65, 0.20019531
  %v146 = vmul.f32 %v66, 0.20019531
  %v147 = vmul.f32 %v67, 0.20019531
  %v148 = vmul.f32 %v68, 0.20019531
  %v149 = vmul.f32 %v69, 0.20019531
  %v150 = vmul.f32 %v70, 0.20019531
  %v151 = vmul.f32 %v71, 0.20019531
  %v152 = vmul.f32 %v72, 0.20019531
  %v153 = vmul.f32 %v73, 0.20019531
  %v154 = vpack.c.bf16 %v115, %v114
  %v155 = vpack.c.bf16 %v117, %v116
  %v156 = vpack.c.bf16 %v119, %v118
  %v157 = vpack.c.bf16 %v121, %v120
  %v158 = vpack.c.bf16 %v123, %v122
  %v159 = vpack.c.bf16 %v125, %v124
  %v160 = vpack.c.bf16 %v127, %v126
  %v161 = vpack.c.bf16 %v129, %v128
  %v162 = vpack.c.bf16 %v131, %v130
  %v163 = vpack.c.bf16 %v133, %v132
  %v164 = vpack.c.bf16 %v135, %v134
  %v165 = vpack.c.bf16 %v137, %v136
  %v166 = vpack.c.bf16 %v139, %v138
  %v167 = vpack.c.bf16 %v141, %v140
  %v168 = vpack.c.bf16 %v143, %v142
  %v169 = vpack.c.bf16 %v145, %v144
  %v170 = vpack.c.bf16 %v147, %v146
  %v171 = vpack.c.bf16 %v149, %v148
  %v172 = vpack.c.bf16 %v151, %v150
  %v173 = vpack.c.bf16 %v153, %v152
  %vm174 = vmpackc.low %vm75, %vm74
  %vm175 = vmpackc.low %vm77, %vm76
  %vm176 = vmpackc.low %vm79, %vm78
  %vm177 = vmpackc.low %vm81, %vm80
  %vm178 = vmpackc.low %vm83, %vm82
  %vm179 = vmpackc.low %vm85, %vm84
  %vm180 = vmpackc.low %vm87, %vm86
  %vm181 = vmpackc.low %vm89, %vm88
  %vm182 = vmpackc.low %vm91, %vm90
  %vm183 = vmpackc.low %vm93, %vm92
  %vm184 = vmpackc.low %vm95, %vm94
  %vm185 = vmpackc.low %vm97, %vm96
  %vm186 = vmpackc.low %vm99, %vm98
  %vm187 = vmpackc.low %vm101, %vm100
  %vm188 = vmpackc.low %vm103, %vm102
  %vm189 = vmpackc.low %vm105, %vm104
  %vm190 = vmpackc.low %vm107, %vm106
  %vm191 = vmpackc.low %vm109, %vm108
  %vm192 = vmpackc.low %vm111, %vm110
  %vm193 = vmpackc.low %vm113, %vm112
  %v194 = vsel %vm174, %v14, %v154
  %v195 = vsel %vm175, %v15, %v155
  %v196 = vsel %vm176, %v16, %v156
  %v197 = vsel %vm177, %v17, %v157
  %v198 = vsel %vm178, %v18, %v158
  %v199 = vsel %vm179, %v19, %v159
  %v200 = vsel %vm180, %v20, %v160
  %v201 = vsel %vm181, %v21, %v161
  %v202 = vsel %vm182, %v22, %v162
  %v203 = vsel %vm183, %v23, %v163
  %v204 = vsel %vm184, %v24, %v164
  %v205 = vsel %vm185, %v25, %v165
  %v206 = vsel %vm186, %v26, %v166
  %v207 = vsel %vm187, %v27, %v167
  %v208 = vsel %vm188, %v28, %v168
  %v209 = vsel %vm189, %v29, %v169
  %v210 = vsel %vm190, %v30, %v170
  %v211 = vsel %vm191, %v31, %v171
  %v212 = vsel %vm192, %v32, %v172
  %v213 = vsel %vm193, %v33, %v173
  %v214 = vld [vmem:[%s1] sm:$0xf]
  %v215 = vld [vmem:[%s1 + $0x4] sm:$0xf]
  %v216 = vld [vmem:[%s1 + $0x8] sm:$0xf]
  %v217 = vld [vmem:[%s1 + $0xc] sm:$0xf]
  %v218 = vld [vmem:[%s1 + $0x10] sm:$0xf]
  %v219 = vld [vmem:[%s1 + $0x14] sm:$0xf]
  %v220 = vld [vmem:[%s1 + $0x18] sm:$0xf]
  %v221 = vld [vmem:[%s1 + $0x1c] sm:$0xf]
  %v222 = vld [vmem:[%s1 + $0x20] sm:$0xf]
  %v223 = vld [vmem:[%s1 + $0x24] sm:$0xf]
  %v224 = vld [vmem:[%s1 + $0x28] sm:$0xf]
  %v225 = vld [vmem:[%s1 + $0x2c] sm:$0xf]
  %v226 = vld [vmem:[%s1 + $0x30] sm:$0xf]
  %v227 = vld [vmem:[%s1 + $0x34] sm:$0xf]
  %v228 = vld [vmem:[%s1 + $0x38] sm:$0xf]
  %v229 = vld [vmem:[%s1 + $0x3c] sm:$0xf]
  %v230 = vld [vmem:[%s1 + $0x40] sm:$0xf]
  %v231 = vld [vmem:[%s1 + $0x44] sm:$0xf]
  %v232 = vld [vmem:[%s1 + $0x48] sm:$0xf]
  %v233 = vld [vmem:[%s1 + $0x4c] sm:$0xf]
  %v234 = vld [vmem:[%s1 + $0x50] sm:$0xf]
  %v235 = vld [vmem:[%s1 + $0x54] sm:$0xf]
  %v236 = vld [vmem:[%s1 + $0x58] sm:$0xf]
  %v237 = vld [vmem:[%s1 + $0x5c] sm:$0xf]
  %v238 = vld [vmem:[%s1 + $0x60] sm:$0xf]
  %v239 = vld [vmem:[%s1 + $0x64] sm:$0xf]
  %v240 = vld [vmem:[%s1 + $0x68] sm:$0xf]
  %v241 = vld [vmem:[%s1 + $0x6c] sm:$0xf]
  %v242 = vld [vmem:[%s1 + $0x70] sm:$0xf]
  %v243 = vld [vmem:[%s1 + $0x74] sm:$0xf]
  %v244 = vld [vmem:[%s1 + $0x78] sm:$0xf]
  %v245 = vld [vmem:[%s1 + $0x7c] sm:$0xf]
  %v246 = vld [vmem:[%s1 + $0x80] sm:$0xf]
  %v247 = vld [vmem:[%s1 + $0x84] sm:$0xf]
  %v248 = vld [vmem:[%s1 + $0x88] sm:$0xf]
  %v249 = vld [vmem:[%s1 + $0x8c] sm:$0xf]
  %v250 = vld [vmem:[%s1 + $0x90] sm:$0xf]
  %v251 = vld [vmem:[%s1 + $0x94] sm:$0xf]
  %v252 = vld [vmem:[%s1 + $0x98] sm:$0xf]
  %v253 = vld [vmem:[%s1 + $0x9c] sm:$0xf]
  %v254 = vld [vmem:[%s1 + $0xa0] sm:$0xf]
  %v255 = vld [vmem:[%s1 + $0xa4] sm:$0xf]
  %v256 = vld [vmem:[%s1 + $0xa8] sm:$0xf]
  %v257 = vld [vmem:[%s1 + $0xac] sm:$0xf]
  %v258 = vld [vmem:[%s1 + $0xb0] sm:$0xf]
  %v259 = vld [vmem:[%s1 + $0xb4] sm:$0xf]
  %v260 = vld [vmem:[%s1 + $0xb8] sm:$0xf]
  %v261 = vld [vmem:[%s1 + $0xbc] sm:$0xf]
  %v262 = vld [vmem:[%s1 + $0xc0] sm:$0xf]
  %v263 = vld [vmem:[%s1 + $0xc4] sm:$0xf]
  %v264 = vld [vmem:[%s1 + $0xc8] sm:$0xf]
  %v265 = vld [vmem:[%s1 + $0xcc] sm:$0xf]
  %v266 = vld [vmem:[%s1 + $0xd0] sm:$0xf]
  %v267 = vld [vmem:[%s1 + $0xd4] sm:$0xf]
  %v268 = vld [vmem:[%s1 + $0xd8] sm:$0xf]
  %v269 = vld [vmem:[%s1 + $0xdc] sm:$0xf]
  %v270 = vld [vmem:[%s1 + $0xe0] sm:$0xf]
  %v271 = vld [vmem:[%s1 + $0xe4] sm:$0xf]
  %v272 = vld [vmem:[%s1 + $0xe8] sm:$0xf]
  %v273 = vld [vmem:[%s1 + $0xec] sm:$0xf]
  %v274 = vld [vmem:[%s1 + $0xf0] sm:$0xf]
  %v275 = vld [vmem:[%s1 + $0xf4] sm:$0xf]
  %v276 = vld [vmem:[%s1 + $0xf8] sm:$0xf]
  %v277 = vld [vmem:[%s1 + $0xfc] sm:$0xf]
  %v278 = vld [vmem:[%s2] sm:$0x1]
  %v280 = vperm.slane %v278, 0
  %v302 = vunpack.c.l.b16 %v194
  %v303 = vunpack.c.h.b16 %v194
  %v304 = vunpack.c.l.b16 %v195
  %v305 = vunpack.c.h.b16 %v195
  %v306 = vunpack.c.l.b16 %v196
  %v307 = vunpack.c.h.b16 %v196
  %v308 = vunpack.c.l.b16 %v197
  %v309 = vunpack.c.h.b16 %v197
  %v310 = vunpack.c.l.b16 %v198
  %v311 = vunpack.c.h.b16 %v198
  %v312 = vunpack.c.l.b16 %v199
  %v313 = vunpack.c.h.b16 %v199
  %v314 = vunpack.c.l.b16 %v200
  %v315 = vunpack.c.h.b16 %v200
  %v316 = vunpack.c.l.b16 %v201
  %v317 = vunpack.c.h.b16 %v201
  %v318 = vunpack.c.l.b16 %v202
  %v319 = vunpack.c.h.b16 %v202
  %v320 = vunpack.c.l.b16 %v203
  %v321 = vunpack.c.h.b16 %v203
  %v322 = vunpack.c.l.b16 %v204
  %v323 = vunpack.c.h.b16 %v204
  %v324 = vunpack.c.l.b16 %v205
  %v325 = vunpack.c.h.b16 %v205
  %v326 = vunpack.c.l.b16 %v206
  %v327 = vunpack.c.h.b16 %v206
  %v328 = vunpack.c.l.b16 %v207
  %v329 = vunpack.c.h.b16 %v207
  %v330 = vunpack.c.l.b16 %v208
  %v331 = vunpack.c.h.b16 %v208
  %v332 = vunpack.c.l.b16 %v209
  %v333 = vunpack.c.h.b16 %v209
  %v334 = vunpack.c.l.b16 %v210
  %v335 = vunpack.c.h.b16 %v210
  %v336 = vunpack.c.l.b16 %v211
  %v337 = vunpack.c.h.b16 %v211
  %v338 = vunpack.c.l.b16 %v212
  %v339 = vunpack.c.h.b16 %v212
  %v340 = vunpack.c.l.b16 %v213
  %v341 = vunpack.c.h.b16 %v213
  %v342 = vpack.c.b16 %v306, %v302
  %v343 = vpack.c.b16 %v307, %v303
  %v344 = vpack.c.b16 %v308, %v304
  %v345 = vpack.c.b16 %v309, %v305
  %v346 = vpack.c.b16 %v314, %v310
  %v347 = vpack.c.b16 %v315, %v311
  %v348 = vpack.c.b16 %v316, %v312
  %v349 = vpack.c.b16 %v317, %v313
  %v350 = vpack.c.b16 %v322, %v318
  %v351 = vpack.c.b16 %v323, %v319
  %v352 = vpack.c.b16 %v324, %v320
  %v353 = vpack.c.b16 %v325, %v321
  %v354 = vpack.c.b16 %v330, %v326
  %v355 = vpack.c.b16 %v331, %v327
  %v356 = vpack.c.b16 %v332, %v328
  %v357 = vpack.c.b16 %v333, %v329
  %v358 = vpack.c.b16 %v338, %v334
  %v359 = vpack.c.b16 %v339, %v335
  %v360 = vpack.c.b16 %v340, %v336
  %v361 = vpack.c.b16 %v341, %v337
  %v446 = vunpack.c.l.b16 %v214
  %v447 = vunpack.c.l.b16 %v215
  %v448 = vunpack.c.l.b16 %v216
  %v449 = vunpack.c.l.b16 %v217
  %v450 = vunpack.c.l.b16 %v218
  %v451 = vunpack.c.l.b16 %v219
  %v452 = vunpack.c.l.b16 %v220
  %v453 = vunpack.c.l.b16 %v221
  %v454 = vunpack.c.l.b16 %v222
  %v455 = vunpack.c.l.b16 %v223
  %v456 = vunpack.c.l.b16 %v224
  %v457 = vunpack.c.l.b16 %v225
  %v458 = vunpack.c.l.b16 %v226
  %v459 = vunpack.c.l.b16 %v227
  %v460 = vunpack.c.l.b16 %v228
  %v461 = vunpack.c.l.b16 %v229
  %v462 = vunpack.c.l.b16 %v230
  %v463 = vunpack.c.l.b16 %v231
  %v464 = vunpack.c.l.b16 %v232
  %v465 = vunpack.c.l.b16 %v233
  %v466 = vunpack.c.l.b16 %v234
  %v467 = vunpack.c.l.b16 %v235
  %v468 = vunpack.c.l.b16 %v236
  %v469 = vunpack.c.l.b16 %v237
  %v470 = vunpack.c.l.b16 %v238
  %v471 = vunpack.c.l.b16 %v239
  %v472 = vunpack.c.l.b16 %v240
  %v473 = vunpack.c.l.b16 %v241
  %v474 = vunpack.c.l.b16 %v242
  %v475 = vunpack.c.l.b16 %v243
  %v476 = vunpack.c.l.b16 %v244
  %v477 = vunpack.c.l.b16 %v245
  %v478 = vunpack.c.l.b16 %v246
  %v479 = vunpack.c.l.b16 %v247
  %v480 = vunpack.c.l.b16 %v248
  %v481 = vunpack.c.l.b16 %v249
  %v482 = vunpack.c.l.b16 %v250
  %v483 = vunpack.c.l.b16 %v251
  %v484 = vunpack.c.l.b16 %v252
  %v485 = vunpack.c.l.b16 %v253
  %v486 = vunpack.c.l.b16 %v254
  %v487 = vunpack.c.l.b16 %v255
  %v488 = vunpack.c.l.b16 %v256
  %v489 = vunpack.c.l.b16 %v257
  %v490 = vunpack.c.l.b16 %v258
  %v491 = vunpack.c.l.b16 %v259
  %v492 = vunpack.c.l.b16 %v260
  %v493 = vunpack.c.l.b16 %v261
  %v494 = vunpack.c.l.b16 %v262
  %v495 = vunpack.c.l.b16 %v263
  %v496 = vunpack.c.l.b16 %v264
  %v497 = vunpack.c.l.b16 %v265
  %v498 = vunpack.c.l.b16 %v266
  %v499 = vunpack.c.l.b16 %v267
  %v500 = vunpack.c.l.b16 %v268
  %v501 = vunpack.c.l.b16 %v269
  %v502 = vunpack.c.l.b16 %v270
  %v503 = vunpack.c.l.b16 %v271
  %v504 = vunpack.c.l.b16 %v272
  %v505 = vunpack.c.l.b16 %v273
  %v506 = vunpack.c.l.b16 %v274
  %v507 = vunpack.c.l.b16 %v275
  %v508 = vunpack.c.l.b16 %v276
  %v509 = vunpack.c.l.b16 %v277
  %v510 = vpack.c.b16 %v447, %v446
  %v511 = vpack.c.b16 %v449, %v448
  %v512 = vpack.c.b16 %v451, %v450
  %v513 = vpack.c.b16 %v453, %v452
  %v514 = vpack.c.b16 %v455, %v454
  %v515 = vpack.c.b16 %v457, %v456
  %v516 = vpack.c.b16 %v459, %v458
  %v517 = vpack.c.b16 %v461, %v460
  %v518 = vpack.c.b16 %v463, %v462
  %v519 = vpack.c.b16 %v465, %v464
  %v520 = vpack.c.b16 %v467, %v466
  %v521 = vpack.c.b16 %v469, %v468
  %v522 = vpack.c.b16 %v471, %v470
  %v523 = vpack.c.b16 %v473, %v472
  %v524 = vpack.c.b16 %v475, %v474
  %v525 = vpack.c.b16 %v477, %v476
  %v526 = vpack.c.b16 %v479, %v478
  %v527 = vpack.c.b16 %v481, %v480
  %v528 = vpack.c.b16 %v483, %v482
  %v529 = vpack.c.b16 %v485, %v484
  %v530 = vpack.c.b16 %v487, %v486
  %v531 = vpack.c.b16 %v489, %v488
  %v532 = vpack.c.b16 %v491, %v490
  %v533 = vpack.c.b16 %v493, %v492
  %v534 = vpack.c.b16 %v495, %v494
  %v535 = vpack.c.b16 %v497, %v496
  %v536 = vpack.c.b16 %v499, %v498
  %v537 = vpack.c.b16 %v501, %v500
  %v538 = vpack.c.b16 %v503, %v502
  %v539 = vpack.c.b16 %v505, %v504
  %v540 = vpack.c.b16 %v507, %v506
  %v541 = vpack.c.b16 %v509, %v508
  %574 = vmatpush.bf16.msra.mxu0 %v517
  %575 = vmatpush.bf16.msra.mxu0 %v516
  %576 = vmatpush.bf16.msra.mxu0 %v515
  %577 = vmatpush.bf16.msra.mxu0 %v514
  %578 = vmatpush.bf16.msra.mxu0 %v513
  %579 = vmatpush.bf16.msra.mxu0 %v512
  %580 = vmatpush.bf16.msra.mxu0 %v511
  %581 = vmatpush.bf16.msra.mxu0 %v510
  %582 = vmatmul.bf16.gmra.mxu0 %v342
  %v583 = vpop.f32.mrf.mxu0
  %v584 = vadd.f32 %v280, %v583
  %v585 = vpop.f32.mrf.mxu0
  %v586 = vadd.f32 %v280, %v585
  %587 = vmatmul.bf16.gmra.mxu0 %v346
  %v588 = vpop.f32.mrf.mxu0
  %v589 = vadd.f32 %v280, %v588
  %v590 = vpop.f32.mrf.mxu0
  %v591 = vadd.f32 %v280, %v590
  %592 = vmatmul.bf16.gmra.mxu0 %v350
  %v593 = vpop.f32.mrf.mxu0
  %v594 = vadd.f32 %v280, %v593
  %v595 = vpop.f32.mrf.mxu0
  %v596 = vadd.f32 %v280, %v595
  %597 = vmatmul.bf16.gmra.mxu0 %v354
  %v598 = vpop.f32.mrf.mxu0
  %v599 = vadd.f32 %v280, %v598
  %v600 = vpop.f32.mrf.mxu0
  %v601 = vadd.f32 %v280, %v600
  %602 = vmatmul.bf16.gmra.mxu0 %v358
  %v603 = vpop.f32.mrf.mxu0
  %v604 = vadd.f32 %v280, %v603
  %v605 = vpop.f32.mrf.mxu0
  %v606 = vadd.f32 %v280, %v605
  %607 = vdwg.mxu0
  %608 = vmatpush.bf16.msra.mxu0 %v525
  %609 = vmatpush.bf16.msra.mxu0 %v524
  %610 = vmatpush.bf16.msra.mxu0 %v523
  %611 = vmatpush.bf16.msra.mxu0 %v522
  %612 = vmatpush.bf16.msra.mxu0 %v521
  %613 = vmatpush.bf16.msra.mxu0 %v520
  %614 = vmatpush.bf16.msra.mxu0 %v519
  %615 = vmatpush.bf16.msra.mxu0 %v518
  %616 = vmatmul.bf16.gmra.mxu0 %v343
  %v617 = vpop.f32.mrf.mxu0
  %v618 = vadd.f32 %v584, %v617
  %v619 = vpop.f32.mrf.mxu0
  %v620 = vadd.f32 %v586, %v619
  %621 = vmatmul.bf16.gmra.mxu0 %v347
  %v622 = vpop.f32.mrf.mxu0
  %v623 = vadd.f32 %v589, %v622
  %v624 = vpop.f32.mrf.mxu0
  %v625 = vadd.f32 %v591, %v624
  %626 = vmatmul.bf16.gmra.mxu0 %v351
  %v627 = vpop.f32.mrf.mxu0
  %v628 = vadd.f32 %v594, %v627
  %v629 = vpop.f32.mrf.mxu0
  %v630 = vadd.f32 %v596, %v629
  %631 = vmatmul.bf16.gmra.mxu0 %v355
  %v632 = vpop.f32.mrf.mxu0
  %v633 = vadd.f32 %v599, %v632
  %v634 = vpop.f32.mrf.mxu0
  %v635 = vadd.f32 %v601, %v634
  %636 = vmatmul.bf16.gmra.mxu0 %v359
  %v637 = vpop.f32.mrf.mxu0
  %v638 = vadd.f32 %v604, %v637
  %v639 = vpop.f32.mrf.mxu0
  %v640 = vadd.f32 %v606, %v639
  %641 = vdwg.mxu0
  %642 = vmatpush.bf16.msra.mxu0 %v533
  %643 = vmatpush.bf16.msra.mxu0 %v532
  %644 = vmatpush.bf16.msra.mxu0 %v531
  %645 = vmatpush.bf16.msra.mxu0 %v530
  %646 = vmatpush.bf16.msra.mxu0 %v529
  %647 = vmatpush.bf16.msra.mxu0 %v528
  %648 = vmatpush.bf16.msra.mxu0 %v527
  %649 = vmatpush.bf16.msra.mxu0 %v526
  %650 = vmatmul.bf16.gmra.mxu0 %v344
  %v651 = vpop.f32.mrf.mxu0
  %v652 = vadd.f32 %v618, %v651
  %v653 = vpop.f32.mrf.mxu0
  %v654 = vadd.f32 %v620, %v653
  %655 = vmatmul.bf16.gmra.mxu0 %v348
  %v656 = vpop.f32.mrf.mxu0
  %v657 = vadd.f32 %v623, %v656
  %v658 = vpop.f32.mrf.mxu0
  %v659 = vadd.f32 %v625, %v658
  %660 = vmatmul.bf16.gmra.mxu0 %v352
  %v661 = vpop.f32.mrf.mxu0
  %v662 = vadd.f32 %v628, %v661
  %v663 = vpop.f32.mrf.mxu0
  %v664 = vadd.f32 %v630, %v663
  %665 = vmatmul.bf16.gmra.mxu0 %v356
  %v666 = vpop.f32.mrf.mxu0
  %v667 = vadd.f32 %v633, %v666
  %v668 = vpop.f32.mrf.mxu0
  %v669 = vadd.f32 %v635, %v668
  %670 = vmatmul.bf16.gmra.mxu0 %v360
  %v671 = vpop.f32.mrf.mxu0
  %v672 = vadd.f32 %v638, %v671
  %v673 = vpop.f32.mrf.mxu0
  %v674 = vadd.f32 %v640, %v673
  %675 = vdwg.mxu0
  %676 = vmatpush.bf16.msra.mxu0 %v541
  %677 = vmatpush.bf16.msra.mxu0 %v540
  %678 = vmatpush.bf16.msra.mxu0 %v539
  %679 = vmatpush.bf16.msra.mxu0 %v538
  %680 = vmatpush.bf16.msra.mxu0 %v537
  %681 = vmatpush.bf16.msra.mxu0 %v536
  %682 = vmatpush.bf16.msra.mxu0 %v535
  %683 = vmatpush.bf16.msra.mxu0 %v534
  %684 = vmatmul.bf16.gmra.mxu0 %v345
  %v685 = vpop.f32.mrf.mxu0
  %v686 = vadd.f32 %v652, %v685
  %v687 = vpop.f32.mrf.mxu0
  %v688 = vadd.f32 %v654, %v687
  %689 = vmatmul.bf16.gmra.mxu0 %v349
  %v690 = vpop.f32.mrf.mxu0
  %v691 = vadd.f32 %v657, %v690
  %v692 = vpop.f32.mrf.mxu0
  %v693 = vadd.f32 %v659, %v692
  %694 = vmatmul.bf16.gmra.mxu0 %v353
  %v695 = vpop.f32.mrf.mxu0
  %v696 = vadd.f32 %v662, %v695
  %v697 = vpop.f32.mrf.mxu0
  %v698 = vadd.f32 %v664, %v697
  %699 = vmatmul.bf16.gmra.mxu0 %v357
  %v700 = vpop.f32.mrf.mxu0
  %v701 = vadd.f32 %v667, %v700
  %v702 = vpop.f32.mrf.mxu0
  %v703 = vadd.f32 %v669, %v702
  %704 = vmatmul.bf16.gmra.mxu0 %v361
  %v705 = vpop.f32.mrf.mxu0
  %v706 = vadd.f32 %v672, %v705
  %v707 = vpop.f32.mrf.mxu0
  %v708 = vadd.f32 %v674, %v707
  %709 = vdwg.mxu0
  %v710 = vsub.f32 0.0, %v686
  %v711 = vsub.f32 0.0, %v688
  %v712 = vsub.f32 0.0, %v691
  %v713 = vsub.f32 0.0, %v693
  %v714 = vsub.f32 0.0, %v696
  %v715 = vsub.f32 0.0, %v698
  %v716 = vsub.f32 0.0, %v701
  %v717 = vsub.f32 0.0, %v703
  %v718 = vsub.f32 0.0, %v706
  %v719 = vsub.f32 0.0, %v708
  %v720 = vmul.f32 %v710, 1.442695
  %v721 = vpow.pop %v720
  %v722 = vmul.f32 %v711, 1.442695
  %v723 = vpow.pop %v722
  %v724 = vmul.f32 %v712, 1.442695
  %v725 = vpow.pop %v724
  %v726 = vmul.f32 %v713, 1.442695
  %v727 = vpow.pop %v726
  %v728 = vmul.f32 %v714, 1.442695
  %v729 = vpow.pop %v728
  %v730 = vmul.f32 %v715, 1.442695
  %v731 = vpow.pop %v730
  %v732 = vmul.f32 %v716, 1.442695
  %v733 = vpow.pop %v732
  %v734 = vmul.f32 %v717, 1.442695
  %v735 = vpow.pop %v734
  %v736 = vmul.f32 %v718, 1.442695
  %v737 = vpow.pop %v736
  %v738 = vmul.f32 %v719, 1.442695
  %v739 = vpow.pop %v738
  %v740 = vadd.f32 %v721, 1.0
  %v741 = vadd.f32 %v723, 1.0
  %v742 = vadd.f32 %v725, 1.0
  %v743 = vadd.f32 %v727, 1.0
  %v744 = vadd.f32 %v729, 1.0
  %v745 = vadd.f32 %v731, 1.0
  %v746 = vadd.f32 %v733, 1.0
  %v747 = vadd.f32 %v735, 1.0
  %v748 = vadd.f32 %v737, 1.0
  %v749 = vadd.f32 %v739, 1.0
  %v750 = vrcp.pop %v740
  %v751 = vrcp.pop %v741
  %v752 = vrcp.pop %v742
  %v753 = vrcp.pop %v743
  %v754 = vrcp.pop %v744
  %v755 = vrcp.pop %v745
  %v756 = vrcp.pop %v746
  %v757 = vrcp.pop %v747
  %v758 = vrcp.pop %v748
  %v759 = vrcp.pop %v749
  %v760 = vmax.f32 %v750, 0.0
  %v761 = vmax.f32 %v751, 0.0
  %v762 = vmax.f32 %v752, 0.0
  %v763 = vmax.f32 %v753, 0.0
  %v764 = vmax.f32 %v754, 0.0
  %v765 = vmax.f32 %v755, 0.0
  %v766 = vmax.f32 %v756, 0.0
  %v767 = vmax.f32 %v757, 0.0
  %v768 = vmax.f32 %v758, 0.0
  %v769 = vmax.f32 %v759, 0.0
  %v770 = vmin.f32 %v760, 1.0
  %v771 = vmin.f32 %v761, 1.0
  %v772 = vmin.f32 %v762, 1.0
  %v773 = vmin.f32 %v763, 1.0
  %v774 = vmin.f32 %v764, 1.0
  %v775 = vmin.f32 %v765, 1.0
  %v776 = vmin.f32 %v766, 1.0
  %v777 = vmin.f32 %v767, 1.0
  %v778 = vmin.f32 %v768, 1.0
  %v779 = vmin.f32 %v769, 1.0
  %780 = vst [vmem:[%s3] sm:$0xff] %v770
  %781 = vst [vmem:[%s3 + $0x8] sm:$0xff] %v771
  %782 = vst [vmem:[%s3 + $0x10] sm:$0xff] %v772
  %783 = vst [vmem:[%s3 + $0x18] sm:$0xff] %v773
  %784 = vst [vmem:[%s3 + $0x20] sm:$0xff] %v774
  %785 = vst [vmem:[%s3 + $0x28] sm:$0xff] %v775
  %786 = vst [vmem:[%s3 + $0x30] sm:$0xff] %v776
  %787 = vst [vmem:[%s3 + $0x38] sm:$0xff] %v777
  %788 = vst [vmem:[%s3 + $0x40] sm:$0xff] %v778
  %789 = vst [vmem:[%s3 + $0x48] sm:$0xff] %v779
  // Predicated region
  $region14: #{discriminator128_forward.11} parent=0 // pred_check
    _
  $region15: #{discriminator128_forward.11} parent=0 // pred_check_branch
    %791 = sbr.rel (0) target = $region17
  $region16: #{discriminator128_forward.11} parent=0 // pred_region
    _
  $region17: #{discriminator128_forward.11} parent=0 // pred_fallthru
    _
  // Predicated region
  $region18: #{discriminator128_forward.11} parent=0 // pred_check
    _
  $region19: #{discriminator128_forward.11} parent=0 // pred_check_branch
    %793 = sbr.rel (0) target = $region21
  $region20: #{discriminator128_forward.11} parent=0 // pred_region
    _
  $region21: #{discriminator128_forward.11} parent=0 // pred_fallthru
    _

</llo_original>
